<compile_context>
chip_gen: v7x
topology: tpu7x:2x2x1
jax: 0.10.0
libtpu: 0.0.40
codegen_flags: <defaults>
</compile_context>

<pallas_src>
import functools

import numpy as np
import jax
import jax.numpy as jnp
from jax import lax
from jax.experimental import pallas as pl
from jax.experimental.pallas import tpu as pltpu


def _pe_kernel(p_ref, e_ref, o_ref):
    # p_ref: (TM, 128)   f32 -- lane-dense tile of flattened input coordinates
    # e_ref: (128, 128L) f32 -- resident fused expansion matrix E'[c, c*L+l] = pi*2^l
    # o_ref: (TM, 128L)  f32 -- sin(p[r, j//L] * freq[j%L]); full-lane (unmasked) stores
    # NOTE: HIGHEST precision is required for correctness (keeps the expansion /
    # frequency product at f32 accuracy); do NOT drop to DEFAULT (bf16 1-pass).
    o_ref[...] = jnp.sin(
        jnp.dot(
            p_ref[...], e_ref[...],
            precision=lax.Precision.HIGHEST,
            preferred_element_type=jnp.float32,
        )
    )


def _round_up(x, m):
    return ((x + m - 1) // m) * m


@functools.partial(jax.jit, static_argnames=("L",))
def positional_encoder(p, L):
    """Pallas implementation of PositionalEncoder.forward (returns [..., dim*L])."""
    p = p.astype(jnp.float32)
    orig_shape = p.shape
    dim = orig_shape[-1]
    m = int(np.prod(orig_shape))              # number of scalar coordinates

    C = 128                                   # coords per row: full lane width / MXU K
    W = C * L                                 # output lanes per row (multiple of 128)
    R = int(pl.cdiv(m, C))                    # exact number of output rows (no over-pad)

    # Row-tile sizing from a ~12 MiB VMEM budget (double-buffered in/out tiles plus
    # the resident E' matrix), multiple of 8, capped at 512 rows.
    per_row_bytes = 4 * 2 * (C + W)           # double-buffered input + output rows
    e_bytes = 2 * C * W * 4                   # E' (worst case double-buffered)
    budget_rows = max(8, (12 * 1024 * 1024 - e_bytes) // per_row_bytes)
    tm_cap = max(8, min(512, (budget_rows // 8) * 8))

    tm_depth = _round_up(int(pl.cdiv(R, 8)), 8)       # aim for >= ~8 grid steps
    tm_floor = 64 if R >= 64 else 8                   # but keep blocks non-trivial
    tm = min(tm_cap, max(tm_floor, tm_depth))
    tm = max(8, min(tm, _round_up(R, 8)))
    grid = int(pl.cdiv(R, tm))
    if grid > 2 and grid % 2:
        # Nudge toward an even step count so v7x's two TensorCores stay balanced.
        tm_alt = max(8, _round_up(int(pl.cdiv(R, grid + 1)), 8))
        if tm_alt <= tm_cap and int(pl.cdiv(R, tm_alt)) % 2 == 0:
            tm = tm_alt
            grid = int(pl.cdiv(R, tm))

    # Glue: flatten; pad only up to the next multiple of C (<= 127 elements).
    p_flat = p.reshape(-1)
    pad = R * C - m
    if pad:
        p_flat = jnp.pad(p_flat, (0, pad))    # sin(0 * f) = 0; never read back
    p2 = p_flat.reshape(R, C)

    # Fused expansion + frequency matrix: E'[c, c*L + l] = pi * 2**l (exact in f32).
    freq = (np.float32(2.0) ** np.arange(L, dtype=np.float32)) * np.float32(np.pi)
    e_mat = jnp.asarray(np.kron(np.eye(C, dtype=np.float32), freq.reshape(1, L)))

    out = pl.pallas_call(
        _pe_kernel,
        out_shape=jax.ShapeDtypeStruct((R, W), jnp.float32),
        grid=(grid,),
        in_specs=[
            pl.BlockSpec((tm, C), lambda i: (i, 0)),   # lane-dense p tile
            pl.BlockSpec((C, W), lambda i: (0, 0)),    # resident fused E' matrix
        ],
        out_specs=pl.BlockSpec((tm, W), lambda i: (i, 0)),
        compiler_params=pltpu.CompilerParams(
            dimension_semantics=("parallel",),
        ),
    )(p2, e_mat)

    # Glue: contiguous reshape reproduces torch's .view order (k = p_idx*L + freq_idx).
    flat = out.reshape(-1)
    if R * W != m * L:                        # only slices (copies) when m % 128 != 0
        flat = flat[: m * L]
    return flat.reshape(orig_shape[:-1] + (dim * L,))


if __name__ == "__main__":
    L = 8
    key = jax.random.PRNGKey(0)
    # p: [batch=2, num_points=64, dim=16], values in [-1, 1].
    x = jax.random.uniform(key, (2, 64, 16), dtype=jnp.float32, minval=-1.0, maxval=1.0)

    out = jax.block_until_ready(positional_encoder(x, L))

    # Pure-JAX reference (mirrors the PyTorch forward exactly).
    freq = (2.0 ** jnp.arange(L, dtype=jnp.float32)) * jnp.float32(np.pi)
    ref = jnp.sin(x[..., None] * freq).reshape(x.shape[:-1] + (x.shape[-1] * L,))
    assert out.shape == (2, 64, 16 * L), out.shape
    assert out.dtype == jnp.float32
    max_err = float(jnp.max(jnp.abs(out - ref)))
    assert np.allclose(np.asarray(out), np.asarray(ref), atol=1e-3), max_err

    # Awkward shape / non-power-of-two L: exercises the ragged last block + tiny-R path.
    L2 = 6
    x2 = jax.random.uniform(jax.random.PRNGKey(0), (3, 5, 7), dtype=jnp.float32,
                            minval=-1.0, maxval=1.0)
    out2 = jax.block_until_ready(positional_encoder(x2, L2))
    freq2 = (2.0 ** jnp.arange(L2, dtype=jnp.float32)) * jnp.float32(np.pi)
    ref2 = jnp.sin(x2[..., None] * freq2).reshape(x2.shape[:-1] + (x2.shape[-1] * L2,))
    assert out2.shape == (3, 5, 7 * L2), out2.shape
    assert np.allclose(np.asarray(out2), np.asarray(ref2), atol=1e-3), "awkward-shape mismatch"

    print("KERNEL_OK")
</pallas_src>

<mosaic_0001>
module attributes {stable_mosaic.version = 11 : i64} {
  func.func @_pe_kernel(%arg0: i32, %arg1: memref<8x128xf32, #tpu.memory_space<vmem>>, %arg2: memref<128x1024xf32, #tpu.memory_space<vmem>>, %arg3: memref<8x1024xf32, #tpu.memory_space<vmem>>) attributes {dimension_semantics = [#tpu.dimension_semantics<parallel>], iteration_bounds = array<i64: 2>, scalar_prefetch = 0 : i64, scratch_operands = 0 : i64, tpu.core_type = #tpu.core_type<tc>, window_params = [{transform_indices = @transform_0, window_bounds = array<i64: 8, 128>}, {pipeline_mode = #tpu.pipeline_mode<synchronous>, transform_indices = @transform_1, window_bounds = array<i64: 128, 1024>}, {transform_indices = @transform_2, window_bounds = array<i64: 8, 1024>}]} {
    %c0 = arith.constant 0 : index
    %c0_0 = arith.constant 0 : index
    %0 = vector.load %arg1[%c0, %c0_0] : memref<8x128xf32, #tpu.memory_space<vmem>>, vector<8x128xf32>
    %c0_1 = arith.constant 0 : index
    %c0_2 = arith.constant 0 : index
    %1 = vector.load %arg2[%c0_1, %c0_2] : memref<128x1024xf32, #tpu.memory_space<vmem>>, vector<128x1024xf32>
    %cst = arith.constant dense<0.000000e+00> : vector<8x1024xf32>
    %2 = tpu.matmul %0, %1, %cst {dimension_numbers = #tpu.dot_dimension_numbers<[1], [0], [0], [1], [0, 0, 1, 1], [], []>, precision = #tpu.contract_precision<fp32>} : vector<8x128xf32>, vector<128x1024xf32>, vector<8x1024xf32> -> vector<8x1024xf32>
    %3 = math.sin %2 : vector<8x1024xf32>
    %c0_3 = arith.constant 0 : index
    %c0_4 = arith.constant 0 : index
    %4 = vector.load %arg3[%c0_3, %c0_4] : memref<8x1024xf32, #tpu.memory_space<vmem>>, vector<8x1024xf32>
    tpu.vector_store %arg3[%c0_3, %c0_4], %3 {strides = array<i32>} : memref<8x1024xf32, #tpu.memory_space<vmem>>, vector<8x1024xf32>,
    return
  }
  func.func @transform_0(%arg0: i32) -> (i32, i32) {
    %c0_i32 = arith.constant 0 : i32
    %c0_i32_0 = arith.constant 0 : i32
    return %arg0, %c0_i32 : i32, i32
  }
  func.func @transform_1(%arg0: i32) -> (i32, i32) {
    %c0_i32 = arith.constant 0 : i32
    %c0_i32_0 = arith.constant 0 : i32
    %c0_i32_1 = arith.constant 0 : i32
    return %c0_i32, %c0_i32_0 : i32, i32
  }
  func.func @transform_2(%arg0: i32) -> (i32, i32) {
    %c0_i32 = arith.constant 0 : i32
    %c0_i32_0 = arith.constant 0 : i32
    return %arg0, %c0_i32 : i32, i32
  }
}

</mosaic_0001>

<llo_original>
// kernel: positional_encoder.1
$region0: #{positional_encoder.1}
  #allocation0 [shape = 'u32[]', space=smem, size = 0x4, offset = 0x4, fixed_abs, tag = 'smem constant byte address 0x4 - core index']
  #allocation1 [shape = 'u32[144,128]{1,0:T(1,128)}', space=vmem, size = 0x12000, scoped, tag = 'internal scratch']
  %s0 = inlined_call_operand.vmem [shape: f32[16,128], index: 0, kind: input, shape index: {}]
  %s1 = inlined_call_operand.hbm [shape: f32[128,1024], index: 1, kind: input, shape index: {}]
  %s2 = inlined_call_operand.vmem [shape: f32[16,1024], index: 2, kind: output, shape index: {}]
  %s3 = sld [smem:[#allocation0]]
  $region45: #{positional_encoder.1} parent=0
    _
  %s5 = ssub.s32 1, %s3
  %s6 = scalar_select 0, %s5, %s3
  $region1: #{positional_encoder.1} parent=0
    #allocation2 [shape = 'u8[524288]{0}', space=vmem, size = 0x80000, scoped, tag = 'input window, operand 1, single buffered']
    #allocation3 [shape = 's32[2]{0}', space=sflag, size = 0x8, scoped, tag = 'scoped memory for positional_encoder.1']
    %7 = vsyncpa [#allocation3], 0
    loop: start=0, step=1, limit=4
    $region2: #{positional_encoder.1} parent=1 // loop_pre_header
      _
    $region3: #{positional_encoder.1} parent=1 // loop_header
      %s9 = sphi 0, %s13
      %p10 = scmp.ge.s32.totalorder %s9, 4
      %s19 = sphi 0, %s21
      %s22 = sphi 0, %s19
      %s23 = sphi 0, %s22
      %s39 = sphi 0, %s23
      %s43 = sphi 0, %s43
      %s45 = sphi 0, %s43
      %s46 = sphi 0, %s45
      %s60 = sphi 0, %s46
      %s66 = sphi 0, %s68
      %s69 = sphi 0, %s66
      %s70 = sphi 0, %s69
      %s86 = sphi 0, %s70
    $region4: #{positional_encoder.1} parent=1 // loop_header_branch
      %12 = sbr.rel (%p10) target = $region8
    $region5: #{positional_encoder.1} parent=1 // loop_body
      %s14 = ssub.s32 %s9, 1
      %s15 = ssub.s32 %s9, 2
      %s16 = sadd.s32 %s9, 1
      %s17 = ssub.s32 %s9, %s16
      %p18 = scmp.eq.s32.totalorder %s17, 0
      %s20 = sadd.s32 %s19, 1
      %s21 = scalar_select %p18, %s19, %s20
      %p24 = pneg %p18
      %p25 = scmp.eq.s32.totalorder %s9, 1
      %p26 = por %p24, %p25
      %p27 = scmp.ne.s32.totalorder %s19, %s22
      %p28 = scmp.eq.s32.totalorder %s9, 0
      %p29 = por %p27, %p28
      %p30 = scmp.ne.s32.totalorder %s19, %s22
      %p31 = scmp.eq.s32.totalorder %s14, 1
      %p32 = por %p30, %p31
      %p33 = scmp.ne.s32.totalorder %s22, %s23
      %p34 = scmp.eq.s32.totalorder %s14, 0
      %p35 = por %p33, %p34
      %p36 = scmp.ne.s32.totalorder %s22, %s23
      %p37 = scmp.eq.s32.totalorder %s15, 1
      %p38 = por %p36, %p37
      %p40 = scmp.ne.s32.totalorder %s23, %s39
      %p41 = scmp.eq.s32.totalorder %s15, 0
      %p42 = por %p40, %p41
      %s44 = sadd.s32 %s43, 1
      %p47 = scmp.eq.s32.totalorder %s9, 1
      %p48 = scmp.ne.s32.totalorder %s43, %s45
      %p49 = scmp.eq.s32.totalorder %s9, 0
      %p50 = por %p48, %p49
      %p51 = scmp.ne.s32.totalorder %s43, %s45
      %p52 = scmp.eq.s32.totalorder %s14, 1
      %p53 = por %p51, %p52
      %p54 = scmp.ne.s32.totalorder %s45, %s46
      %p55 = scmp.eq.s32.totalorder %s14, 0
      %p56 = por %p54, %p55
      %p57 = scmp.ne.s32.totalorder %s45, %s46
      %p58 = scmp.eq.s32.totalorder %s15, 1
      %p59 = por %p57, %p58
      %p61 = scmp.ne.s32.totalorder %s46, %s60
      %p62 = scmp.eq.s32.totalorder %s15, 0
      %p63 = por %p61, %p62
      %s64 = ssub.s32 %s9, %s16
      %p65 = scmp.eq.s32.totalorder %s64, 0
      %s67 = sadd.s32 %s66, 1
      %s68 = scalar_select %p65, %s66, %s67
      %p71 = pneg %p65
      %p72 = scmp.eq.s32.totalorder %s9, 1
      %p73 = por %p71, %p72
      %p74 = scmp.ne.s32.totalorder %s66, %s69
      %p75 = scmp.eq.s32.totalorder %s9, 0
      %p76 = por %p74, %p75
      %p77 = scmp.ne.s32.totalorder %s66, %s69
      %p78 = scmp.eq.s32.totalorder %s14, 1
      %p79 = por %p77, %p78
      %p80 = scmp.ne.s32.totalorder %s69, %s70
      %p81 = scmp.eq.s32.totalorder %s14, 0
      %p82 = por %p80, %p81
      %p83 = scmp.ne.s32.totalorder %s69, %s70
      %p84 = scmp.eq.s32.totalorder %s15, 1
      %p85 = por %p83, %p84
      %p87 = scmp.ne.s32.totalorder %s70, %s86
      %p88 = scmp.eq.s32.totalorder %s15, 0
      %p89 = por %p87, %p88
      %p90 = scmp.le.s32.totalorder 1, %s9
      %p91 = scmp.lt.s32.totalorder %s9, 3
      %p92 = pnand %p90, %p91
      %p93 = pneg %p92
      // Predicated region
      $region9: #{positional_encoder.1} parent=5 // pred_check
        _
      $region10: #{positional_encoder.1} parent=5 // pred_check_branch
        %95 = sbr.rel (%p92) target = $region12
      $region11: #{positional_encoder.1} parent=5 // pred_region
        %s96 = ssub.s32 %s9, 1
        // Predicated region
        $region13: #{positional_encoder.1} parent=11 // pred_check
          %p97 = pneg %p56
        $region14: #{positional_encoder.1} parent=11 // pred_check_branch
          %99 = sbr.rel (%p97) target = $region16
        $region15: #{positional_encoder.1} parent=11 // pred_region
          %s101 = ssub.s32 16384, 16384
          %102 = vsyncadd [#allocation3], %s101
          %s103 = sshll.u32 [#allocation2], 4
          %s104 = int_to_ptr.vmem [resolvable:$true] %s103
          %109 = dma.hbm_to_vmem [thread:$0]  %s1, 16384, %s104, [#allocation3], 1024, 1024, 64
        $region16: #{positional_encoder.1} parent=11 // pred_fallthru
          _
      $region12: #{positional_encoder.1} parent=5 // pred_fallthru
        _
      %p110 = scmp.lt.s32.totalorder %s9, 2
      // Predicated region
      $region17: #{positional_encoder.1} parent=5 // pred_check
        %p111 = pneg %p110
      $region18: #{positional_encoder.1} parent=5 // pred_check_branch
        %113 = sbr.rel (%p111) target = $region20
      $region19: #{positional_encoder.1} parent=5 // pred_region
        // Predicated region
        $region21: #{positional_encoder.1} parent=19 // pred_check
          %p114 = pneg %p29
        $region22: #{positional_encoder.1} parent=19 // pred_check_branch
          %116 = sbr.rel (%p114) target = $region24
        $region23: #{positional_encoder.1} parent=19 // pred_region
          %p117 = scmp.lt.s32.totalorder %s9, 1
          %s118 = scalar_select %p117, %s9, 1
          %s119 = smul.addr %s118, 8
          %s120 = scalar_lea.vmem %s0, %s119
        $region24: #{positional_encoder.1} parent=19 // pred_fallthru
          _
      $region20: #{positional_encoder.1} parent=5 // pred_fallthru
        _
      %p121 = scmp.le.s32.totalorder 1, %s9
      %p122 = scmp.lt.s32.totalorder %s9, 3
      %p123 = pnand %p121, %p122
      %p124 = pneg %p123
      // Predicated region
      $region25: #{positional_encoder.1} parent=5 // pred_check
        _
      $region26: #{positional_encoder.1} parent=5 // pred_check_branch
        %126 = sbr.rel (%p123) target = $region28
      $region27: #{positional_encoder.1} parent=5 // pred_region
        %s127 = ssub.s32 %s9, 1
        // Predicated region
        $region29: #{positional_encoder.1} parent=27 // pred_check
          %p128 = pneg %p56
        $region30: #{positional_encoder.1} parent=27 // pred_check_branch
          %130 = sbr.rel (%p128) target = $region32
        $region31: #{positional_encoder.1} parent=27 // pred_region
          %131 = dma.done [#allocation3], 16384
        $region32: #{positional_encoder.1} parent=27 // pred_fallthru
          _
        %p132 = scmp.lt.s32.totalorder %s14, 1
        %s133 = scalar_select %p132, %s14, 1
        %s134 = smul.addr %s133, 8
        %s135 = scalar_lea.vmem %s0, %s134
        %p136 = pneg %p35
        %p137 = pneg %p32
        %p138 = pneg %p56
        %p139 = pneg %p53
        %p140 = pneg %p82
        %p141 = pneg %p79
        %p142 = scmp.lt.s32.totalorder %s14, 1
        %s143 = scalar_select %p142, %s14, 1
        %s144 = smul.addr %s143, 8
        %s145 = smul.addr %s144, 8
        %s146 = scalar_lea.vmem %s2, %s145
        %p147 = scmp.lt.s32.totalorder %s14, 1
        %s148 = scalar_select %p147, %s14, 1
        %s149 = smul.addr %s148, 8
        %s150 = scalar_lea.vmem %s0, %s149
        %p151 = scmp.lt.s32.totalorder %s14, 1
        %s152 = scalar_select %p151, %s14, 1
        %s153 = smul.addr %s152, 8
        %s154 = smul.addr %s153, 8
        %s155 = scalar_lea.vmem %s2, %s154
        %v156 = vld [vmem:[%s150] sm:$0xff]
        %v157 = vld [vmem:[#allocation2] sm:$0xff]
        %v158 = vld [vmem:[#allocation2 + $0x8] sm:$0xff]
        %v159 = vld [vmem:[#allocation2 + $0x10] sm:$0xff]
        %v160 = vld [vmem:[#allocation2 + $0x18] sm:$0xff]
        %v161 = vld [vmem:[#allocation2 + $0x20] sm:$0xff]
        %v162 = vld [vmem:[#allocation2 + $0x28] sm:$0xff]
        %v163 = vld [vmem:[#allocation2 + $0x30] sm:$0xff]
        %v164 = vld [vmem:[#allocation2 + $0x38] sm:$0xff]
        %v165 = vld [vmem:[#allocation2 + $0x40] sm:$0xff]
        %v166 = vld [vmem:[#allocation2 + $0x48] sm:$0xff]
        %v167 = vld [vmem:[#allocation2 + $0x50] sm:$0xff]
        %v168 = vld [vmem:[#allocation2 + $0x58] sm:$0xff]
        %v169 = vld [vmem:[#allocation2 + $0x60] sm:$0xff]
        %v170 = vld [vmem:[#allocation2 + $0x68] sm:$0xff]
        %v171 = vld [vmem:[#allocation2 + $0x70] sm:$0xff]
        %v172 = vld [vmem:[#allocation2 + $0x78] sm:$0xff]
        %v173 = vld [vmem:[#allocation2 + $0x80] sm:$0xff]
        %v174 = vld [vmem:[#allocation2 + $0x88] sm:$0xff]
        %v175 = vld [vmem:[#allocation2 + $0x90] sm:$0xff]
        %v176 = vld [vmem:[#allocation2 + $0x98] sm:$0xff]
        %v177 = vld [vmem:[#allocation2 + $0xa0] sm:$0xff]
        %v178 = vld [vmem:[#allocation2 + $0xa8] sm:$0xff]
        %v179 = vld [vmem:[#allocation2 + $0xb0] sm:$0xff]
        %v180 = vld [vmem:[#allocation2 + $0xb8] sm:$0xff]
        %v181 = vld [vmem:[#allocation2 + $0xc0] sm:$0xff]
        %v182 = vld [vmem:[#allocation2 + $0xc8] sm:$0xff]
        %v183 = vld [vmem:[#allocation2 + $0xd0] sm:$0xff]
        %v184 = vld [vmem:[#allocation2 + $0xd8] sm:$0xff]
        %v185 = vld [vmem:[#allocation2 + $0xe0] sm:$0xff]
        %v186 = vld [vmem:[#allocation2 + $0xe8] sm:$0xff]
        %v187 = vld [vmem:[#allocation2 + $0xf0] sm:$0xff]
        %v188 = vld [vmem:[#allocation2 + $0xf8] sm:$0xff]
        %v189 = vld [vmem:[#allocation2 + $0x100] sm:$0xff]
        %v190 = vld [vmem:[#allocation2 + $0x108] sm:$0xff]
        %v191 = vld [vmem:[#allocation2 + $0x110] sm:$0xff]
        %v192 = vld [vmem:[#allocation2 + $0x118] sm:$0xff]
        %v193 = vld [vmem:[#allocation2 + $0x120] sm:$0xff]
        %v194 = vld [vmem:[#allocation2 + $0x128] sm:$0xff]
        %v195 = vld [vmem:[#allocation2 + $0x130] sm:$0xff]
        %v196 = vld [vmem:[#allocation2 + $0x138] sm:$0xff]
        %v197 = vld [vmem:[#allocation2 + $0x140] sm:$0xff]
        %v198 = vld [vmem:[#allocation2 + $0x148] sm:$0xff]
        %v199 = vld [vmem:[#allocation2 + $0x150] sm:$0xff]
        %v200 = vld [vmem:[#allocation2 + $0x158] sm:$0xff]
        %v201 = vld [vmem:[#allocation2 + $0x160] sm:$0xff]
        %v202 = vld [vmem:[#allocation2 + $0x168] sm:$0xff]
        %v203 = vld [vmem:[#allocation2 + $0x170] sm:$0xff]
        %v204 = vld [vmem:[#allocation2 + $0x178] sm:$0xff]
        %v205 = vld [vmem:[#allocation2 + $0x180] sm:$0xff]
        %v206 = vld [vmem:[#allocation2 + $0x188] sm:$0xff]
        %v207 = vld [vmem:[#allocation2 + $0x190] sm:$0xff]
        %v208 = vld [vmem:[#allocation2 + $0x198] sm:$0xff]
        %v209 = vld [vmem:[#allocation2 + $0x1a0] sm:$0xff]
        %v210 = vld [vmem:[#allocation2 + $0x1a8] sm:$0xff]
        %v211 = vld [vmem:[#allocation2 + $0x1b0] sm:$0xff]
        %v212 = vld [vmem:[#allocation2 + $0x1b8] sm:$0xff]
        %v213 = vld [vmem:[#allocation2 + $0x1c0] sm:$0xff]
        %v214 = vld [vmem:[#allocation2 + $0x1c8] sm:$0xff]
        %v215 = vld [vmem:[#allocation2 + $0x1d0] sm:$0xff]
        %v216 = vld [vmem:[#allocation2 + $0x1d8] sm:$0xff]
        %v217 = vld [vmem:[#allocation2 + $0x1e0] sm:$0xff]
        %v218 = vld [vmem:[#allocation2 + $0x1e8] sm:$0xff]
        %v219 = vld [vmem:[#allocation2 + $0x1f0] sm:$0xff]
        %v220 = vld [vmem:[#allocation2 + $0x1f8] sm:$0xff]
        %v221 = vld [vmem:[#allocation2 + $0x200] sm:$0xff]
        %v222 = vld [vmem:[#allocation2 + $0x208] sm:$0xff]
        %v223 = vld [vmem:[#allocation2 + $0x210] sm:$0xff]
        %v224 = vld [vmem:[#allocation2 + $0x218] sm:$0xff]
        %v225 = vld [vmem:[#allocation2 + $0x220] sm:$0xff]
        %v226 = vld [vmem:[#allocation2 + $0x228] sm:$0xff]
        %v227 = vld [vmem:[#allocation2 + $0x230] sm:$0xff]
        %v228 = vld [vmem:[#allocation2 + $0x238] sm:$0xff]
        %v229 = vld [vmem:[#allocation2 + $0x240] sm:$0xff]
        %v230 = vld [vmem:[#allocation2 + $0x248] sm:$0xff]
        %v231 = vld [vmem:[#allocation2 + $0x250] sm:$0xff]
        %v232 = vld [vmem:[#allocation2 + $0x258] sm:$0xff]
        %v233 = vld [vmem:[#allocation2 + $0x260] sm:$0xff]
        %v234 = vld [vmem:[#allocation2 + $0x268] sm:$0xff]
        %v235 = vld [vmem:[#allocation2 + $0x270] sm:$0xff]
        %v236 = vld [vmem:[#allocation2 + $0x278] sm:$0xff]
        %v237 = vld [vmem:[#allocation2 + $0x280] sm:$0xff]
        %v238 = vld [vmem:[#allocation2 + $0x288] sm:$0xff]
        %v239 = vld [vmem:[#allocation2 + $0x290] sm:$0xff]
        %v240 = vld [vmem:[#allocation2 + $0x298] sm:$0xff]
        %v241 = vld [vmem:[#allocation2 + $0x2a0] sm:$0xff]
        %v242 = vld [vmem:[#allocation2 + $0x2a8] sm:$0xff]
        %v243 = vld [vmem:[#allocation2 + $0x2b0] sm:$0xff]
        %v244 = vld [vmem:[#allocation2 + $0x2b8] sm:$0xff]
        %v245 = vld [vmem:[#allocation2 + $0x2c0] sm:$0xff]
        %v246 = vld [vmem:[#allocation2 + $0x2c8] sm:$0xff]
        %v247 = vld [vmem:[#allocation2 + $0x2d0] sm:$0xff]
        %v248 = vld [vmem:[#allocation2 + $0x2d8] sm:$0xff]
        %v249 = vld [vmem:[#allocation2 + $0x2e0] sm:$0xff]
        %v250 = vld [vmem:[#allocation2 + $0x2e8] sm:$0xff]
        %v251 = vld [vmem:[#allocation2 + $0x2f0] sm:$0xff]
        %v252 = vld [vmem:[#allocation2 + $0x2f8] sm:$0xff]
        %v253 = vld [vmem:[#allocation2 + $0x300] sm:$0xff]
        %v254 = vld [vmem:[#allocation2 + $0x308] sm:$0xff]
        %v255 = vld [vmem:[#allocation2 + $0x310] sm:$0xff]
        %v256 = vld [vmem:[#allocation2 + $0x318] sm:$0xff]
        %v257 = vld [vmem:[#allocation2 + $0x320] sm:$0xff]
        %v258 = vld [vmem:[#allocation2 + $0x328] sm:$0xff]
        %v259 = vld [vmem:[#allocation2 + $0x330] sm:$0xff]
        %v260 = vld [vmem:[#allocation2 + $0x338] sm:$0xff]
        %v261 = vld [vmem:[#allocation2 + $0x340] sm:$0xff]
        %v262 = vld [vmem:[#allocation2 + $0x348] sm:$0xff]
        %v263 = vld [vmem:[#allocation2 + $0x350] sm:$0xff]
        %v264 = vld [vmem:[#allocation2 + $0x358] sm:$0xff]
        %v265 = vld [vmem:[#allocation2 + $0x360] sm:$0xff]
        %v266 = vld [vmem:[#allocation2 + $0x368] sm:$0xff]
        %v267 = vld [vmem:[#allocation2 + $0x370] sm:$0xff]
        %v268 = vld [vmem:[#allocation2 + $0x378] sm:$0xff]
        %v269 = vld [vmem:[#allocation2 + $0x380] sm:$0xff]
        %v270 = vld [vmem:[#allocation2 + $0x388] sm:$0xff]
        %v271 = vld [vmem:[#allocation2 + $0x390] sm:$0xff]
        %v272 = vld [vmem:[#allocation2 + $0x398] sm:$0xff]
        %v273 = vld [vmem:[#allocation2 + $0x3a0] sm:$0xff]
        %v274 = vld [vmem:[#allocation2 + $0x3a8] sm:$0xff]
        %v275 = vld [vmem:[#allocation2 + $0x3b0] sm:$0xff]
        %v276 = vld [vmem:[#allocation2 + $0x3b8] sm:$0xff]
        %v277 = vld [vmem:[#allocation2 + $0x3c0] sm:$0xff]
        %v278 = vld [vmem:[#allocation2 + $0x3c8] sm:$0xff]
        %v279 = vld [vmem:[#allocation2 + $0x3d0] sm:$0xff]
        %v280 = vld [vmem:[#allocation2 + $0x3d8] sm:$0xff]
        %v281 = vld [vmem:[#allocation2 + $0x3e0] sm:$0xff]
        %v282 = vld [vmem:[#allocation2 + $0x3e8] sm:$0xff]
        %v283 = vld [vmem:[#allocation2 + $0x3f0] sm:$0xff]
        %v284 = vld [vmem:[#allocation2 + $0x3f8] sm:$0xff]
        %v285 = vand.u32 %v158, 4294901760
        %286 = vmatprep.subr.mxu0 %v285
        %v287 = vand.u32 %v157, 4294901760
        %288 = vmatpush1.msra.mxu0 %v287
        %v289 = vand.u32 %v166, 4294901760
        %290 = vmatprep.subr.mxu0 %v289
        %v291 = vand.u32 %v165, 4294901760
        %292 = vmatpush1.msra.mxu0 %v291
        %v293 = vand.u32 %v174, 4294901760
        %294 = vmatprep.subr.mxu0 %v293
        %v295 = vand.u32 %v173, 4294901760
        %296 = vmatpush1.msra.mxu0 %v295
        %v297 = vand.u32 %v182, 4294901760
        %298 = vmatprep.subr.mxu0 %v297
        %v299 = vand.u32 %v181, 4294901760
        %300 = vmatpush1.msra.mxu0 %v299
        %v301 = vand.u32 %v190, 4294901760
        %302 = vmatprep.subr.mxu0 %v301
        %v303 = vand.u32 %v189, 4294901760
        %304 = vmatpush1.msra.mxu0 %v303
        %v305 = vand.u32 %v198, 4294901760
        %306 = vmatprep.subr.mxu0 %v305
        %v307 = vand.u32 %v197, 4294901760
        %308 = vmatpush1.msra.mxu0 %v307
        %v309 = vand.u32 %v206, 4294901760
        %310 = vmatprep.subr.mxu0 %v309
        %v311 = vand.u32 %v205, 4294901760
        %312 = vmatpush1.msra.mxu0 %v311
        %v313 = vand.u32 %v214, 4294901760
        %314 = vmatprep.subr.mxu0 %v313
        %v315 = vand.u32 %v213, 4294901760
        %316 = vmatpush1.msra.mxu0 %v315
        %v317 = vand.u32 %v222, 4294901760
        %318 = vmatprep.subr.mxu0 %v317
        %v319 = vand.u32 %v221, 4294901760
        %320 = vmatpush1.msra.mxu0 %v319
        %v321 = vand.u32 %v230, 4294901760
        %322 = vmatprep.subr.mxu0 %v321
        %v323 = vand.u32 %v229, 4294901760
        %324 = vmatpush1.msra.mxu0 %v323
        %v325 = vand.u32 %v238, 4294901760
        %326 = vmatprep.subr.mxu0 %v325
        %v327 = vand.u32 %v237, 4294901760
        %328 = vmatpush1.msra.mxu0 %v327
        %v329 = vand.u32 %v246, 4294901760
        %330 = vmatprep.subr.mxu0 %v329
        %v331 = vand.u32 %v245, 4294901760
        %332 = vmatpush1.msra.mxu0 %v331
        %v333 = vand.u32 %v254, 4294901760
        %334 = vmatprep.subr.mxu0 %v333
        %v335 = vand.u32 %v253, 4294901760
        %336 = vmatpush1.msra.mxu0 %v335
        %v337 = vand.u32 %v262, 4294901760
        %338 = vmatprep.subr.mxu0 %v337
        %v339 = vand.u32 %v261, 4294901760
        %340 = vmatpush1.msra.mxu0 %v339
        %v341 = vand.u32 %v270, 4294901760
        %342 = vmatprep.subr.mxu0 %v341
        %v343 = vand.u32 %v269, 4294901760
        %344 = vmatpush1.msra.mxu0 %v343
        %v345 = vand.u32 %v278, 4294901760
        %346 = vmatprep.subr.mxu0 %v345
        %v347 = vand.u32 %v277, 4294901760
        %348 = vmatpush1.msra.mxu0 %v347
        %349 = vmatprep.subr.mxu0 0.0
        %350 = vmatpush1.msra.mxu0 0.0
        %351 = vmatprep.subr.mxu0 0.0
        %352 = vmatpush1.msra.mxu0 0.0
        %353 = vmatprep.subr.mxu0 0.0
        %354 = vmatpush1.msra.mxu0 0.0
        %355 = vmatprep.subr.mxu0 0.0
        %356 = vmatpush1.msra.mxu0 0.0
        %357 = vmatprep.subr.mxu0 0.0
        %358 = vmatpush1.msra.mxu0 0.0
        %359 = vmatprep.subr.mxu0 0.0
        %360 = vmatpush1.msra.mxu0 0.0
        %361 = vmatprep.subr.mxu0 0.0
        %362 = vmatpush1.msra.mxu0 0.0
        %363 = vmatprep.subr.mxu0 0.0
        %364 = vmatpush1.msra.mxu0 0.0
        %365 = vmatprep.subr.mxu0 0.0
        %366 = vmatpush1.msra.mxu0 0.0
        %367 = vmatprep.subr.mxu0 0.0
        %368 = vmatpush1.msra.mxu0 0.0
        %369 = vmatprep.subr.mxu0 0.0
        %370 = vmatpush1.msra.mxu0 0.0
        %371 = vmatprep.subr.mxu0 0.0
        %372 = vmatpush1.msra.mxu0 0.0
        %373 = vmatprep.subr.mxu0 0.0
        %374 = vmatpush1.msra.mxu0 0.0
        %375 = vmatprep.subr.mxu0 0.0
        %376 = vmatpush1.msra.mxu0 0.0
        %377 = vmatprep.subr.mxu0 0.0
        %378 = vmatpush1.msra.mxu0 0.0
        %379 = vmatprep.subr.mxu0 0.0
        %380 = vmatpush1.msra.mxu0 0.0
        %381 = vmatprep.mubr.f32.mxu0 0.0
        %v382 = vand.u32 %v156, 4294901760
        %v383 = vsub.f32 %v156, %v382
        %v384 = vand.u32 %v383, 4294901760
        %v385 = vsub.f32 %v383, %v384
        %v386 = vand.u32 %v385, 4294901760
        %387 = vmatmul.mubr.f32.gmra.mrb[0].mxu0 %v386
        %v388 = vpop.f32.mrb[0].mxu0
        %v389 = vadd.f32 0.0, %v388
        %v390 = vpop.f32.mrb[0].mxu0
        %v391 = vadd.f32 0.0, %v390
        %392 = vdwg.mxu0
        %v393 = vand.u32 %v158, 4294901760
        %v394 = vsub.f32 %v158, %v393
        %v395 = vand.u32 %v394, 4294901760
        %v396 = vsub.f32 %v394, %v395
        %v397 = vand.u32 %v396, 4294901760
        %398 = vmatprep.subr.mxu0 %v397
        %v399 = vand.u32 %v157, 4294901760
        %v400 = vsub.f32 %v157, %v399
        %v401 = vand.u32 %v400, 4294901760
        %v402 = vsub.f32 %v400, %v401
        %v403 = vand.u32 %v402, 4294901760
        %404 = vmatpush1.msra.mxu0 %v403
        %v405 = vand.u32 %v166, 4294901760
        %v406 = vsub.f32 %v166, %v405
        %v407 = vand.u32 %v406, 4294901760
        %v408 = vsub.f32 %v406, %v407
        %v409 = vand.u32 %v408, 4294901760
        %410 = vmatprep.subr.mxu0 %v409
        %v411 = vand.u32 %v165, 4294901760
        %v412 = vsub.f32 %v165, %v411
        %v413 = vand.u32 %v412, 4294901760
        %v414 = vsub.f32 %v412, %v413
        %v415 = vand.u32 %v414, 4294901760
        %416 = vmatpush1.msra.mxu0 %v415
        %v417 = vand.u32 %v174, 4294901760
        %v418 = vsub.f32 %v174, %v417
        %v419 = vand.u32 %v418, 4294901760
        %v420 = vsub.f32 %v418, %v419
        %v421 = vand.u32 %v420, 4294901760
        %422 = vmatprep.subr.mxu0 %v421
        %v423 = vand.u32 %v173, 4294901760
        %v424 = vsub.f32 %v173, %v423
        %v425 = vand.u32 %v424, 4294901760
        %v426 = vsub.f32 %v424, %v425
        %v427 = vand.u32 %v426, 4294901760
        %428 = vmatpush1.msra.mxu0 %v427
        %v429 = vand.u32 %v182, 4294901760
        %v430 = vsub.f32 %v182, %v429
        %v431 = vand.u32 %v430, 4294901760
        %v432 = vsub.f32 %v430, %v431
        %v433 = vand.u32 %v432, 4294901760
        %434 = vmatprep.subr.mxu0 %v433
        %v435 = vand.u32 %v181, 4294901760
        %v436 = vsub.f32 %v181, %v435
        %v437 = vand.u32 %v436, 4294901760
        %v438 = vsub.f32 %v436, %v437
        %v439 = vand.u32 %v438, 4294901760
        %440 = vmatpush1.msra.mxu0 %v439
        %v441 = vand.u32 %v190, 4294901760
        %v442 = vsub.f32 %v190, %v441
        %v443 = vand.u32 %v442, 4294901760
        %v444 = vsub.f32 %v442, %v443
        %v445 = vand.u32 %v444, 4294901760
        %446 = vmatprep.subr.mxu0 %v445
        %v447 = vand.u32 %v189, 4294901760
        %v448 = vsub.f32 %v189, %v447
        %v449 = vand.u32 %v448, 4294901760
        %v450 = vsub.f32 %v448, %v449
        %v451 = vand.u32 %v450, 4294901760
        %452 = vmatpush1.msra.mxu0 %v451
        %v453 = vand.u32 %v198, 4294901760
        %v454 = vsub.f32 %v198, %v453
        %v455 = vand.u32 %v454, 4294901760
        %v456 = vsub.f32 %v454, %v455
        %v457 = vand.u32 %v456, 4294901760
        %458 = vmatprep.subr.mxu0 %v457
        %v459 = vand.u32 %v197, 4294901760
        %v460 = vsub.f32 %v197, %v459
        %v461 = vand.u32 %v460, 4294901760
        %v462 = vsub.f32 %v460, %v461
        %v463 = vand.u32 %v462, 4294901760
        %464 = vmatpush1.msra.mxu0 %v463
        %v465 = vand.u32 %v206, 4294901760
        %v466 = vsub.f32 %v206, %v465
        %v467 = vand.u32 %v466, 4294901760
        %v468 = vsub.f32 %v466, %v467
        %v469 = vand.u32 %v468, 4294901760
        %470 = vmatprep.subr.mxu0 %v469
        %v471 = vand.u32 %v205, 4294901760
        %v472 = vsub.f32 %v205, %v471
        %v473 = vand.u32 %v472, 4294901760
        %v474 = vsub.f32 %v472, %v473
        %v475 = vand.u32 %v474, 4294901760
        %476 = vmatpush1.msra.mxu0 %v475
        %v477 = vand.u32 %v214, 4294901760
        %v478 = vsub.f32 %v214, %v477
        %v479 = vand.u32 %v478, 4294901760
        %v480 = vsub.f32 %v478, %v479
        %v481 = vand.u32 %v480, 4294901760
        %482 = vmatprep.subr.mxu0 %v481
        %v483 = vand.u32 %v213, 4294901760
        %v484 = vsub.f32 %v213, %v483
        %v485 = vand.u32 %v484, 4294901760
        %v486 = vsub.f32 %v484, %v485
        %v487 = vand.u32 %v486, 4294901760
        %488 = vmatpush1.msra.mxu0 %v487
        %v489 = vand.u32 %v222, 4294901760
        %v490 = vsub.f32 %v222, %v489
        %v491 = vand.u32 %v490, 4294901760
        %v492 = vsub.f32 %v490, %v491
        %v493 = vand.u32 %v492, 4294901760
        %494 = vmatprep.subr.mxu0 %v493
        %v495 = vand.u32 %v221, 4294901760
        %v496 = vsub.f32 %v221, %v495
        %v497 = vand.u32 %v496, 4294901760
        %v498 = vsub.f32 %v496, %v497
        %v499 = vand.u32 %v498, 4294901760
        %500 = vmatpush1.msra.mxu0 %v499
        %v501 = vand.u32 %v230, 4294901760
        %v502 = vsub.f32 %v230, %v501
        %v503 = vand.u32 %v502, 4294901760
        %v504 = vsub.f32 %v502, %v503
        %v505 = vand.u32 %v504, 4294901760
        %506 = vmatprep.subr.mxu0 %v505
        %v507 = vand.u32 %v229, 4294901760
        %v508 = vsub.f32 %v229, %v507
        %v509 = vand.u32 %v508, 4294901760
        %v510 = vsub.f32 %v508, %v509
        %v511 = vand.u32 %v510, 4294901760
        %512 = vmatpush1.msra.mxu0 %v511
        %v513 = vand.u32 %v238, 4294901760
        %v514 = vsub.f32 %v238, %v513
        %v515 = vand.u32 %v514, 4294901760
        %v516 = vsub.f32 %v514, %v515
        %v517 = vand.u32 %v516, 4294901760
        %518 = vmatprep.subr.mxu0 %v517
        %v519 = vand.u32 %v237, 4294901760
        %v520 = vsub.f32 %v237, %v519
        %v521 = vand.u32 %v520, 4294901760
        %v522 = vsub.f32 %v520, %v521
        %v523 = vand.u32 %v522, 4294901760
        %524 = vmatpush1.msra.mxu0 %v523
        %v525 = vand.u32 %v246, 4294901760
        %v526 = vsub.f32 %v246, %v525
        %v527 = vand.u32 %v526, 4294901760
        %v528 = vsub.f32 %v526, %v527
        %v529 = vand.u32 %v528, 4294901760
        %530 = vmatprep.subr.mxu0 %v529
        %v531 = vand.u32 %v245, 4294901760
        %v532 = vsub.f32 %v245, %v531
        %v533 = vand.u32 %v532, 4294901760
        %v534 = vsub.f32 %v532, %v533
        %v535 = vand.u32 %v534, 4294901760
        %536 = vmatpush1.msra.mxu0 %v535
        %v537 = vand.u32 %v254, 4294901760
        %v538 = vsub.f32 %v254, %v537
        %v539 = vand.u32 %v538, 4294901760
        %v540 = vsub.f32 %v538, %v539
        %v541 = vand.u32 %v540, 4294901760
        %542 = vmatprep.subr.mxu0 %v541
        %v543 = vand.u32 %v253, 4294901760
        %v544 = vsub.f32 %v253, %v543
        %v545 = vand.u32 %v544, 4294901760
        %v546 = vsub.f32 %v544, %v545
        %v547 = vand.u32 %v546, 4294901760
        %548 = vmatpush1.msra.mxu0 %v547
        %v549 = vand.u32 %v262, 4294901760
        %v550 = vsub.f32 %v262, %v549
        %v551 = vand.u32 %v550, 4294901760
        %v552 = vsub.f32 %v550, %v551
        %v553 = vand.u32 %v552, 4294901760
        %554 = vmatprep.subr.mxu0 %v553
        %v555 = vand.u32 %v261, 4294901760
        %v556 = vsub.f32 %v261, %v555
        %v557 = vand.u32 %v556, 4294901760
        %v558 = vsub.f32 %v556, %v557
        %v559 = vand.u32 %v558, 4294901760
        %560 = vmatpush1.msra.mxu0 %v559
        %v561 = vand.u32 %v270, 4294901760
        %v562 = vsub.f32 %v270, %v561
        %v563 = vand.u32 %v562, 4294901760
        %v564 = vsub.f32 %v562, %v563
        %v565 = vand.u32 %v564, 4294901760
        %566 = vmatprep.subr.mxu0 %v565
        %v567 = vand.u32 %v269, 4294901760
        %v568 = vsub.f32 %v269, %v567
        %v569 = vand.u32 %v568, 4294901760
        %v570 = vsub.f32 %v568, %v569
        %v571 = vand.u32 %v570, 4294901760
        %572 = vmatpush1.msra.mxu0 %v571
        %v573 = vand.u32 %v278, 4294901760
        %v574 = vsub.f32 %v278, %v573
        %v575 = vand.u32 %v574, 4294901760
        %v576 = vsub.f32 %v574, %v575
        %v577 = vand.u32 %v576, 4294901760
        %578 = vmatprep.subr.mxu0 %v577
        %v579 = vand.u32 %v277, 4294901760
        %v580 = vsub.f32 %v277, %v579
        %v581 = vand.u32 %v580, 4294901760
        %v582 = vsub.f32 %v580, %v581
        %v583 = vand.u32 %v582, 4294901760
        %584 = vmatpush1.msra.mxu0 %v583
        %585 = vmatprep.subr.mxu0 0.0
        %586 = vmatpush1.msra.mxu0 0.0
        %587 = vmatprep.subr.mxu0 0.0
        %588 = vmatpush1.msra.mxu0 0.0
        %589 = vmatprep.subr.mxu0 0.0
        %590 = vmatpush1.msra.mxu0 0.0
        %591 = vmatprep.subr.mxu0 0.0
        %592 = vmatpush1.msra.mxu0 0.0
        %593 = vmatprep.subr.mxu0 0.0
        %594 = vmatpush1.msra.mxu0 0.0
        %595 = vmatprep.subr.mxu0 0.0
        %596 = vmatpush1.msra.mxu0 0.0
        %597 = vmatprep.subr.mxu0 0.0
        %598 = vmatpush1.msra.mxu0 0.0
        %599 = vmatprep.subr.mxu0 0.0
        %600 = vmatpush1.msra.mxu0 0.0
        %601 = vmatprep.subr.mxu0 0.0
        %602 = vmatpush1.msra.mxu0 0.0
        %603 = vmatprep.subr.mxu0 0.0
        %604 = vmatpush1.msra.mxu0 0.0
        %605 = vmatprep.subr.mxu0 0.0
        %606 = vmatpush1.msra.mxu0 0.0
        %607 = vmatprep.subr.mxu0 0.0
        %608 = vmatpush1.msra.mxu0 0.0
        %609 = vmatprep.subr.mxu0 0.0
        %610 = vmatpush1.msra.mxu0 0.0
        %611 = vmatprep.subr.mxu0 0.0
        %612 = vmatpush1.msra.mxu0 0.0
        %613 = vmatprep.subr.mxu0 0.0
        %614 = vmatpush1.msra.mxu0 0.0
        %615 = vmatprep.subr.mxu0 0.0
        %616 = vmatpush1.msra.mxu0 0.0
        %617 = vmatprep.mubr.f32.mxu0 0.0
        %v618 = vand.u32 %v156, 4294901760
        %619 = vmatmul.mubr.f32.gmra.mrb[0].mxu0 %v618
        %v620 = vpop.f32.mrb[0].mxu0
        %v621 = vadd.f32 %v389, %v620
        %v622 = vpop.f32.mrb[0].mxu0
        %v623 = vadd.f32 %v391, %v622
        %624 = vdwg.mxu0
        %v625 = vand.u32 %v158, 4294901760
        %v626 = vsub.f32 %v158, %v625
        %627 = vmatprep.subr.mxu0 %v626
        %v628 = vand.u32 %v157, 4294901760
        %v629 = vsub.f32 %v157, %v628
        %630 = vmatpush1.msra.mxu0 %v629
        %v631 = vand.u32 %v166, 4294901760
        %v632 = vsub.f32 %v166, %v631
        %633 = vmatprep.subr.mxu0 %v632
        %v634 = vand.u32 %v165, 4294901760
        %v635 = vsub.f32 %v165, %v634
        %636 = vmatpush1.msra.mxu0 %v635
        %v637 = vand.u32 %v174, 4294901760
        %v638 = vsub.f32 %v174, %v637
        %639 = vmatprep.subr.mxu0 %v638
        %v640 = vand.u32 %v173, 4294901760
        %v641 = vsub.f32 %v173, %v640
        %642 = vmatpush1.msra.mxu0 %v641
        %v643 = vand.u32 %v182, 4294901760
        %v644 = vsub.f32 %v182, %v643
        %645 = vmatprep.subr.mxu0 %v644
        %v646 = vand.u32 %v181, 4294901760
        %v647 = vsub.f32 %v181, %v646
        %648 = vmatpush1.msra.mxu0 %v647
        %v649 = vand.u32 %v190, 4294901760
        %v650 = vsub.f32 %v190, %v649
        %651 = vmatprep.subr.mxu0 %v650
        %v652 = vand.u32 %v189, 4294901760
        %v653 = vsub.f32 %v189, %v652
        %654 = vmatpush1.msra.mxu0 %v653
        %v655 = vand.u32 %v198, 4294901760
        %v656 = vsub.f32 %v198, %v655
        %657 = vmatprep.subr.mxu0 %v656
        %v658 = vand.u32 %v197, 4294901760
        %v659 = vsub.f32 %v197, %v658
        %660 = vmatpush1.msra.mxu0 %v659
        %v661 = vand.u32 %v206, 4294901760
        %v662 = vsub.f32 %v206, %v661
        %663 = vmatprep.subr.mxu0 %v662
        %v664 = vand.u32 %v205, 4294901760
        %v665 = vsub.f32 %v205, %v664
        %666 = vmatpush1.msra.mxu0 %v665
        %v667 = vand.u32 %v214, 4294901760
        %v668 = vsub.f32 %v214, %v667
        %669 = vmatprep.subr.mxu0 %v668
        %v670 = vand.u32 %v213, 4294901760
        %v671 = vsub.f32 %v213, %v670
        %672 = vmatpush1.msra.mxu0 %v671
        %v673 = vand.u32 %v222, 4294901760
        %v674 = vsub.f32 %v222, %v673
        %675 = vmatprep.subr.mxu0 %v674
        %v676 = vand.u32 %v221, 4294901760
        %v677 = vsub.f32 %v221, %v676
        %678 = vmatpush1.msra.mxu0 %v677
        %v679 = vand.u32 %v230, 4294901760
        %v680 = vsub.f32 %v230, %v679
        %681 = vmatprep.subr.mxu0 %v680
        %v682 = vand.u32 %v229, 4294901760
        %v683 = vsub.f32 %v229, %v682
        %684 = vmatpush1.msra.mxu0 %v683
        %v685 = vand.u32 %v238, 4294901760
        %v686 = vsub.f32 %v238, %v685
        %687 = vmatprep.subr.mxu0 %v686
        %v688 = vand.u32 %v237, 4294901760
        %v689 = vsub.f32 %v237, %v688
        %690 = vmatpush1.msra.mxu0 %v689
        %v691 = vand.u32 %v246, 4294901760
        %v692 = vsub.f32 %v246, %v691
        %693 = vmatprep.subr.mxu0 %v692
        %v694 = vand.u32 %v245, 4294901760
        %v695 = vsub.f32 %v245, %v694
        %696 = vmatpush1.msra.mxu0 %v695
        %v697 = vand.u32 %v254, 4294901760
        %v698 = vsub.f32 %v254, %v697
        %699 = vmatprep.subr.mxu0 %v698
        %v700 = vand.u32 %v253, 4294901760
        %v701 = vsub.f32 %v253, %v700
        %702 = vmatpush1.msra.mxu0 %v701
        %v703 = vand.u32 %v262, 4294901760
        %v704 = vsub.f32 %v262, %v703
        %705 = vmatprep.subr.mxu0 %v704
        %v706 = vand.u32 %v261, 4294901760
        %v707 = vsub.f32 %v261, %v706
        %708 = vmatpush1.msra.mxu0 %v707
        %v709 = vand.u32 %v270, 4294901760
        %v710 = vsub.f32 %v270, %v709
        %711 = vmatprep.subr.mxu0 %v710
        %v712 = vand.u32 %v269, 4294901760
        %v713 = vsub.f32 %v269, %v712
        %714 = vmatpush1.msra.mxu0 %v713
        %v715 = vand.u32 %v278, 4294901760
        %v716 = vsub.f32 %v278, %v715
        %717 = vmatprep.subr.mxu0 %v716
        %v718 = vand.u32 %v277, 4294901760
        %v719 = vsub.f32 %v277, %v718
        %720 = vmatpush1.msra.mxu0 %v719
        %721 = vmatprep.subr.mxu0 0.0
        %722 = vmatpush1.msra.mxu0 0.0
        %723 = vmatprep.subr.mxu0 0.0
        %724 = vmatpush1.msra.mxu0 0.0
        %725 = vmatprep.subr.mxu0 0.0
        %726 = vmatpush1.msra.mxu0 0.0
        %727 = vmatprep.subr.mxu0 0.0
        %728 = vmatpush1.msra.mxu0 0.0
        %729 = vmatprep.subr.mxu0 0.0
        %730 = vmatpush1.msra.mxu0 0.0
        %731 = vmatprep.subr.mxu0 0.0
        %732 = vmatpush1.msra.mxu0 0.0
        %733 = vmatprep.subr.mxu0 0.0
        %734 = vmatpush1.msra.mxu0 0.0
        %735 = vmatprep.subr.mxu0 0.0
        %736 = vmatpush1.msra.mxu0 0.0
        %737 = vmatprep.subr.mxu0 0.0
        %738 = vmatpush1.msra.mxu0 0.0
        %739 = vmatprep.subr.mxu0 0.0
        %740 = vmatpush1.msra.mxu0 0.0
        %741 = vmatprep.subr.mxu0 0.0
        %742 = vmatpush1.msra.mxu0 0.0
        %743 = vmatprep.subr.mxu0 0.0
        %744 = vmatpush1.msra.mxu0 0.0
        %745 = vmatprep.subr.mxu0 0.0
        %746 = vmatpush1.msra.mxu0 0.0
        %747 = vmatprep.subr.mxu0 0.0
        %748 = vmatpush1.msra.mxu0 0.0
        %749 = vmatprep.subr.mxu0 0.0
        %750 = vmatpush1.msra.mxu0 0.0
        %751 = vmatprep.subr.mxu0 0.0
        %752 = vmatpush1.msra.mxu0 0.0
        %753 = vmatprep.mubr.f32.mxu0 0.0
        %v754 = vand.u32 %v156, 4294901760
        %v755 = vsub.f32 %v156, %v754
        %756 = vmatmul.mubr.f32.gmra.mrb[0].mxu0 %v755
        %v757 = vpop.f32.mrb[0].mxu0
        %v758 = vadd.f32 %v621, %v757
        %v759 = vpop.f32.mrb[0].mxu0
        %v760 = vadd.f32 %v623, %v759
        %761 = vdwg.mxu0
        %v762 = vand.u32 %v158, 4294901760
        %763 = vmatprep.subr.mxu0 %v762
        %v764 = vand.u32 %v157, 4294901760
        %765 = vmatpush1.msra.mxu0 %v764
        %v766 = vand.u32 %v166, 4294901760
        %767 = vmatprep.subr.mxu0 %v766
        %v768 = vand.u32 %v165, 4294901760
        %769 = vmatpush1.msra.mxu0 %v768
        %v770 = vand.u32 %v174, 4294901760
        %771 = vmatprep.subr.mxu0 %v770
        %v772 = vand.u32 %v173, 4294901760
        %773 = vmatpush1.msra.mxu0 %v772
        %v774 = vand.u32 %v182, 4294901760
        %775 = vmatprep.subr.mxu0 %v774
        %v776 = vand.u32 %v181, 4294901760
        %777 = vmatpush1.msra.mxu0 %v776
        %v778 = vand.u32 %v190, 4294901760
        %779 = vmatprep.subr.mxu0 %v778
        %v780 = vand.u32 %v189, 4294901760
        %781 = vmatpush1.msra.mxu0 %v780
        %v782 = vand.u32 %v198, 4294901760
        %783 = vmatprep.subr.mxu0 %v782
        %v784 = vand.u32 %v197, 4294901760
        %785 = vmatpush1.msra.mxu0 %v784
        %v786 = vand.u32 %v206, 4294901760
        %787 = vmatprep.subr.mxu0 %v786
        %v788 = vand.u32 %v205, 4294901760
        %789 = vmatpush1.msra.mxu0 %v788
        %v790 = vand.u32 %v214, 4294901760
        %791 = vmatprep.subr.mxu0 %v790
        %v792 = vand.u32 %v213, 4294901760
        %793 = vmatpush1.msra.mxu0 %v792
        %v794 = vand.u32 %v222, 4294901760
        %795 = vmatprep.subr.mxu0 %v794
        %v796 = vand.u32 %v221, 4294901760
        %797 = vmatpush1.msra.mxu0 %v796
        %v798 = vand.u32 %v230, 4294901760
        %799 = vmatprep.subr.mxu0 %v798
        %v800 = vand.u32 %v229, 4294901760
        %801 = vmatpush1.msra.mxu0 %v800
        %v802 = vand.u32 %v238, 4294901760
        %803 = vmatprep.subr.mxu0 %v802
        %v804 = vand.u32 %v237, 4294901760
        %805 = vmatpush1.msra.mxu0 %v804
        %v806 = vand.u32 %v246, 4294901760
        %807 = vmatprep.subr.mxu0 %v806
        %v808 = vand.u32 %v245, 4294901760
        %809 = vmatpush1.msra.mxu0 %v808
        %v810 = vand.u32 %v254, 4294901760
        %811 = vmatprep.subr.mxu0 %v810
        %v812 = vand.u32 %v253, 4294901760
        %813 = vmatpush1.msra.mxu0 %v812
        %v814 = vand.u32 %v262, 4294901760
        %815 = vmatprep.subr.mxu0 %v814
        %v816 = vand.u32 %v261, 4294901760
        %817 = vmatpush1.msra.mxu0 %v816
        %v818 = vand.u32 %v270, 4294901760
        %819 = vmatprep.subr.mxu0 %v818
        %v820 = vand.u32 %v269, 4294901760
        %821 = vmatpush1.msra.mxu0 %v820
        %v822 = vand.u32 %v278, 4294901760
        %823 = vmatprep.subr.mxu0 %v822
        %v824 = vand.u32 %v277, 4294901760
        %825 = vmatpush1.msra.mxu0 %v824
        %826 = vmatprep.subr.mxu0 0.0
        %827 = vmatpush1.msra.mxu0 0.0
        %828 = vmatprep.subr.mxu0 0.0
        %829 = vmatpush1.msra.mxu0 0.0
        %830 = vmatprep.subr.mxu0 0.0
        %831 = vmatpush1.msra.mxu0 0.0
        %832 = vmatprep.subr.mxu0 0.0
        %833 = vmatpush1.msra.mxu0 0.0
        %834 = vmatprep.subr.mxu0 0.0
        %835 = vmatpush1.msra.mxu0 0.0
        %836 = vmatprep.subr.mxu0 0.0
        %837 = vmatpush1.msra.mxu0 0.0
        %838 = vmatprep.subr.mxu0 0.0
        %839 = vmatpush1.msra.mxu0 0.0
        %840 = vmatprep.subr.mxu0 0.0
        %841 = vmatpush1.msra.mxu0 0.0
        %842 = vmatprep.subr.mxu0 0.0
        %843 = vmatpush1.msra.mxu0 0.0
        %844 = vmatprep.subr.mxu0 0.0
        %845 = vmatpush1.msra.mxu0 0.0
        %846 = vmatprep.subr.mxu0 0.0
        %847 = vmatpush1.msra.mxu0 0.0
        %848 = vmatprep.subr.mxu0 0.0
        %849 = vmatpush1.msra.mxu0 0.0
        %850 = vmatprep.subr.mxu0 0.0
        %851 = vmatpush1.msra.mxu0 0.0
        %852 = vmatprep.subr.mxu0 0.0
        %853 = vmatpush1.msra.mxu0 0.0
        %854 = vmatprep.subr.mxu0 0.0
        %855 = vmatpush1.msra.mxu0 0.0
        %856 = vmatprep.subr.mxu0 0.0
        %857 = vmatpush1.msra.mxu0 0.0
        %858 = vmatprep.mubr.f32.mxu0 0.0
        %v859 = vand.u32 %v156, 4294901760
        %v860 = vsub.f32 %v156, %v859
        %v861 = vand.u32 %v860, 4294901760
        %862 = vmatmul.mubr.f32.gmra.mrb[0].mxu0 %v861
        %v863 = vpop.f32.mrb[0].mxu0
        %v864 = vadd.f32 %v758, %v863
        %v865 = vpop.f32.mrb[0].mxu0
        %v866 = vadd.f32 %v760, %v865
        %867 = vdwg.mxu0
        %v868 = vand.u32 %v158, 4294901760
        %v869 = vsub.f32 %v158, %v868
        %v870 = vand.u32 %v869, 4294901760
        %871 = vmatprep.subr.mxu0 %v870
        %v872 = vand.u32 %v157, 4294901760
        %v873 = vsub.f32 %v157, %v872
        %v874 = vand.u32 %v873, 4294901760
        %875 = vmatpush1.msra.mxu0 %v874
        %v876 = vand.u32 %v166, 4294901760
        %v877 = vsub.f32 %v166, %v876
        %v878 = vand.u32 %v877, 4294901760
        %879 = vmatprep.subr.mxu0 %v878
        %v880 = vand.u32 %v165, 4294901760
        %v881 = vsub.f32 %v165, %v880
        %v882 = vand.u32 %v881, 4294901760
        %883 = vmatpush1.msra.mxu0 %v882
        %v884 = vand.u32 %v174, 4294901760
        %v885 = vsub.f32 %v174, %v884
        %v886 = vand.u32 %v885, 4294901760
        %887 = vmatprep.subr.mxu0 %v886
        %v888 = vand.u32 %v173, 4294901760
        %v889 = vsub.f32 %v173, %v888
        %v890 = vand.u32 %v889, 4294901760
        %891 = vmatpush1.msra.mxu0 %v890
        %v892 = vand.u32 %v182, 4294901760
        %v893 = vsub.f32 %v182, %v892
        %v894 = vand.u32 %v893, 4294901760
        %895 = vmatprep.subr.mxu0 %v894
        %v896 = vand.u32 %v181, 4294901760
        %v897 = vsub.f32 %v181, %v896
        %v898 = vand.u32 %v897, 4294901760
        %899 = vmatpush1.msra.mxu0 %v898
        %v900 = vand.u32 %v190, 4294901760
        %v901 = vsub.f32 %v190, %v900
        %v902 = vand.u32 %v901, 4294901760
        %903 = vmatprep.subr.mxu0 %v902
        %v904 = vand.u32 %v189, 4294901760
        %v905 = vsub.f32 %v189, %v904
        %v906 = vand.u32 %v905, 4294901760
        %907 = vmatpush1.msra.mxu0 %v906
        %v908 = vand.u32 %v198, 4294901760
        %v909 = vsub.f32 %v198, %v908
        %v910 = vand.u32 %v909, 4294901760
        %911 = vmatprep.subr.mxu0 %v910
        %v912 = vand.u32 %v197, 4294901760
        %v913 = vsub.f32 %v197, %v912
        %v914 = vand.u32 %v913, 4294901760
        %915 = vmatpush1.msra.mxu0 %v914
        %v916 = vand.u32 %v206, 4294901760
        %v917 = vsub.f32 %v206, %v916
        %v918 = vand.u32 %v917, 4294901760
        %919 = vmatprep.subr.mxu0 %v918
        %v920 = vand.u32 %v205, 4294901760
        %v921 = vsub.f32 %v205, %v920
        %v922 = vand.u32 %v921, 4294901760
        %923 = vmatpush1.msra.mxu0 %v922
        %v924 = vand.u32 %v214, 4294901760
        %v925 = vsub.f32 %v214, %v924
        %v926 = vand.u32 %v925, 4294901760
        %927 = vmatprep.subr.mxu0 %v926
        %v928 = vand.u32 %v213, 4294901760
        %v929 = vsub.f32 %v213, %v928
        %v930 = vand.u32 %v929, 4294901760
        %931 = vmatpush1.msra.mxu0 %v930
        %v932 = vand.u32 %v222, 4294901760
        %v933 = vsub.f32 %v222, %v932
        %v934 = vand.u32 %v933, 4294901760
        %935 = vmatprep.subr.mxu0 %v934
        %v936 = vand.u32 %v221, 4294901760
        %v937 = vsub.f32 %v221, %v936
        %v938 = vand.u32 %v937, 4294901760
        %939 = vmatpush1.msra.mxu0 %v938
        %v940 = vand.u32 %v230, 4294901760
        %v941 = vsub.f32 %v230, %v940
        %v942 = vand.u32 %v941, 4294901760
        %943 = vmatprep.subr.mxu0 %v942
        %v944 = vand.u32 %v229, 4294901760
        %v945 = vsub.f32 %v229, %v944
        %v946 = vand.u32 %v945, 4294901760
        %947 = vmatpush1.msra.mxu0 %v946
        %v948 = vand.u32 %v238, 4294901760
        %v949 = vsub.f32 %v238, %v948
        %v950 = vand.u32 %v949, 4294901760
        %951 = vmatprep.subr.mxu0 %v950
        %v952 = vand.u32 %v237, 4294901760
        %v953 = vsub.f32 %v237, %v952
        %v954 = vand.u32 %v953, 4294901760
        %955 = vmatpush1.msra.mxu0 %v954
        %v956 = vand.u32 %v246, 4294901760
        %v957 = vsub.f32 %v246, %v956
        %v958 = vand.u32 %v957, 4294901760
        %959 = vmatprep.subr.mxu0 %v958
        %v960 = vand.u32 %v245, 4294901760
        %v961 = vsub.f32 %v245, %v960
        %v962 = vand.u32 %v961, 4294901760
        %963 = vmatpush1.msra.mxu0 %v962
        %v964 = vand.u32 %v254, 4294901760
        %v965 = vsub.f32 %v254, %v964
        %v966 = vand.u32 %v965, 4294901760
        %967 = vmatprep.subr.mxu0 %v966
        %v968 = vand.u32 %v253, 4294901760
        %v969 = vsub.f32 %v253, %v968
        %v970 = vand.u32 %v969, 4294901760
        %971 = vmatpush1.msra.mxu0 %v970
        %v972 = vand.u32 %v262, 4294901760
        %v973 = vsub.f32 %v262, %v972
        %v974 = vand.u32 %v973, 4294901760
        %975 = vmatprep.subr.mxu0 %v974
        %v976 = vand.u32 %v261, 4294901760
        %v977 = vsub.f32 %v261, %v976
        %v978 = vand.u32 %v977, 4294901760
        %979 = vmatpush1.msra.mxu0 %v978
        %v980 = vand.u32 %v270, 4294901760
        %v981 = vsub.f32 %v270, %v980
        %v982 = vand.u32 %v981, 4294901760
        %983 = vmatprep.subr.mxu0 %v982
        %v984 = vand.u32 %v269, 4294901760
        %v985 = vsub.f32 %v269, %v984
        %v986 = vand.u32 %v985, 4294901760
        %987 = vmatpush1.msra.mxu0 %v986
        %v988 = vand.u32 %v278, 4294901760
        %v989 = vsub.f32 %v278, %v988
        %v990 = vand.u32 %v989, 4294901760
        %991 = vmatprep.subr.mxu0 %v990
        %v992 = vand.u32 %v277, 4294901760
        %v993 = vsub.f32 %v277, %v992
        %v994 = vand.u32 %v993, 4294901760
        %995 = vmatpush1.msra.mxu0 %v994
        %996 = vmatprep.subr.mxu0 0.0
        %997 = vmatpush1.msra.mxu0 0.0
        %998 = vmatprep.subr.mxu0 0.0
        %999 = vmatpush1.msra.mxu0 0.0
        %1000 = vmatprep.subr.mxu0 0.0
        %1001 = vmatpush1.msra.mxu0 0.0
        %1002 = vmatprep.subr.mxu0 0.0
        %1003 = vmatpush1.msra.mxu0 0.0
        %1004 = vmatprep.subr.mxu0 0.0
        %1005 = vmatpush1.msra.mxu0 0.0
        %1006 = vmatprep.subr.mxu0 0.0
        %1007 = vmatpush1.msra.mxu0 0.0
        %1008 = vmatprep.subr.mxu0 0.0
        %1009 = vmatpush1.msra.mxu0 0.0
        %1010 = vmatprep.subr.mxu0 0.0
        %1011 = vmatpush1.msra.mxu0 0.0
        %1012 = vmatprep.subr.mxu0 0.0
        %1013 = vmatpush1.msra.mxu0 0.0
        %1014 = vmatprep.subr.mxu0 0.0
        %1015 = vmatpush1.msra.mxu0 0.0
        %1016 = vmatprep.subr.mxu0 0.0
        %1017 = vmatpush1.msra.mxu0 0.0
        %1018 = vmatprep.subr.mxu0 0.0
        %1019 = vmatpush1.msra.mxu0 0.0
        %1020 = vmatprep.subr.mxu0 0.0
        %1021 = vmatpush1.msra.mxu0 0.0
        %1022 = vmatprep.subr.mxu0 0.0
        %1023 = vmatpush1.msra.mxu0 0.0
        %1024 = vmatprep.subr.mxu0 0.0
        %1025 = vmatpush1.msra.mxu0 0.0
        %1026 = vmatprep.subr.mxu0 0.0
        %1027 = vmatpush1.msra.mxu0 0.0
        %1028 = vmatprep.mubr.f32.mxu0 0.0
        %v1029 = vand.u32 %v156, 4294901760
        %1030 = vmatmul.mubr.f32.gmra.mrb[0].mxu0 %v1029
        %v1031 = vpop.f32.mrb[0].mxu0
        %v1032 = vadd.f32 %v864, %v1031
        %v1033 = vpop.f32.mrb[0].mxu0
        %v1034 = vadd.f32 %v866, %v1033
        %1035 = vdwg.mxu0
        %v1036 = vand.u32 %v158, 4294901760
        %1037 = vmatprep.subr.mxu0 %v1036
        %v1038 = vand.u32 %v157, 4294901760
        %1039 = vmatpush1.msra.mxu0 %v1038
        %v1040 = vand.u32 %v166, 4294901760
        %1041 = vmatprep.subr.mxu0 %v1040
        %v1042 = vand.u32 %v165, 4294901760
        %1043 = vmatpush1.msra.mxu0 %v1042
        %v1044 = vand.u32 %v174, 4294901760
        %1045 = vmatprep.subr.mxu0 %v1044
        %v1046 = vand.u32 %v173, 4294901760
        %1047 = vmatpush1.msra.mxu0 %v1046
        %v1048 = vand.u32 %v182, 4294901760
        %1049 = vmatprep.subr.mxu0 %v1048
        %v1050 = vand.u32 %v181, 4294901760
        %1051 = vmatpush1.msra.mxu0 %v1050
        %v1052 = vand.u32 %v190, 4294901760
        %1053 = vmatprep.subr.mxu0 %v1052
        %v1054 = vand.u32 %v189, 4294901760
        %1055 = vmatpush1.msra.mxu0 %v1054
        %v1056 = vand.u32 %v198, 4294901760
        %1057 = vmatprep.subr.mxu0 %v1056
        %v1058 = vand.u32 %v197, 4294901760
        %1059 = vmatpush1.msra.mxu0 %v1058
        %v1060 = vand.u32 %v206, 4294901760
        %1061 = vmatprep.subr.mxu0 %v1060
        %v1062 = vand.u32 %v205, 4294901760
        %1063 = vmatpush1.msra.mxu0 %v1062
        %v1064 = vand.u32 %v214, 4294901760
        %1065 = vmatprep.subr.mxu0 %v1064
        %v1066 = vand.u32 %v213, 4294901760
        %1067 = vmatpush1.msra.mxu0 %v1066
        %v1068 = vand.u32 %v222, 4294901760
        %1069 = vmatprep.subr.mxu0 %v1068
        %v1070 = vand.u32 %v221, 4294901760
        %1071 = vmatpush1.msra.mxu0 %v1070
        %v1072 = vand.u32 %v230, 4294901760
        %1073 = vmatprep.subr.mxu0 %v1072
        %v1074 = vand.u32 %v229, 4294901760
        %1075 = vmatpush1.msra.mxu0 %v1074
        %v1076 = vand.u32 %v238, 4294901760
        %1077 = vmatprep.subr.mxu0 %v1076
        %v1078 = vand.u32 %v237, 4294901760
        %1079 = vmatpush1.msra.mxu0 %v1078
        %v1080 = vand.u32 %v246, 4294901760
        %1081 = vmatprep.subr.mxu0 %v1080
        %v1082 = vand.u32 %v245, 4294901760
        %1083 = vmatpush1.msra.mxu0 %v1082
        %v1084 = vand.u32 %v254, 4294901760
        %1085 = vmatprep.subr.mxu0 %v1084
        %v1086 = vand.u32 %v253, 4294901760
        %1087 = vmatpush1.msra.mxu0 %v1086
        %v1088 = vand.u32 %v262, 4294901760
        %1089 = vmatprep.subr.mxu0 %v1088
        %v1090 = vand.u32 %v261, 4294901760
        %1091 = vmatpush1.msra.mxu0 %v1090
        %v1092 = vand.u32 %v270, 4294901760
        %1093 = vmatprep.subr.mxu0 %v1092
        %v1094 = vand.u32 %v269, 4294901760
        %1095 = vmatpush1.msra.mxu0 %v1094
        %v1096 = vand.u32 %v278, 4294901760
        %1097 = vmatprep.subr.mxu0 %v1096
        %v1098 = vand.u32 %v277, 4294901760
        %1099 = vmatpush1.msra.mxu0 %v1098
        %1100 = vmatprep.subr.mxu0 0.0
        %1101 = vmatpush1.msra.mxu0 0.0
        %1102 = vmatprep.subr.mxu0 0.0
        %1103 = vmatpush1.msra.mxu0 0.0
        %1104 = vmatprep.subr.mxu0 0.0
        %1105 = vmatpush1.msra.mxu0 0.0
        %1106 = vmatprep.subr.mxu0 0.0
        %1107 = vmatpush1.msra.mxu0 0.0
        %1108 = vmatprep.subr.mxu0 0.0
        %1109 = vmatpush1.msra.mxu0 0.0
        %1110 = vmatprep.subr.mxu0 0.0
        %1111 = vmatpush1.msra.mxu0 0.0
        %1112 = vmatprep.subr.mxu0 0.0
        %1113 = vmatpush1.msra.mxu0 0.0
        %1114 = vmatprep.subr.mxu0 0.0
        %1115 = vmatpush1.msra.mxu0 0.0
        %1116 = vmatprep.subr.mxu0 0.0
        %1117 = vmatpush1.msra.mxu0 0.0
        %1118 = vmatprep.subr.mxu0 0.0
        %1119 = vmatpush1.msra.mxu0 0.0
        %1120 = vmatprep.subr.mxu0 0.0
        %1121 = vmatpush1.msra.mxu0 0.0
        %1122 = vmatprep.subr.mxu0 0.0
        %1123 = vmatpush1.msra.mxu0 0.0
        %1124 = vmatprep.subr.mxu0 0.0
        %1125 = vmatpush1.msra.mxu0 0.0
        %1126 = vmatprep.subr.mxu0 0.0
        %1127 = vmatpush1.msra.mxu0 0.0
        %1128 = vmatprep.subr.mxu0 0.0
        %1129 = vmatpush1.msra.mxu0 0.0
        %1130 = vmatprep.subr.mxu0 0.0
        %1131 = vmatpush1.msra.mxu0 0.0
        %1132 = vmatprep.mubr.f32.mxu0 0.0
        %v1133 = vand.u32 %v156, 4294901760
        %1134 = vmatmul.mubr.f32.gmra.mrb[0].mxu0 %v1133
        %v1135 = vpop.f32.mrb[0].mxu0
        %v1136 = vadd.f32 %v1032, %v1135
        %v1137 = vpop.f32.mrb[0].mxu0
        %v1138 = vadd.f32 %v1034, %v1137
        %1139 = vdwg.mxu0
        %v1140 = vand.u32 %v160, 4294901760
        %1141 = vmatprep.subr.mxu0 %v1140
        %v1142 = vand.u32 %v159, 4294901760
        %1143 = vmatpush1.msra.mxu0 %v1142
        %v1144 = vand.u32 %v168, 4294901760
        %1145 = vmatprep.subr.mxu0 %v1144
        %v1146 = vand.u32 %v167, 4294901760
        %1147 = vmatpush1.msra.mxu0 %v1146
        %v1148 = vand.u32 %v176, 4294901760
        %1149 = vmatprep.subr.mxu0 %v1148
        %v1150 = vand.u32 %v175, 4294901760
        %1151 = vmatpush1.msra.mxu0 %v1150
        %v1152 = vand.u32 %v184, 4294901760
        %1153 = vmatprep.subr.mxu0 %v1152
        %v1154 = vand.u32 %v183, 4294901760
        %1155 = vmatpush1.msra.mxu0 %v1154
        %v1156 = vand.u32 %v192, 4294901760
        %1157 = vmatprep.subr.mxu0 %v1156
        %v1158 = vand.u32 %v191, 4294901760
        %1159 = vmatpush1.msra.mxu0 %v1158
        %v1160 = vand.u32 %v200, 4294901760
        %1161 = vmatprep.subr.mxu0 %v1160
        %v1162 = vand.u32 %v199, 4294901760
        %1163 = vmatpush1.msra.mxu0 %v1162
        %v1164 = vand.u32 %v208, 4294901760
        %1165 = vmatprep.subr.mxu0 %v1164
        %v1166 = vand.u32 %v207, 4294901760
        %1167 = vmatpush1.msra.mxu0 %v1166
        %v1168 = vand.u32 %v216, 4294901760
        %1169 = vmatprep.subr.mxu0 %v1168
        %v1170 = vand.u32 %v215, 4294901760
        %1171 = vmatpush1.msra.mxu0 %v1170
        %v1172 = vand.u32 %v224, 4294901760
        %1173 = vmatprep.subr.mxu0 %v1172
        %v1174 = vand.u32 %v223, 4294901760
        %1175 = vmatpush1.msra.mxu0 %v1174
        %v1176 = vand.u32 %v232, 4294901760
        %1177 = vmatprep.subr.mxu0 %v1176
        %v1178 = vand.u32 %v231, 4294901760
        %1179 = vmatpush1.msra.mxu0 %v1178
        %v1180 = vand.u32 %v240, 4294901760
        %1181 = vmatprep.subr.mxu0 %v1180
        %v1182 = vand.u32 %v239, 4294901760
        %1183 = vmatpush1.msra.mxu0 %v1182
        %v1184 = vand.u32 %v248, 4294901760
        %1185 = vmatprep.subr.mxu0 %v1184
        %v1186 = vand.u32 %v247, 4294901760
        %1187 = vmatpush1.msra.mxu0 %v1186
        %v1188 = vand.u32 %v256, 4294901760
        %1189 = vmatprep.subr.mxu0 %v1188
        %v1190 = vand.u32 %v255, 4294901760
        %1191 = vmatpush1.msra.mxu0 %v1190
        %v1192 = vand.u32 %v264, 4294901760
        %1193 = vmatprep.subr.mxu0 %v1192
        %v1194 = vand.u32 %v263, 4294901760
        %1195 = vmatpush1.msra.mxu0 %v1194
        %v1196 = vand.u32 %v272, 4294901760
        %1197 = vmatprep.subr.mxu0 %v1196
        %v1198 = vand.u32 %v271, 4294901760
        %1199 = vmatpush1.msra.mxu0 %v1198
        %v1200 = vand.u32 %v280, 4294901760
        %1201 = vmatprep.subr.mxu0 %v1200
        %v1202 = vand.u32 %v279, 4294901760
        %1203 = vmatpush1.msra.mxu0 %v1202
        %1204 = vmatprep.subr.mxu0 0.0
        %1205 = vmatpush1.msra.mxu0 0.0
        %1206 = vmatprep.subr.mxu0 0.0
        %1207 = vmatpush1.msra.mxu0 0.0
        %1208 = vmatprep.subr.mxu0 0.0
        %1209 = vmatpush1.msra.mxu0 0.0
        %1210 = vmatprep.subr.mxu0 0.0
        %1211 = vmatpush1.msra.mxu0 0.0
        %1212 = vmatprep.subr.mxu0 0.0
        %1213 = vmatpush1.msra.mxu0 0.0
        %1214 = vmatprep.subr.mxu0 0.0
        %1215 = vmatpush1.msra.mxu0 0.0
        %1216 = vmatprep.subr.mxu0 0.0
        %1217 = vmatpush1.msra.mxu0 0.0
        %1218 = vmatprep.subr.mxu0 0.0
        %1219 = vmatpush1.msra.mxu0 0.0
        %1220 = vmatprep.subr.mxu0 0.0
        %1221 = vmatpush1.msra.mxu0 0.0
        %1222 = vmatprep.subr.mxu0 0.0
        %1223 = vmatpush1.msra.mxu0 0.0
        %1224 = vmatprep.subr.mxu0 0.0
        %1225 = vmatpush1.msra.mxu0 0.0
        %1226 = vmatprep.subr.mxu0 0.0
        %1227 = vmatpush1.msra.mxu0 0.0
        %1228 = vmatprep.subr.mxu0 0.0
        %1229 = vmatpush1.msra.mxu0 0.0
        %1230 = vmatprep.subr.mxu0 0.0
        %1231 = vmatpush1.msra.mxu0 0.0
        %1232 = vmatprep.subr.mxu0 0.0
        %1233 = vmatpush1.msra.mxu0 0.0
        %1234 = vmatprep.subr.mxu0 0.0
        %1235 = vmatpush1.msra.mxu0 0.0
        %1236 = vmatprep.mubr.f32.mxu0 0.0
        %v1237 = vand.u32 %v156, 4294901760
        %v1238 = vsub.f32 %v156, %v1237
        %v1239 = vand.u32 %v1238, 4294901760
        %v1240 = vsub.f32 %v1238, %v1239
        %v1241 = vand.u32 %v1240, 4294901760
        %1242 = vmatmul.mubr.f32.gmra.mrb[0].mxu0 %v1241
        %v1243 = vpop.f32.mrb[0].mxu0
        %v1244 = vadd.f32 0.0, %v1243
        %v1245 = vpop.f32.mrb[0].mxu0
        %v1246 = vadd.f32 0.0, %v1245
        %1247 = vdwg.mxu0
        %v1248 = vand.u32 %v160, 4294901760
        %v1249 = vsub.f32 %v160, %v1248
        %v1250 = vand.u32 %v1249, 4294901760
        %v1251 = vsub.f32 %v1249, %v1250
        %v1252 = vand.u32 %v1251, 4294901760
        %1253 = vmatprep.subr.mxu0 %v1252
        %v1254 = vand.u32 %v159, 4294901760
        %v1255 = vsub.f32 %v159, %v1254
        %v1256 = vand.u32 %v1255, 4294901760
        %v1257 = vsub.f32 %v1255, %v1256
        %v1258 = vand.u32 %v1257, 4294901760
        %1259 = vmatpush1.msra.mxu0 %v1258
        %v1260 = vand.u32 %v168, 4294901760
        %v1261 = vsub.f32 %v168, %v1260
        %v1262 = vand.u32 %v1261, 4294901760
        %v1263 = vsub.f32 %v1261, %v1262
        %v1264 = vand.u32 %v1263, 4294901760
        %1265 = vmatprep.subr.mxu0 %v1264
        %v1266 = vand.u32 %v167, 4294901760
        %v1267 = vsub.f32 %v167, %v1266
        %v1268 = vand.u32 %v1267, 4294901760
        %v1269 = vsub.f32 %v1267, %v1268
        %v1270 = vand.u32 %v1269, 4294901760
        %1271 = vmatpush1.msra.mxu0 %v1270
        %v1272 = vand.u32 %v176, 4294901760
        %v1273 = vsub.f32 %v176, %v1272
        %v1274 = vand.u32 %v1273, 4294901760
        %v1275 = vsub.f32 %v1273, %v1274
        %v1276 = vand.u32 %v1275, 4294901760
        %1277 = vmatprep.subr.mxu0 %v1276
        %v1278 = vand.u32 %v175, 4294901760
        %v1279 = vsub.f32 %v175, %v1278
        %v1280 = vand.u32 %v1279, 4294901760
        %v1281 = vsub.f32 %v1279, %v1280
        %v1282 = vand.u32 %v1281, 4294901760
        %1283 = vmatpush1.msra.mxu0 %v1282
        %v1284 = vand.u32 %v184, 4294901760
        %v1285 = vsub.f32 %v184, %v1284
        %v1286 = vand.u32 %v1285, 4294901760
        %v1287 = vsub.f32 %v1285, %v1286
        %v1288 = vand.u32 %v1287, 4294901760
        %1289 = vmatprep.subr.mxu0 %v1288
        %v1290 = vand.u32 %v183, 4294901760
        %v1291 = vsub.f32 %v183, %v1290
        %v1292 = vand.u32 %v1291, 4294901760
        %v1293 = vsub.f32 %v1291, %v1292
        %v1294 = vand.u32 %v1293, 4294901760
        %1295 = vmatpush1.msra.mxu0 %v1294
        %v1296 = vand.u32 %v192, 4294901760
        %v1297 = vsub.f32 %v192, %v1296
        %v1298 = vand.u32 %v1297, 4294901760
        %v1299 = vsub.f32 %v1297, %v1298
        %v1300 = vand.u32 %v1299, 4294901760
        %1301 = vmatprep.subr.mxu0 %v1300
        %v1302 = vand.u32 %v191, 4294901760
        %v1303 = vsub.f32 %v191, %v1302
        %v1304 = vand.u32 %v1303, 4294901760
        %v1305 = vsub.f32 %v1303, %v1304
        %v1306 = vand.u32 %v1305, 4294901760
        %1307 = vmatpush1.msra.mxu0 %v1306
        %v1308 = vand.u32 %v200, 4294901760
        %v1309 = vsub.f32 %v200, %v1308
        %v1310 = vand.u32 %v1309, 4294901760
        %v1311 = vsub.f32 %v1309, %v1310
        %v1312 = vand.u32 %v1311, 4294901760
        %1313 = vmatprep.subr.mxu0 %v1312
        %v1314 = vand.u32 %v199, 4294901760
        %v1315 = vsub.f32 %v199, %v1314
        %v1316 = vand.u32 %v1315, 4294901760
        %v1317 = vsub.f32 %v1315, %v1316
        %v1318 = vand.u32 %v1317, 4294901760
        %1319 = vmatpush1.msra.mxu0 %v1318
        %v1320 = vand.u32 %v208, 4294901760
        %v1321 = vsub.f32 %v208, %v1320
        %v1322 = vand.u32 %v1321, 4294901760
        %v1323 = vsub.f32 %v1321, %v1322
        %v1324 = vand.u32 %v1323, 4294901760
        %1325 = vmatprep.subr.mxu0 %v1324
        %v1326 = vand.u32 %v207, 4294901760
        %v1327 = vsub.f32 %v207, %v1326
        %v1328 = vand.u32 %v1327, 4294901760
        %v1329 = vsub.f32 %v1327, %v1328
        %v1330 = vand.u32 %v1329, 4294901760
        %1331 = vmatpush1.msra.mxu0 %v1330
        %v1332 = vand.u32 %v216, 4294901760
        %v1333 = vsub.f32 %v216, %v1332
        %v1334 = vand.u32 %v1333, 4294901760
        %v1335 = vsub.f32 %v1333, %v1334
        %v1336 = vand.u32 %v1335, 4294901760
        %1337 = vmatprep.subr.mxu0 %v1336
        %v1338 = vand.u32 %v215, 4294901760
        %v1339 = vsub.f32 %v215, %v1338
        %v1340 = vand.u32 %v1339, 4294901760
        %v1341 = vsub.f32 %v1339, %v1340
        %v1342 = vand.u32 %v1341, 4294901760
        %1343 = vmatpush1.msra.mxu0 %v1342
        %v1344 = vand.u32 %v224, 4294901760
        %v1345 = vsub.f32 %v224, %v1344
        %v1346 = vand.u32 %v1345, 4294901760
        %v1347 = vsub.f32 %v1345, %v1346
        %v1348 = vand.u32 %v1347, 4294901760
        %1349 = vmatprep.subr.mxu0 %v1348
        %v1350 = vand.u32 %v223, 4294901760
        %v1351 = vsub.f32 %v223, %v1350
        %v1352 = vand.u32 %v1351, 4294901760
        %v1353 = vsub.f32 %v1351, %v1352
        %v1354 = vand.u32 %v1353, 4294901760
        %1355 = vmatpush1.msra.mxu0 %v1354
        %v1356 = vand.u32 %v232, 4294901760
        %v1357 = vsub.f32 %v232, %v1356
        %v1358 = vand.u32 %v1357, 4294901760
        %v1359 = vsub.f32 %v1357, %v1358
        %v1360 = vand.u32 %v1359, 4294901760
        %1361 = vmatprep.subr.mxu0 %v1360
        %v1362 = vand.u32 %v231, 4294901760
        %v1363 = vsub.f32 %v231, %v1362
        %v1364 = vand.u32 %v1363, 4294901760
        %v1365 = vsub.f32 %v1363, %v1364
        %v1366 = vand.u32 %v1365, 4294901760
        %1367 = vmatpush1.msra.mxu0 %v1366
        %v1368 = vand.u32 %v240, 4294901760
        %v1369 = vsub.f32 %v240, %v1368
        %v1370 = vand.u32 %v1369, 4294901760
        %v1371 = vsub.f32 %v1369, %v1370
        %v1372 = vand.u32 %v1371, 4294901760
        %1373 = vmatprep.subr.mxu0 %v1372
        %v1374 = vand.u32 %v239, 4294901760
        %v1375 = vsub.f32 %v239, %v1374
        %v1376 = vand.u32 %v1375, 4294901760
        %v1377 = vsub.f32 %v1375, %v1376
        %v1378 = vand.u32 %v1377, 4294901760
        %1379 = vmatpush1.msra.mxu0 %v1378
        %v1380 = vand.u32 %v248, 4294901760
        %v1381 = vsub.f32 %v248, %v1380
        %v1382 = vand.u32 %v1381, 4294901760
        %v1383 = vsub.f32 %v1381, %v1382
        %v1384 = vand.u32 %v1383, 4294901760
        %1385 = vmatprep.subr.mxu0 %v1384
        %v1386 = vand.u32 %v247, 4294901760
        %v1387 = vsub.f32 %v247, %v1386
        %v1388 = vand.u32 %v1387, 4294901760
        %v1389 = vsub.f32 %v1387, %v1388
        %v1390 = vand.u32 %v1389, 4294901760
        %1391 = vmatpush1.msra.mxu0 %v1390
        %v1392 = vand.u32 %v256, 4294901760
        %v1393 = vsub.f32 %v256, %v1392
        %v1394 = vand.u32 %v1393, 4294901760
        %v1395 = vsub.f32 %v1393, %v1394
        %v1396 = vand.u32 %v1395, 4294901760
        %1397 = vmatprep.subr.mxu0 %v1396
        %v1398 = vand.u32 %v255, 4294901760
        %v1399 = vsub.f32 %v255, %v1398
        %v1400 = vand.u32 %v1399, 4294901760
        %v1401 = vsub.f32 %v1399, %v1400
        %v1402 = vand.u32 %v1401, 4294901760
        %1403 = vmatpush1.msra.mxu0 %v1402
        %v1404 = vand.u32 %v264, 4294901760
        %v1405 = vsub.f32 %v264, %v1404
        %v1406 = vand.u32 %v1405, 4294901760
        %v1407 = vsub.f32 %v1405, %v1406
        %v1408 = vand.u32 %v1407, 4294901760
        %1409 = vmatprep.subr.mxu0 %v1408
        %v1410 = vand.u32 %v263, 4294901760
        %v1411 = vsub.f32 %v263, %v1410
        %v1412 = vand.u32 %v1411, 4294901760
        %v1413 = vsub.f32 %v1411, %v1412
        %v1414 = vand.u32 %v1413, 4294901760
        %1415 = vmatpush1.msra.mxu0 %v1414
        %v1416 = vand.u32 %v272, 4294901760
        %v1417 = vsub.f32 %v272, %v1416
        %v1418 = vand.u32 %v1417, 4294901760
        %v1419 = vsub.f32 %v1417, %v1418
        %v1420 = vand.u32 %v1419, 4294901760
        %1421 = vmatprep.subr.mxu0 %v1420
        %v1422 = vand.u32 %v271, 4294901760
        %v1423 = vsub.f32 %v271, %v1422
        %v1424 = vand.u32 %v1423, 4294901760
        %v1425 = vsub.f32 %v1423, %v1424
        %v1426 = vand.u32 %v1425, 4294901760
        %1427 = vmatpush1.msra.mxu0 %v1426
        %v1428 = vand.u32 %v280, 4294901760
        %v1429 = vsub.f32 %v280, %v1428
        %v1430 = vand.u32 %v1429, 4294901760
        %v1431 = vsub.f32 %v1429, %v1430
        %v1432 = vand.u32 %v1431, 4294901760
        %1433 = vmatprep.subr.mxu0 %v1432
        %v1434 = vand.u32 %v279, 4294901760
        %v1435 = vsub.f32 %v279, %v1434
        %v1436 = vand.u32 %v1435, 4294901760
        %v1437 = vsub.f32 %v1435, %v1436
        %v1438 = vand.u32 %v1437, 4294901760
        %1439 = vmatpush1.msra.mxu0 %v1438
        %1440 = vmatprep.subr.mxu0 0.0
        %1441 = vmatpush1.msra.mxu0 0.0
        %1442 = vmatprep.subr.mxu0 0.0
        %1443 = vmatpush1.msra.mxu0 0.0
        %1444 = vmatprep.subr.mxu0 0.0
        %1445 = vmatpush1.msra.mxu0 0.0
        %1446 = vmatprep.subr.mxu0 0.0
        %1447 = vmatpush1.msra.mxu0 0.0
        %1448 = vmatprep.subr.mxu0 0.0
        %1449 = vmatpush1.msra.mxu0 0.0
        %1450 = vmatprep.subr.mxu0 0.0
        %1451 = vmatpush1.msra.mxu0 0.0
        %1452 = vmatprep.subr.mxu0 0.0
        %1453 = vmatpush1.msra.mxu0 0.0
        %1454 = vmatprep.subr.mxu0 0.0
        %1455 = vmatpush1.msra.mxu0 0.0
        %1456 = vmatprep.subr.mxu0 0.0
        %1457 = vmatpush1.msra.mxu0 0.0
        %1458 = vmatprep.subr.mxu0 0.0
        %1459 = vmatpush1.msra.mxu0 0.0
        %1460 = vmatprep.subr.mxu0 0.0
        %1461 = vmatpush1.msra.mxu0 0.0
        %1462 = vmatprep.subr.mxu0 0.0
        %1463 = vmatpush1.msra.mxu0 0.0
        %1464 = vmatprep.subr.mxu0 0.0
        %1465 = vmatpush1.msra.mxu0 0.0
        %1466 = vmatprep.subr.mxu0 0.0
        %1467 = vmatpush1.msra.mxu0 0.0
        %1468 = vmatprep.subr.mxu0 0.0
        %1469 = vmatpush1.msra.mxu0 0.0
        %1470 = vmatprep.subr.mxu0 0.0
        %1471 = vmatpush1.msra.mxu0 0.0
        %1472 = vmatprep.mubr.f32.mxu0 0.0
        %v1473 = vand.u32 %v156, 4294901760
        %1474 = vmatmul.mubr.f32.gmra.mrb[0].mxu0 %v1473
        %v1475 = vpop.f32.mrb[0].mxu0
        %v1476 = vadd.f32 %v1244, %v1475
        %v1477 = vpop.f32.mrb[0].mxu0
        %v1478 = vadd.f32 %v1246, %v1477
        %1479 = vdwg.mxu0
        %v1480 = vand.u32 %v160, 4294901760
        %v1481 = vsub.f32 %v160, %v1480
        %1482 = vmatprep.subr.mxu0 %v1481
        %v1483 = vand.u32 %v159, 4294901760
        %v1484 = vsub.f32 %v159, %v1483
        %1485 = vmatpush1.msra.mxu0 %v1484
        %v1486 = vand.u32 %v168, 4294901760
        %v1487 = vsub.f32 %v168, %v1486
        %1488 = vmatprep.subr.mxu0 %v1487
        %v1489 = vand.u32 %v167, 4294901760
        %v1490 = vsub.f32 %v167, %v1489
        %1491 = vmatpush1.msra.mxu0 %v1490
        %v1492 = vand.u32 %v176, 4294901760
        %v1493 = vsub.f32 %v176, %v1492
        %1494 = vmatprep.subr.mxu0 %v1493
        %v1495 = vand.u32 %v175, 4294901760
        %v1496 = vsub.f32 %v175, %v1495
        %1497 = vmatpush1.msra.mxu0 %v1496
        %v1498 = vand.u32 %v184, 4294901760
        %v1499 = vsub.f32 %v184, %v1498
        %1500 = vmatprep.subr.mxu0 %v1499
        %v1501 = vand.u32 %v183, 4294901760
        %v1502 = vsub.f32 %v183, %v1501
        %1503 = vmatpush1.msra.mxu0 %v1502
        %v1504 = vand.u32 %v192, 4294901760
        %v1505 = vsub.f32 %v192, %v1504
        %1506 = vmatprep.subr.mxu0 %v1505
        %v1507 = vand.u32 %v191, 4294901760
        %v1508 = vsub.f32 %v191, %v1507
        %1509 = vmatpush1.msra.mxu0 %v1508
        %v1510 = vand.u32 %v200, 4294901760
        %v1511 = vsub.f32 %v200, %v1510
        %1512 = vmatprep.subr.mxu0 %v1511
        %v1513 = vand.u32 %v199, 4294901760
        %v1514 = vsub.f32 %v199, %v1513
        %1515 = vmatpush1.msra.mxu0 %v1514
        %v1516 = vand.u32 %v208, 4294901760
        %v1517 = vsub.f32 %v208, %v1516
        %1518 = vmatprep.subr.mxu0 %v1517
        %v1519 = vand.u32 %v207, 4294901760
        %v1520 = vsub.f32 %v207, %v1519
        %1521 = vmatpush1.msra.mxu0 %v1520
        %v1522 = vand.u32 %v216, 4294901760
        %v1523 = vsub.f32 %v216, %v1522
        %1524 = vmatprep.subr.mxu0 %v1523
        %v1525 = vand.u32 %v215, 4294901760
        %v1526 = vsub.f32 %v215, %v1525
        %1527 = vmatpush1.msra.mxu0 %v1526
        %v1528 = vand.u32 %v224, 4294901760
        %v1529 = vsub.f32 %v224, %v1528
        %1530 = vmatprep.subr.mxu0 %v1529
        %v1531 = vand.u32 %v223, 4294901760
        %v1532 = vsub.f32 %v223, %v1531
        %1533 = vmatpush1.msra.mxu0 %v1532
        %v1534 = vand.u32 %v232, 4294901760
        %v1535 = vsub.f32 %v232, %v1534
        %1536 = vmatprep.subr.mxu0 %v1535
        %v1537 = vand.u32 %v231, 4294901760
        %v1538 = vsub.f32 %v231, %v1537
        %1539 = vmatpush1.msra.mxu0 %v1538
        %v1540 = vand.u32 %v240, 4294901760
        %v1541 = vsub.f32 %v240, %v1540
        %1542 = vmatprep.subr.mxu0 %v1541
        %v1543 = vand.u32 %v239, 4294901760
        %v1544 = vsub.f32 %v239, %v1543
        %1545 = vmatpush1.msra.mxu0 %v1544
        %v1546 = vand.u32 %v248, 4294901760
        %v1547 = vsub.f32 %v248, %v1546
        %1548 = vmatprep.subr.mxu0 %v1547
        %v1549 = vand.u32 %v247, 4294901760
        %v1550 = vsub.f32 %v247, %v1549
        %1551 = vmatpush1.msra.mxu0 %v1550
        %v1552 = vand.u32 %v256, 4294901760
        %v1553 = vsub.f32 %v256, %v1552
        %1554 = vmatprep.subr.mxu0 %v1553
        %v1555 = vand.u32 %v255, 4294901760
        %v1556 = vsub.f32 %v255, %v1555
        %1557 = vmatpush1.msra.mxu0 %v1556
        %v1558 = vand.u32 %v264, 4294901760
        %v1559 = vsub.f32 %v264, %v1558
        %1560 = vmatprep.subr.mxu0 %v1559
        %v1561 = vand.u32 %v263, 4294901760
        %v1562 = vsub.f32 %v263, %v1561
        %1563 = vmatpush1.msra.mxu0 %v1562
        %v1564 = vand.u32 %v272, 4294901760
        %v1565 = vsub.f32 %v272, %v1564
        %1566 = vmatprep.subr.mxu0 %v1565
        %v1567 = vand.u32 %v271, 4294901760
        %v1568 = vsub.f32 %v271, %v1567
        %1569 = vmatpush1.msra.mxu0 %v1568
        %v1570 = vand.u32 %v280, 4294901760
        %v1571 = vsub.f32 %v280, %v1570
        %1572 = vmatprep.subr.mxu0 %v1571
        %v1573 = vand.u32 %v279, 4294901760
        %v1574 = vsub.f32 %v279, %v1573
        %1575 = vmatpush1.msra.mxu0 %v1574
        %1576 = vmatprep.subr.mxu0 0.0
        %1577 = vmatpush1.msra.mxu0 0.0
        %1578 = vmatprep.subr.mxu0 0.0
        %1579 = vmatpush1.msra.mxu0 0.0
        %1580 = vmatprep.subr.mxu0 0.0
        %1581 = vmatpush1.msra.mxu0 0.0
        %1582 = vmatprep.subr.mxu0 0.0
        %1583 = vmatpush1.msra.mxu0 0.0
        %1584 = vmatprep.subr.mxu0 0.0
        %1585 = vmatpush1.msra.mxu0 0.0
        %1586 = vmatprep.subr.mxu0 0.0
        %1587 = vmatpush1.msra.mxu0 0.0
        %1588 = vmatprep.subr.mxu0 0.0
        %1589 = vmatpush1.msra.mxu0 0.0
        %1590 = vmatprep.subr.mxu0 0.0
        %1591 = vmatpush1.msra.mxu0 0.0
        %1592 = vmatprep.subr.mxu0 0.0
        %1593 = vmatpush1.msra.mxu0 0.0
        %1594 = vmatprep.subr.mxu0 0.0
        %1595 = vmatpush1.msra.mxu0 0.0
        %1596 = vmatprep.subr.mxu0 0.0
        %1597 = vmatpush1.msra.mxu0 0.0
        %1598 = vmatprep.subr.mxu0 0.0
        %1599 = vmatpush1.msra.mxu0 0.0
        %1600 = vmatprep.subr.mxu0 0.0
        %1601 = vmatpush1.msra.mxu0 0.0
        %1602 = vmatprep.subr.mxu0 0.0
        %1603 = vmatpush1.msra.mxu0 0.0
        %1604 = vmatprep.subr.mxu0 0.0
        %1605 = vmatpush1.msra.mxu0 0.0
        %1606 = vmatprep.subr.mxu0 0.0
        %1607 = vmatpush1.msra.mxu0 0.0
        %1608 = vmatprep.mubr.f32.mxu0 0.0
        %v1609 = vand.u32 %v156, 4294901760
        %v1610 = vsub.f32 %v156, %v1609
        %1611 = vmatmul.mubr.f32.gmra.mrb[0].mxu0 %v1610
        %v1612 = vpop.f32.mrb[0].mxu0
        %v1613 = vadd.f32 %v1476, %v1612
        %v1614 = vpop.f32.mrb[0].mxu0
        %v1615 = vadd.f32 %v1478, %v1614
        %1616 = vdwg.mxu0
        %v1617 = vand.u32 %v160, 4294901760
        %1618 = vmatprep.subr.mxu0 %v1617
        %v1619 = vand.u32 %v159, 4294901760
        %1620 = vmatpush1.msra.mxu0 %v1619
        %v1621 = vand.u32 %v168, 4294901760
        %1622 = vmatprep.subr.mxu0 %v1621
        %v1623 = vand.u32 %v167, 4294901760
        %1624 = vmatpush1.msra.mxu0 %v1623
        %v1625 = vand.u32 %v176, 4294901760
        %1626 = vmatprep.subr.mxu0 %v1625
        %v1627 = vand.u32 %v175, 4294901760
        %1628 = vmatpush1.msra.mxu0 %v1627
        %v1629 = vand.u32 %v184, 4294901760
        %1630 = vmatprep.subr.mxu0 %v1629
        %v1631 = vand.u32 %v183, 4294901760
        %1632 = vmatpush1.msra.mxu0 %v1631
        %v1633 = vand.u32 %v192, 4294901760
        %1634 = vmatprep.subr.mxu0 %v1633
        %v1635 = vand.u32 %v191, 4294901760
        %1636 = vmatpush1.msra.mxu0 %v1635
        %v1637 = vand.u32 %v200, 4294901760
        %1638 = vmatprep.subr.mxu0 %v1637
        %v1639 = vand.u32 %v199, 4294901760
        %1640 = vmatpush1.msra.mxu0 %v1639
        %v1641 = vand.u32 %v208, 4294901760
        %1642 = vmatprep.subr.mxu0 %v1641
        %v1643 = vand.u32 %v207, 4294901760
        %1644 = vmatpush1.msra.mxu0 %v1643
        %v1645 = vand.u32 %v216, 4294901760
        %1646 = vmatprep.subr.mxu0 %v1645
        %v1647 = vand.u32 %v215, 4294901760
        %1648 = vmatpush1.msra.mxu0 %v1647
        %v1649 = vand.u32 %v224, 4294901760
        %1650 = vmatprep.subr.mxu0 %v1649
        %v1651 = vand.u32 %v223, 4294901760
        %1652 = vmatpush1.msra.mxu0 %v1651
        %v1653 = vand.u32 %v232, 4294901760
        %1654 = vmatprep.subr.mxu0 %v1653
        %v1655 = vand.u32 %v231, 4294901760
        %1656 = vmatpush1.msra.mxu0 %v1655
        %v1657 = vand.u32 %v240, 4294901760
        %1658 = vmatprep.subr.mxu0 %v1657
        %v1659 = vand.u32 %v239, 4294901760
        %1660 = vmatpush1.msra.mxu0 %v1659
        %v1661 = vand.u32 %v248, 4294901760
        %1662 = vmatprep.subr.mxu0 %v1661
        %v1663 = vand.u32 %v247, 4294901760
        %1664 = vmatpush1.msra.mxu0 %v1663
        %v1665 = vand.u32 %v256, 4294901760
        %1666 = vmatprep.subr.mxu0 %v1665
        %v1667 = vand.u32 %v255, 4294901760
        %1668 = vmatpush1.msra.mxu0 %v1667
        %v1669 = vand.u32 %v264, 4294901760
        %1670 = vmatprep.subr.mxu0 %v1669
        %v1671 = vand.u32 %v263, 4294901760
        %1672 = vmatpush1.msra.mxu0 %v1671
        %v1673 = vand.u32 %v272, 4294901760
        %1674 = vmatprep.subr.mxu0 %v1673
        %v1675 = vand.u32 %v271, 4294901760
        %1676 = vmatpush1.msra.mxu0 %v1675
        %v1677 = vand.u32 %v280, 4294901760
        %1678 = vmatprep.subr.mxu0 %v1677
        %v1679 = vand.u32 %v279, 4294901760
        %1680 = vmatpush1.msra.mxu0 %v1679
        %1681 = vmatprep.subr.mxu0 0.0
        %1682 = vmatpush1.msra.mxu0 0.0
        %1683 = vmatprep.subr.mxu0 0.0
        %1684 = vmatpush1.msra.mxu0 0.0
        %1685 = vmatprep.subr.mxu0 0.0
        %1686 = vmatpush1.msra.mxu0 0.0
        %1687 = vmatprep.subr.mxu0 0.0
        %1688 = vmatpush1.msra.mxu0 0.0
        %1689 = vmatprep.subr.mxu0 0.0
        %1690 = vmatpush1.msra.mxu0 0.0
        %1691 = vmatprep.subr.mxu0 0.0
        %1692 = vmatpush1.msra.mxu0 0.0
        %1693 = vmatprep.subr.mxu0 0.0
        %1694 = vmatpush1.msra.mxu0 0.0
        %1695 = vmatprep.subr.mxu0 0.0
        %1696 = vmatpush1.msra.mxu0 0.0
        %1697 = vmatprep.subr.mxu0 0.0
        %1698 = vmatpush1.msra.mxu0 0.0
        %1699 = vmatprep.subr.mxu0 0.0
        %1700 = vmatpush1.msra.mxu0 0.0
        %1701 = vmatprep.subr.mxu0 0.0
        %1702 = vmatpush1.msra.mxu0 0.0
        %1703 = vmatprep.subr.mxu0 0.0
        %1704 = vmatpush1.msra.mxu0 0.0
        %1705 = vmatprep.subr.mxu0 0.0
        %1706 = vmatpush1.msra.mxu0 0.0
        %1707 = vmatprep.subr.mxu0 0.0
        %1708 = vmatpush1.msra.mxu0 0.0
        %1709 = vmatprep.subr.mxu0 0.0
        %1710 = vmatpush1.msra.mxu0 0.0
        %1711 = vmatprep.subr.mxu0 0.0
        %1712 = vmatpush1.msra.mxu0 0.0
        %1713 = vmatprep.mubr.f32.mxu0 0.0
        %v1714 = vand.u32 %v156, 4294901760
        %v1715 = vsub.f32 %v156, %v1714
        %v1716 = vand.u32 %v1715, 4294901760
        %1717 = vmatmul.mubr.f32.gmra.mrb[0].mxu0 %v1716
        %v1718 = vpop.f32.mrb[0].mxu0
        %v1719 = vadd.f32 %v1613, %v1718
        %v1720 = vpop.f32.mrb[0].mxu0
        %v1721 = vadd.f32 %v1615, %v1720
        %1722 = vdwg.mxu0
        %v1723 = vand.u32 %v160, 4294901760
        %v1724 = vsub.f32 %v160, %v1723
        %v1725 = vand.u32 %v1724, 4294901760
        %1726 = vmatprep.subr.mxu0 %v1725
        %v1727 = vand.u32 %v159, 4294901760
        %v1728 = vsub.f32 %v159, %v1727
        %v1729 = vand.u32 %v1728, 4294901760
        %1730 = vmatpush1.msra.mxu0 %v1729
        %v1731 = vand.u32 %v168, 4294901760
        %v1732 = vsub.f32 %v168, %v1731
        %v1733 = vand.u32 %v1732, 4294901760
        %1734 = vmatprep.subr.mxu0 %v1733
        %v1735 = vand.u32 %v167, 4294901760
        %v1736 = vsub.f32 %v167, %v1735
        %v1737 = vand.u32 %v1736, 4294901760
        %1738 = vmatpush1.msra.mxu0 %v1737
        %v1739 = vand.u32 %v176, 4294901760
        %v1740 = vsub.f32 %v176, %v1739
        %v1741 = vand.u32 %v1740, 4294901760
        %1742 = vmatprep.subr.mxu0 %v1741
        %v1743 = vand.u32 %v175, 4294901760
        %v1744 = vsub.f32 %v175, %v1743
        %v1745 = vand.u32 %v1744, 4294901760
        %1746 = vmatpush1.msra.mxu0 %v1745
        %v1747 = vand.u32 %v184, 4294901760
        %v1748 = vsub.f32 %v184, %v1747
        %v1749 = vand.u32 %v1748, 4294901760
        %1750 = vmatprep.subr.mxu0 %v1749
        %v1751 = vand.u32 %v183, 4294901760
        %v1752 = vsub.f32 %v183, %v1751
        %v1753 = vand.u32 %v1752, 4294901760
        %1754 = vmatpush1.msra.mxu0 %v1753
        %v1755 = vand.u32 %v192, 4294901760
        %v1756 = vsub.f32 %v192, %v1755
        %v1757 = vand.u32 %v1756, 4294901760
        %1758 = vmatprep.subr.mxu0 %v1757
        %v1759 = vand.u32 %v191, 4294901760
        %v1760 = vsub.f32 %v191, %v1759
        %v1761 = vand.u32 %v1760, 4294901760
        %1762 = vmatpush1.msra.mxu0 %v1761
        %v1763 = vand.u32 %v200, 4294901760
        %v1764 = vsub.f32 %v200, %v1763
        %v1765 = vand.u32 %v1764, 4294901760
        %1766 = vmatprep.subr.mxu0 %v1765
        %v1767 = vand.u32 %v199, 4294901760
        %v1768 = vsub.f32 %v199, %v1767
        %v1769 = vand.u32 %v1768, 4294901760
        %1770 = vmatpush1.msra.mxu0 %v1769
        %v1771 = vand.u32 %v208, 4294901760
        %v1772 = vsub.f32 %v208, %v1771
        %v1773 = vand.u32 %v1772, 4294901760
        %1774 = vmatprep.subr.mxu0 %v1773
        %v1775 = vand.u32 %v207, 4294901760
        %v1776 = vsub.f32 %v207, %v1775
        %v1777 = vand.u32 %v1776, 4294901760
        %1778 = vmatpush1.msra.mxu0 %v1777
        %v1779 = vand.u32 %v216, 4294901760
        %v1780 = vsub.f32 %v216, %v1779
        %v1781 = vand.u32 %v1780, 4294901760
        %1782 = vmatprep.subr.mxu0 %v1781
        %v1783 = vand.u32 %v215, 4294901760
        %v1784 = vsub.f32 %v215, %v1783
        %v1785 = vand.u32 %v1784, 4294901760
        %1786 = vmatpush1.msra.mxu0 %v1785
        %v1787 = vand.u32 %v224, 4294901760
        %v1788 = vsub.f32 %v224, %v1787
        %v1789 = vand.u32 %v1788, 4294901760
        %1790 = vmatprep.subr.mxu0 %v1789
        %v1791 = vand.u32 %v223, 4294901760
        %v1792 = vsub.f32 %v223, %v1791
        %v1793 = vand.u32 %v1792, 4294901760
        %1794 = vmatpush1.msra.mxu0 %v1793
        %v1795 = vand.u32 %v232, 4294901760
        %v1796 = vsub.f32 %v232, %v1795
        %v1797 = vand.u32 %v1796, 4294901760
        %1798 = vmatprep.subr.mxu0 %v1797
        %v1799 = vand.u32 %v231, 4294901760
        %v1800 = vsub.f32 %v231, %v1799
        %v1801 = vand.u32 %v1800, 4294901760
        %1802 = vmatpush1.msra.mxu0 %v1801
        %v1803 = vand.u32 %v240, 4294901760
        %v1804 = vsub.f32 %v240, %v1803
        %v1805 = vand.u32 %v1804, 4294901760
        %1806 = vmatprep.subr.mxu0 %v1805
        %v1807 = vand.u32 %v239, 4294901760
        %v1808 = vsub.f32 %v239, %v1807
        %v1809 = vand.u32 %v1808, 4294901760
        %1810 = vmatpush1.msra.mxu0 %v1809
        %v1811 = vand.u32 %v248, 4294901760
        %v1812 = vsub.f32 %v248, %v1811
        %v1813 = vand.u32 %v1812, 4294901760
        %1814 = vmatprep.subr.mxu0 %v1813
        %v1815 = vand.u32 %v247, 4294901760
        %v1816 = vsub.f32 %v247, %v1815
        %v1817 = vand.u32 %v1816, 4294901760
        %1818 = vmatpush1.msra.mxu0 %v1817
        %v1819 = vand.u32 %v256, 4294901760
        %v1820 = vsub.f32 %v256, %v1819
        %v1821 = vand.u32 %v1820, 4294901760
        %1822 = vmatprep.subr.mxu0 %v1821
        %v1823 = vand.u32 %v255, 4294901760
        %v1824 = vsub.f32 %v255, %v1823
        %v1825 = vand.u32 %v1824, 4294901760
        %1826 = vmatpush1.msra.mxu0 %v1825
        %v1827 = vand.u32 %v264, 4294901760
        %v1828 = vsub.f32 %v264, %v1827
        %v1829 = vand.u32 %v1828, 4294901760
        %1830 = vmatprep.subr.mxu0 %v1829
        %v1831 = vand.u32 %v263, 4294901760
        %v1832 = vsub.f32 %v263, %v1831
        %v1833 = vand.u32 %v1832, 4294901760
        %1834 = vmatpush1.msra.mxu0 %v1833
        %v1835 = vand.u32 %v272, 4294901760
        %v1836 = vsub.f32 %v272, %v1835
        %v1837 = vand.u32 %v1836, 4294901760
        %1838 = vmatprep.subr.mxu0 %v1837
        %v1839 = vand.u32 %v271, 4294901760
        %v1840 = vsub.f32 %v271, %v1839
        %v1841 = vand.u32 %v1840, 4294901760
        %1842 = vmatpush1.msra.mxu0 %v1841
        %v1843 = vand.u32 %v280, 4294901760
        %v1844 = vsub.f32 %v280, %v1843
        %v1845 = vand.u32 %v1844, 4294901760
        %1846 = vmatprep.subr.mxu0 %v1845
        %v1847 = vand.u32 %v279, 4294901760
        %v1848 = vsub.f32 %v279, %v1847
        %v1849 = vand.u32 %v1848, 4294901760
        %1850 = vmatpush1.msra.mxu0 %v1849
        %1851 = vmatprep.subr.mxu0 0.0
        %1852 = vmatpush1.msra.mxu0 0.0
        %1853 = vmatprep.subr.mxu0 0.0
        %1854 = vmatpush1.msra.mxu0 0.0
        %1855 = vmatprep.subr.mxu0 0.0
        %1856 = vmatpush1.msra.mxu0 0.0
        %1857 = vmatprep.subr.mxu0 0.0
        %1858 = vmatpush1.msra.mxu0 0.0
        %1859 = vmatprep.subr.mxu0 0.0
        %1860 = vmatpush1.msra.mxu0 0.0
        %1861 = vmatprep.subr.mxu0 0.0
        %1862 = vmatpush1.msra.mxu0 0.0
        %1863 = vmatprep.subr.mxu0 0.0
        %1864 = vmatpush1.msra.mxu0 0.0
        %1865 = vmatprep.subr.mxu0 0.0
        %1866 = vmatpush1.msra.mxu0 0.0
        %1867 = vmatprep.subr.mxu0 0.0
        %1868 = vmatpush1.msra.mxu0 0.0
        %1869 = vmatprep.subr.mxu0 0.0
        %1870 = vmatpush1.msra.mxu0 0.0
        %1871 = vmatprep.subr.mxu0 0.0
        %1872 = vmatpush1.msra.mxu0 0.0
        %1873 = vmatprep.subr.mxu0 0.0
        %1874 = vmatpush1.msra.mxu0 0.0
        %1875 = vmatprep.subr.mxu0 0.0
        %1876 = vmatpush1.msra.mxu0 0.0
        %1877 = vmatprep.subr.mxu0 0.0
        %1878 = vmatpush1.msra.mxu0 0.0
        %1879 = vmatprep.subr.mxu0 0.0
        %1880 = vmatpush1.msra.mxu0 0.0
        %1881 = vmatprep.subr.mxu0 0.0
        %1882 = vmatpush1.msra.mxu0 0.0
        %1883 = vmatprep.mubr.f32.mxu0 0.0
        %v1884 = vand.u32 %v156, 4294901760
        %1885 = vmatmul.mubr.f32.gmra.mrb[0].mxu0 %v1884
        %v1886 = vpop.f32.mrb[0].mxu0
        %v1887 = vadd.f32 %v1719, %v1886
        %v1888 = vpop.f32.mrb[0].mxu0
        %v1889 = vadd.f32 %v1721, %v1888
        %1890 = vdwg.mxu0
        %v1891 = vand.u32 %v160, 4294901760
        %1892 = vmatprep.subr.mxu0 %v1891
        %v1893 = vand.u32 %v159, 4294901760
        %1894 = vmatpush1.msra.mxu0 %v1893
        %v1895 = vand.u32 %v168, 4294901760
        %1896 = vmatprep.subr.mxu0 %v1895
        %v1897 = vand.u32 %v167, 4294901760
        %1898 = vmatpush1.msra.mxu0 %v1897
        %v1899 = vand.u32 %v176, 4294901760
        %1900 = vmatprep.subr.mxu0 %v1899
        %v1901 = vand.u32 %v175, 4294901760
        %1902 = vmatpush1.msra.mxu0 %v1901
        %v1903 = vand.u32 %v184, 4294901760
        %1904 = vmatprep.subr.mxu0 %v1903
        %v1905 = vand.u32 %v183, 4294901760
        %1906 = vmatpush1.msra.mxu0 %v1905
        %v1907 = vand.u32 %v192, 4294901760
        %1908 = vmatprep.subr.mxu0 %v1907
        %v1909 = vand.u32 %v191, 4294901760
        %1910 = vmatpush1.msra.mxu0 %v1909
        %v1911 = vand.u32 %v200, 4294901760
        %1912 = vmatprep.subr.mxu0 %v1911
        %v1913 = vand.u32 %v199, 4294901760
        %1914 = vmatpush1.msra.mxu0 %v1913
        %v1915 = vand.u32 %v208, 4294901760
        %1916 = vmatprep.subr.mxu0 %v1915
        %v1917 = vand.u32 %v207, 4294901760
        %1918 = vmatpush1.msra.mxu0 %v1917
        %v1919 = vand.u32 %v216, 4294901760
        %1920 = vmatprep.subr.mxu0 %v1919
        %v1921 = vand.u32 %v215, 4294901760
        %1922 = vmatpush1.msra.mxu0 %v1921
        %v1923 = vand.u32 %v224, 4294901760
        %1924 = vmatprep.subr.mxu0 %v1923
        %v1925 = vand.u32 %v223, 4294901760
        %1926 = vmatpush1.msra.mxu0 %v1925
        %v1927 = vand.u32 %v232, 4294901760
        %1928 = vmatprep.subr.mxu0 %v1927
        %v1929 = vand.u32 %v231, 4294901760
        %1930 = vmatpush1.msra.mxu0 %v1929
        %v1931 = vand.u32 %v240, 4294901760
        %1932 = vmatprep.subr.mxu0 %v1931
        %v1933 = vand.u32 %v239, 4294901760
        %1934 = vmatpush1.msra.mxu0 %v1933
        %v1935 = vand.u32 %v248, 4294901760
        %1936 = vmatprep.subr.mxu0 %v1935
        %v1937 = vand.u32 %v247, 4294901760
        %1938 = vmatpush1.msra.mxu0 %v1937
        %v1939 = vand.u32 %v256, 4294901760
        %1940 = vmatprep.subr.mxu0 %v1939
        %v1941 = vand.u32 %v255, 4294901760
        %1942 = vmatpush1.msra.mxu0 %v1941
        %v1943 = vand.u32 %v264, 4294901760
        %1944 = vmatprep.subr.mxu0 %v1943
        %v1945 = vand.u32 %v263, 4294901760
        %1946 = vmatpush1.msra.mxu0 %v1945
        %v1947 = vand.u32 %v272, 4294901760
        %1948 = vmatprep.subr.mxu0 %v1947
        %v1949 = vand.u32 %v271, 4294901760
        %1950 = vmatpush1.msra.mxu0 %v1949
        %v1951 = vand.u32 %v280, 4294901760
        %1952 = vmatprep.subr.mxu0 %v1951
        %v1953 = vand.u32 %v279, 4294901760
        %1954 = vmatpush1.msra.mxu0 %v1953
        %1955 = vmatprep.subr.mxu0 0.0
        %1956 = vmatpush1.msra.mxu0 0.0
        %1957 = vmatprep.subr.mxu0 0.0
        %1958 = vmatpush1.msra.mxu0 0.0
        %1959 = vmatprep.subr.mxu0 0.0
        %1960 = vmatpush1.msra.mxu0 0.0
        %1961 = vmatprep.subr.mxu0 0.0
        %1962 = vmatpush1.msra.mxu0 0.0
        %1963 = vmatprep.subr.mxu0 0.0
        %1964 = vmatpush1.msra.mxu0 0.0
        %1965 = vmatprep.subr.mxu0 0.0
        %1966 = vmatpush1.msra.mxu0 0.0
        %1967 = vmatprep.subr.mxu0 0.0
        %1968 = vmatpush1.msra.mxu0 0.0
        %1969 = vmatprep.subr.mxu0 0.0
        %1970 = vmatpush1.msra.mxu0 0.0
        %1971 = vmatprep.subr.mxu0 0.0
        %1972 = vmatpush1.msra.mxu0 0.0
        %1973 = vmatprep.subr.mxu0 0.0
        %1974 = vmatpush1.msra.mxu0 0.0
        %1975 = vmatprep.subr.mxu0 0.0
        %1976 = vmatpush1.msra.mxu0 0.0
        %1977 = vmatprep.subr.mxu0 0.0
        %1978 = vmatpush1.msra.mxu0 0.0
        %1979 = vmatprep.subr.mxu0 0.0
        %1980 = vmatpush1.msra.mxu0 0.0
        %1981 = vmatprep.subr.mxu0 0.0
        %1982 = vmatpush1.msra.mxu0 0.0
        %1983 = vmatprep.subr.mxu0 0.0
        %1984 = vmatpush1.msra.mxu0 0.0
        %1985 = vmatprep.subr.mxu0 0.0
        %1986 = vmatpush1.msra.mxu0 0.0
        %1987 = vmatprep.mubr.f32.mxu0 0.0
        %v1988 = vand.u32 %v156, 4294901760
        %1989 = vmatmul.mubr.f32.gmra.mrb[0].mxu0 %v1988
        %v1990 = vpop.f32.mrb[0].mxu0
        %v1991 = vadd.f32 %v1887, %v1990
        %v1992 = vpop.f32.mrb[0].mxu0
        %v1993 = vadd.f32 %v1889, %v1992
        %1994 = vdwg.mxu0
        %v1995 = vand.u32 %v162, 4294901760
        %1996 = vmatprep.subr.mxu0 %v1995
        %v1997 = vand.u32 %v161, 4294901760
        %1998 = vmatpush1.msra.mxu0 %v1997
        %v1999 = vand.u32 %v170, 4294901760
        %2000 = vmatprep.subr.mxu0 %v1999
        %v2001 = vand.u32 %v169, 4294901760
        %2002 = vmatpush1.msra.mxu0 %v2001
        %v2003 = vand.u32 %v178, 4294901760
        %2004 = vmatprep.subr.mxu0 %v2003
        %v2005 = vand.u32 %v177, 4294901760
        %2006 = vmatpush1.msra.mxu0 %v2005
        %v2007 = vand.u32 %v186, 4294901760
        %2008 = vmatprep.subr.mxu0 %v2007
        %v2009 = vand.u32 %v185, 4294901760
        %2010 = vmatpush1.msra.mxu0 %v2009
        %v2011 = vand.u32 %v194, 4294901760
        %2012 = vmatprep.subr.mxu0 %v2011
        %v2013 = vand.u32 %v193, 4294901760
        %2014 = vmatpush1.msra.mxu0 %v2013
        %v2015 = vand.u32 %v202, 4294901760
        %2016 = vmatprep.subr.mxu0 %v2015
        %v2017 = vand.u32 %v201, 4294901760
        %2018 = vmatpush1.msra.mxu0 %v2017
        %v2019 = vand.u32 %v210, 4294901760
        %2020 = vmatprep.subr.mxu0 %v2019
        %v2021 = vand.u32 %v209, 4294901760
        %2022 = vmatpush1.msra.mxu0 %v2021
        %v2023 = vand.u32 %v218, 4294901760
        %2024 = vmatprep.subr.mxu0 %v2023
        %v2025 = vand.u32 %v217, 4294901760
        %2026 = vmatpush1.msra.mxu0 %v2025
        %v2027 = vand.u32 %v226, 4294901760
        %2028 = vmatprep.subr.mxu0 %v2027
        %v2029 = vand.u32 %v225, 4294901760
        %2030 = vmatpush1.msra.mxu0 %v2029
        %v2031 = vand.u32 %v234, 4294901760
        %2032 = vmatprep.subr.mxu0 %v2031
        %v2033 = vand.u32 %v233, 4294901760
        %2034 = vmatpush1.msra.mxu0 %v2033
        %v2035 = vand.u32 %v242, 4294901760
        %2036 = vmatprep.subr.mxu0 %v2035
        %v2037 = vand.u32 %v241, 4294901760
        %2038 = vmatpush1.msra.mxu0 %v2037
        %v2039 = vand.u32 %v250, 4294901760
        %2040 = vmatprep.subr.mxu0 %v2039
        %v2041 = vand.u32 %v249, 4294901760
        %2042 = vmatpush1.msra.mxu0 %v2041
        %v2043 = vand.u32 %v258, 4294901760
        %2044 = vmatprep.subr.mxu0 %v2043
        %v2045 = vand.u32 %v257, 4294901760
        %2046 = vmatpush1.msra.mxu0 %v2045
        %v2047 = vand.u32 %v266, 4294901760
        %2048 = vmatprep.subr.mxu0 %v2047
        %v2049 = vand.u32 %v265, 4294901760
        %2050 = vmatpush1.msra.mxu0 %v2049
        %v2051 = vand.u32 %v274, 4294901760
        %2052 = vmatprep.subr.mxu0 %v2051
        %v2053 = vand.u32 %v273, 4294901760
        %2054 = vmatpush1.msra.mxu0 %v2053
        %v2055 = vand.u32 %v282, 4294901760
        %2056 = vmatprep.subr.mxu0 %v2055
        %v2057 = vand.u32 %v281, 4294901760
        %2058 = vmatpush1.msra.mxu0 %v2057
        %2059 = vmatprep.subr.mxu0 0.0
        %2060 = vmatpush1.msra.mxu0 0.0
        %2061 = vmatprep.subr.mxu0 0.0
        %2062 = vmatpush1.msra.mxu0 0.0
        %2063 = vmatprep.subr.mxu0 0.0
        %2064 = vmatpush1.msra.mxu0 0.0
        %2065 = vmatprep.subr.mxu0 0.0
        %2066 = vmatpush1.msra.mxu0 0.0
        %2067 = vmatprep.subr.mxu0 0.0
        %2068 = vmatpush1.msra.mxu0 0.0
        %2069 = vmatprep.subr.mxu0 0.0
        %2070 = vmatpush1.msra.mxu0 0.0
        %2071 = vmatprep.subr.mxu0 0.0
        %2072 = vmatpush1.msra.mxu0 0.0
        %2073 = vmatprep.subr.mxu0 0.0
        %2074 = vmatpush1.msra.mxu0 0.0
        %2075 = vmatprep.subr.mxu0 0.0
        %2076 = vmatpush1.msra.mxu0 0.0
        %2077 = vmatprep.subr.mxu0 0.0
        %2078 = vmatpush1.msra.mxu0 0.0
        %2079 = vmatprep.subr.mxu0 0.0
        %2080 = vmatpush1.msra.mxu0 0.0
        %2081 = vmatprep.subr.mxu0 0.0
        %2082 = vmatpush1.msra.mxu0 0.0
        %2083 = vmatprep.subr.mxu0 0.0
        %2084 = vmatpush1.msra.mxu0 0.0
        %2085 = vmatprep.subr.mxu0 0.0
        %2086 = vmatpush1.msra.mxu0 0.0
        %2087 = vmatprep.subr.mxu0 0.0
        %2088 = vmatpush1.msra.mxu0 0.0
        %2089 = vmatprep.subr.mxu0 0.0
        %2090 = vmatpush1.msra.mxu0 0.0
        %2091 = vmatprep.mubr.f32.mxu0 0.0
        %v2092 = vand.u32 %v156, 4294901760
        %v2093 = vsub.f32 %v156, %v2092
        %v2094 = vand.u32 %v2093, 4294901760
        %v2095 = vsub.f32 %v2093, %v2094
        %v2096 = vand.u32 %v2095, 4294901760
        %2097 = vmatmul.mubr.f32.gmra.mrb[0].mxu0 %v2096
        %v2098 = vpop.f32.mrb[0].mxu0
        %v2099 = vadd.f32 0.0, %v2098
        %v2100 = vpop.f32.mrb[0].mxu0
        %v2101 = vadd.f32 0.0, %v2100
        %2102 = vdwg.mxu0
        %v2103 = vand.u32 %v162, 4294901760
        %v2104 = vsub.f32 %v162, %v2103
        %v2105 = vand.u32 %v2104, 4294901760
        %v2106 = vsub.f32 %v2104, %v2105
        %v2107 = vand.u32 %v2106, 4294901760
        %2108 = vmatprep.subr.mxu0 %v2107
        %v2109 = vand.u32 %v161, 4294901760
        %v2110 = vsub.f32 %v161, %v2109
        %v2111 = vand.u32 %v2110, 4294901760
        %v2112 = vsub.f32 %v2110, %v2111
        %v2113 = vand.u32 %v2112, 4294901760
        %2114 = vmatpush1.msra.mxu0 %v2113
        %v2115 = vand.u32 %v170, 4294901760
        %v2116 = vsub.f32 %v170, %v2115
        %v2117 = vand.u32 %v2116, 4294901760
        %v2118 = vsub.f32 %v2116, %v2117
        %v2119 = vand.u32 %v2118, 4294901760
        %2120 = vmatprep.subr.mxu0 %v2119
        %v2121 = vand.u32 %v169, 4294901760
        %v2122 = vsub.f32 %v169, %v2121
        %v2123 = vand.u32 %v2122, 4294901760
        %v2124 = vsub.f32 %v2122, %v2123
        %v2125 = vand.u32 %v2124, 4294901760
        %2126 = vmatpush1.msra.mxu0 %v2125
        %v2127 = vand.u32 %v178, 4294901760
        %v2128 = vsub.f32 %v178, %v2127
        %v2129 = vand.u32 %v2128, 4294901760
        %v2130 = vsub.f32 %v2128, %v2129
        %v2131 = vand.u32 %v2130, 4294901760
        %2132 = vmatprep.subr.mxu0 %v2131
        %v2133 = vand.u32 %v177, 4294901760
        %v2134 = vsub.f32 %v177, %v2133
        %v2135 = vand.u32 %v2134, 4294901760
        %v2136 = vsub.f32 %v2134, %v2135
        %v2137 = vand.u32 %v2136, 4294901760
        %2138 = vmatpush1.msra.mxu0 %v2137
        %v2139 = vand.u32 %v186, 4294901760
        %v2140 = vsub.f32 %v186, %v2139
        %v2141 = vand.u32 %v2140, 4294901760
        %v2142 = vsub.f32 %v2140, %v2141
        %v2143 = vand.u32 %v2142, 4294901760
        %2144 = vmatprep.subr.mxu0 %v2143
        %v2145 = vand.u32 %v185, 4294901760
        %v2146 = vsub.f32 %v185, %v2145
        %v2147 = vand.u32 %v2146, 4294901760
        %v2148 = vsub.f32 %v2146, %v2147
        %v2149 = vand.u32 %v2148, 4294901760
        %2150 = vmatpush1.msra.mxu0 %v2149
        %v2151 = vand.u32 %v194, 4294901760
        %v2152 = vsub.f32 %v194, %v2151
        %v2153 = vand.u32 %v2152, 4294901760
        %v2154 = vsub.f32 %v2152, %v2153
        %v2155 = vand.u32 %v2154, 4294901760
        %2156 = vmatprep.subr.mxu0 %v2155
        %v2157 = vand.u32 %v193, 4294901760
        %v2158 = vsub.f32 %v193, %v2157
        %v2159 = vand.u32 %v2158, 4294901760
        %v2160 = vsub.f32 %v2158, %v2159
        %v2161 = vand.u32 %v2160, 4294901760
        %2162 = vmatpush1.msra.mxu0 %v2161
        %v2163 = vand.u32 %v202, 4294901760
        %v2164 = vsub.f32 %v202, %v2163
        %v2165 = vand.u32 %v2164, 4294901760
        %v2166 = vsub.f32 %v2164, %v2165
        %v2167 = vand.u32 %v2166, 4294901760
        %2168 = vmatprep.subr.mxu0 %v2167
        %v2169 = vand.u32 %v201, 4294901760
        %v2170 = vsub.f32 %v201, %v2169
        %v2171 = vand.u32 %v2170, 4294901760
        %v2172 = vsub.f32 %v2170, %v2171
        %v2173 = vand.u32 %v2172, 4294901760
        %2174 = vmatpush1.msra.mxu0 %v2173
        %v2175 = vand.u32 %v210, 4294901760
        %v2176 = vsub.f32 %v210, %v2175
        %v2177 = vand.u32 %v2176, 4294901760
        %v2178 = vsub.f32 %v2176, %v2177
        %v2179 = vand.u32 %v2178, 4294901760
        %2180 = vmatprep.subr.mxu0 %v2179
        %v2181 = vand.u32 %v209, 4294901760
        %v2182 = vsub.f32 %v209, %v2181
        %v2183 = vand.u32 %v2182, 4294901760
        %v2184 = vsub.f32 %v2182, %v2183
        %v2185 = vand.u32 %v2184, 4294901760
        %2186 = vmatpush1.msra.mxu0 %v2185
        %v2187 = vand.u32 %v218, 4294901760
        %v2188 = vsub.f32 %v218, %v2187
        %v2189 = vand.u32 %v2188, 4294901760
        %v2190 = vsub.f32 %v2188, %v2189
        %v2191 = vand.u32 %v2190, 4294901760
        %2192 = vmatprep.subr.mxu0 %v2191
        %v2193 = vand.u32 %v217, 4294901760
        %v2194 = vsub.f32 %v217, %v2193
        %v2195 = vand.u32 %v2194, 4294901760
        %v2196 = vsub.f32 %v2194, %v2195
        %v2197 = vand.u32 %v2196, 4294901760
        %2198 = vmatpush1.msra.mxu0 %v2197
        %v2199 = vand.u32 %v226, 4294901760
        %v2200 = vsub.f32 %v226, %v2199
        %v2201 = vand.u32 %v2200, 4294901760
        %v2202 = vsub.f32 %v2200, %v2201
        %v2203 = vand.u32 %v2202, 4294901760
        %2204 = vmatprep.subr.mxu0 %v2203
        %v2205 = vand.u32 %v225, 4294901760
        %v2206 = vsub.f32 %v225, %v2205
        %v2207 = vand.u32 %v2206, 4294901760
        %v2208 = vsub.f32 %v2206, %v2207
        %v2209 = vand.u32 %v2208, 4294901760
        %2210 = vmatpush1.msra.mxu0 %v2209
        %v2211 = vand.u32 %v234, 4294901760
        %v2212 = vsub.f32 %v234, %v2211
        %v2213 = vand.u32 %v2212, 4294901760
        %v2214 = vsub.f32 %v2212, %v2213
        %v2215 = vand.u32 %v2214, 4294901760
        %2216 = vmatprep.subr.mxu0 %v2215
        %v2217 = vand.u32 %v233, 4294901760
        %v2218 = vsub.f32 %v233, %v2217
        %v2219 = vand.u32 %v2218, 4294901760
        %v2220 = vsub.f32 %v2218, %v2219
        %v2221 = vand.u32 %v2220, 4294901760
        %2222 = vmatpush1.msra.mxu0 %v2221
        %v2223 = vand.u32 %v242, 4294901760
        %v2224 = vsub.f32 %v242, %v2223
        %v2225 = vand.u32 %v2224, 4294901760
        %v2226 = vsub.f32 %v2224, %v2225
        %v2227 = vand.u32 %v2226, 4294901760
        %2228 = vmatprep.subr.mxu0 %v2227
        %v2229 = vand.u32 %v241, 4294901760
        %v2230 = vsub.f32 %v241, %v2229
        %v2231 = vand.u32 %v2230, 4294901760
        %v2232 = vsub.f32 %v2230, %v2231
        %v2233 = vand.u32 %v2232, 4294901760
        %2234 = vmatpush1.msra.mxu0 %v2233
        %v2235 = vand.u32 %v250, 4294901760
        %v2236 = vsub.f32 %v250, %v2235
        %v2237 = vand.u32 %v2236, 4294901760
        %v2238 = vsub.f32 %v2236, %v2237
        %v2239 = vand.u32 %v2238, 4294901760
        %2240 = vmatprep.subr.mxu0 %v2239
        %v2241 = vand.u32 %v249, 4294901760
        %v2242 = vsub.f32 %v249, %v2241
        %v2243 = vand.u32 %v2242, 4294901760
        %v2244 = vsub.f32 %v2242, %v2243
        %v2245 = vand.u32 %v2244, 4294901760
        %2246 = vmatpush1.msra.mxu0 %v2245
        %v2247 = vand.u32 %v258, 4294901760
        %v2248 = vsub.f32 %v258, %v2247
        %v2249 = vand.u32 %v2248, 4294901760
        %v2250 = vsub.f32 %v2248, %v2249
        %v2251 = vand.u32 %v2250, 4294901760
        %2252 = vmatprep.subr.mxu0 %v2251
        %v2253 = vand.u32 %v257, 4294901760
        %v2254 = vsub.f32 %v257, %v2253
        %v2255 = vand.u32 %v2254, 4294901760
        %v2256 = vsub.f32 %v2254, %v2255
        %v2257 = vand.u32 %v2256, 4294901760
        %2258 = vmatpush1.msra.mxu0 %v2257
        %v2259 = vand.u32 %v266, 4294901760
        %v2260 = vsub.f32 %v266, %v2259
        %v2261 = vand.u32 %v2260, 4294901760
        %v2262 = vsub.f32 %v2260, %v2261
        %v2263 = vand.u32 %v2262, 4294901760
        %2264 = vmatprep.subr.mxu0 %v2263
        %v2265 = vand.u32 %v265, 4294901760
        %v2266 = vsub.f32 %v265, %v2265
        %v2267 = vand.u32 %v2266, 4294901760
        %v2268 = vsub.f32 %v2266, %v2267
        %v2269 = vand.u32 %v2268, 4294901760
        %2270 = vmatpush1.msra.mxu0 %v2269
        %v2271 = vand.u32 %v274, 4294901760
        %v2272 = vsub.f32 %v274, %v2271
        %v2273 = vand.u32 %v2272, 4294901760
        %v2274 = vsub.f32 %v2272, %v2273
        %v2275 = vand.u32 %v2274, 4294901760
        %2276 = vmatprep.subr.mxu0 %v2275
        %v2277 = vand.u32 %v273, 4294901760
        %v2278 = vsub.f32 %v273, %v2277
        %v2279 = vand.u32 %v2278, 4294901760
        %v2280 = vsub.f32 %v2278, %v2279
        %v2281 = vand.u32 %v2280, 4294901760
        %2282 = vmatpush1.msra.mxu0 %v2281
        %v2283 = vand.u32 %v282, 4294901760
        %v2284 = vsub.f32 %v282, %v2283
        %v2285 = vand.u32 %v2284, 4294901760
        %v2286 = vsub.f32 %v2284, %v2285
        %v2287 = vand.u32 %v2286, 4294901760
        %2288 = vmatprep.subr.mxu0 %v2287
        %v2289 = vand.u32 %v281, 4294901760
        %v2290 = vsub.f32 %v281, %v2289
        %v2291 = vand.u32 %v2290, 4294901760
        %v2292 = vsub.f32 %v2290, %v2291
        %v2293 = vand.u32 %v2292, 4294901760
        %2294 = vmatpush1.msra.mxu0 %v2293
        %2295 = vmatprep.subr.mxu0 0.0
        %2296 = vmatpush1.msra.mxu0 0.0
        %2297 = vmatprep.subr.mxu0 0.0
        %2298 = vmatpush1.msra.mxu0 0.0
        %2299 = vmatprep.subr.mxu0 0.0
        %2300 = vmatpush1.msra.mxu0 0.0
        %2301 = vmatprep.subr.mxu0 0.0
        %2302 = vmatpush1.msra.mxu0 0.0
        %2303 = vmatprep.subr.mxu0 0.0
        %2304 = vmatpush1.msra.mxu0 0.0
        %2305 = vmatprep.subr.mxu0 0.0
        %2306 = vmatpush1.msra.mxu0 0.0
        %2307 = vmatprep.subr.mxu0 0.0
        %2308 = vmatpush1.msra.mxu0 0.0
        %2309 = vmatprep.subr.mxu0 0.0
        %2310 = vmatpush1.msra.mxu0 0.0
        %2311 = vmatprep.subr.mxu0 0.0
        %2312 = vmatpush1.msra.mxu0 0.0
        %2313 = vmatprep.subr.mxu0 0.0
        %2314 = vmatpush1.msra.mxu0 0.0
        %2315 = vmatprep.subr.mxu0 0.0
        %2316 = vmatpush1.msra.mxu0 0.0
        %2317 = vmatprep.subr.mxu0 0.0
        %2318 = vmatpush1.msra.mxu0 0.0
        %2319 = vmatprep.subr.mxu0 0.0
        %2320 = vmatpush1.msra.mxu0 0.0
        %2321 = vmatprep.subr.mxu0 0.0
        %2322 = vmatpush1.msra.mxu0 0.0
        %2323 = vmatprep.subr.mxu0 0.0
        %2324 = vmatpush1.msra.mxu0 0.0
        %2325 = vmatprep.subr.mxu0 0.0
        %2326 = vmatpush1.msra.mxu0 0.0
        %2327 = vmatprep.mubr.f32.mxu0 0.0
        %v2328 = vand.u32 %v156, 4294901760
        %2329 = vmatmul.mubr.f32.gmra.mrb[0].mxu0 %v2328
        %v2330 = vpop.f32.mrb[0].mxu0
        %v2331 = vadd.f32 %v2099, %v2330
        %v2332 = vpop.f32.mrb[0].mxu0
        %v2333 = vadd.f32 %v2101, %v2332
        %2334 = vdwg.mxu0
        %v2335 = vand.u32 %v162, 4294901760
        %v2336 = vsub.f32 %v162, %v2335
        %2337 = vmatprep.subr.mxu0 %v2336
        %v2338 = vand.u32 %v161, 4294901760
        %v2339 = vsub.f32 %v161, %v2338
        %2340 = vmatpush1.msra.mxu0 %v2339
        %v2341 = vand.u32 %v170, 4294901760
        %v2342 = vsub.f32 %v170, %v2341
        %2343 = vmatprep.subr.mxu0 %v2342
        %v2344 = vand.u32 %v169, 4294901760
        %v2345 = vsub.f32 %v169, %v2344
        %2346 = vmatpush1.msra.mxu0 %v2345
        %v2347 = vand.u32 %v178, 4294901760
        %v2348 = vsub.f32 %v178, %v2347
        %2349 = vmatprep.subr.mxu0 %v2348
        %v2350 = vand.u32 %v177, 4294901760
        %v2351 = vsub.f32 %v177, %v2350
        %2352 = vmatpush1.msra.mxu0 %v2351
        %v2353 = vand.u32 %v186, 4294901760
        %v2354 = vsub.f32 %v186, %v2353
        %2355 = vmatprep.subr.mxu0 %v2354
        %v2356 = vand.u32 %v185, 4294901760
        %v2357 = vsub.f32 %v185, %v2356
        %2358 = vmatpush1.msra.mxu0 %v2357
        %v2359 = vand.u32 %v194, 4294901760
        %v2360 = vsub.f32 %v194, %v2359
        %2361 = vmatprep.subr.mxu0 %v2360
        %v2362 = vand.u32 %v193, 4294901760
        %v2363 = vsub.f32 %v193, %v2362
        %2364 = vmatpush1.msra.mxu0 %v2363
        %v2365 = vand.u32 %v202, 4294901760
        %v2366 = vsub.f32 %v202, %v2365
        %2367 = vmatprep.subr.mxu0 %v2366
        %v2368 = vand.u32 %v201, 4294901760
        %v2369 = vsub.f32 %v201, %v2368
        %2370 = vmatpush1.msra.mxu0 %v2369
        %v2371 = vand.u32 %v210, 4294901760
        %v2372 = vsub.f32 %v210, %v2371
        %2373 = vmatprep.subr.mxu0 %v2372
        %v2374 = vand.u32 %v209, 4294901760
        %v2375 = vsub.f32 %v209, %v2374
        %2376 = vmatpush1.msra.mxu0 %v2375
        %v2377 = vand.u32 %v218, 4294901760
        %v2378 = vsub.f32 %v218, %v2377
        %2379 = vmatprep.subr.mxu0 %v2378
        %v2380 = vand.u32 %v217, 4294901760
        %v2381 = vsub.f32 %v217, %v2380
        %2382 = vmatpush1.msra.mxu0 %v2381
        %v2383 = vand.u32 %v226, 4294901760
        %v2384 = vsub.f32 %v226, %v2383
        %2385 = vmatprep.subr.mxu0 %v2384
        %v2386 = vand.u32 %v225, 4294901760
        %v2387 = vsub.f32 %v225, %v2386
        %2388 = vmatpush1.msra.mxu0 %v2387
        %v2389 = vand.u32 %v234, 4294901760
        %v2390 = vsub.f32 %v234, %v2389
        %2391 = vmatprep.subr.mxu0 %v2390
        %v2392 = vand.u32 %v233, 4294901760
        %v2393 = vsub.f32 %v233, %v2392
        %2394 = vmatpush1.msra.mxu0 %v2393
        %v2395 = vand.u32 %v242, 4294901760
        %v2396 = vsub.f32 %v242, %v2395
        %2397 = vmatprep.subr.mxu0 %v2396
        %v2398 = vand.u32 %v241, 4294901760
        %v2399 = vsub.f32 %v241, %v2398
        %2400 = vmatpush1.msra.mxu0 %v2399
        %v2401 = vand.u32 %v250, 4294901760
        %v2402 = vsub.f32 %v250, %v2401
        %2403 = vmatprep.subr.mxu0 %v2402
        %v2404 = vand.u32 %v249, 4294901760
        %v2405 = vsub.f32 %v249, %v2404
        %2406 = vmatpush1.msra.mxu0 %v2405
        %v2407 = vand.u32 %v258, 4294901760
        %v2408 = vsub.f32 %v258, %v2407
        %2409 = vmatprep.subr.mxu0 %v2408
        %v2410 = vand.u32 %v257, 4294901760
        %v2411 = vsub.f32 %v257, %v2410
        %2412 = vmatpush1.msra.mxu0 %v2411
        %v2413 = vand.u32 %v266, 4294901760
        %v2414 = vsub.f32 %v266, %v2413
        %2415 = vmatprep.subr.mxu0 %v2414
        %v2416 = vand.u32 %v265, 4294901760
        %v2417 = vsub.f32 %v265, %v2416
        %2418 = vmatpush1.msra.mxu0 %v2417
        %v2419 = vand.u32 %v274, 4294901760
        %v2420 = vsub.f32 %v274, %v2419
        %2421 = vmatprep.subr.mxu0 %v2420
        %v2422 = vand.u32 %v273, 4294901760
        %v2423 = vsub.f32 %v273, %v2422
        %2424 = vmatpush1.msra.mxu0 %v2423
        %v2425 = vand.u32 %v282, 4294901760
        %v2426 = vsub.f32 %v282, %v2425
        %2427 = vmatprep.subr.mxu0 %v2426
        %v2428 = vand.u32 %v281, 4294901760
        %v2429 = vsub.f32 %v281, %v2428
        %2430 = vmatpush1.msra.mxu0 %v2429
        %2431 = vmatprep.subr.mxu0 0.0
        %2432 = vmatpush1.msra.mxu0 0.0
        %2433 = vmatprep.subr.mxu0 0.0
        %2434 = vmatpush1.msra.mxu0 0.0
        %2435 = vmatprep.subr.mxu0 0.0
        %2436 = vmatpush1.msra.mxu0 0.0
        %2437 = vmatprep.subr.mxu0 0.0
        %2438 = vmatpush1.msra.mxu0 0.0
        %2439 = vmatprep.subr.mxu0 0.0
        %2440 = vmatpush1.msra.mxu0 0.0
        %2441 = vmatprep.subr.mxu0 0.0
        %2442 = vmatpush1.msra.mxu0 0.0
        %2443 = vmatprep.subr.mxu0 0.0
        %2444 = vmatpush1.msra.mxu0 0.0
        %2445 = vmatprep.subr.mxu0 0.0
        %2446 = vmatpush1.msra.mxu0 0.0
        %2447 = vmatprep.subr.mxu0 0.0
        %2448 = vmatpush1.msra.mxu0 0.0
        %2449 = vmatprep.subr.mxu0 0.0
        %2450 = vmatpush1.msra.mxu0 0.0
        %2451 = vmatprep.subr.mxu0 0.0
        %2452 = vmatpush1.msra.mxu0 0.0
        %2453 = vmatprep.subr.mxu0 0.0
        %2454 = vmatpush1.msra.mxu0 0.0
        %2455 = vmatprep.subr.mxu0 0.0
        %2456 = vmatpush1.msra.mxu0 0.0
        %2457 = vmatprep.subr.mxu0 0.0
        %2458 = vmatpush1.msra.mxu0 0.0
        %2459 = vmatprep.subr.mxu0 0.0
        %2460 = vmatpush1.msra.mxu0 0.0
        %2461 = vmatprep.subr.mxu0 0.0
        %2462 = vmatpush1.msra.mxu0 0.0
        %2463 = vmatprep.mubr.f32.mxu0 0.0
        %v2464 = vand.u32 %v156, 4294901760
        %v2465 = vsub.f32 %v156, %v2464
        %2466 = vmatmul.mubr.f32.gmra.mrb[0].mxu0 %v2465
        %v2467 = vpop.f32.mrb[0].mxu0
        %v2468 = vadd.f32 %v2331, %v2467
        %v2469 = vpop.f32.mrb[0].mxu0
        %v2470 = vadd.f32 %v2333, %v2469
        %2471 = vdwg.mxu0
        %v2472 = vand.u32 %v162, 4294901760
        %2473 = vmatprep.subr.mxu0 %v2472
        %v2474 = vand.u32 %v161, 4294901760
        %2475 = vmatpush1.msra.mxu0 %v2474
        %v2476 = vand.u32 %v170, 4294901760
        %2477 = vmatprep.subr.mxu0 %v2476
        %v2478 = vand.u32 %v169, 4294901760
        %2479 = vmatpush1.msra.mxu0 %v2478
        %v2480 = vand.u32 %v178, 4294901760
        %2481 = vmatprep.subr.mxu0 %v2480
        %v2482 = vand.u32 %v177, 4294901760
        %2483 = vmatpush1.msra.mxu0 %v2482
        %v2484 = vand.u32 %v186, 4294901760
        %2485 = vmatprep.subr.mxu0 %v2484
        %v2486 = vand.u32 %v185, 4294901760
        %2487 = vmatpush1.msra.mxu0 %v2486
        %v2488 = vand.u32 %v194, 4294901760
        %2489 = vmatprep.subr.mxu0 %v2488
        %v2490 = vand.u32 %v193, 4294901760
        %2491 = vmatpush1.msra.mxu0 %v2490
        %v2492 = vand.u32 %v202, 4294901760
        %2493 = vmatprep.subr.mxu0 %v2492
        %v2494 = vand.u32 %v201, 4294901760
        %2495 = vmatpush1.msra.mxu0 %v2494
        %v2496 = vand.u32 %v210, 4294901760
        %2497 = vmatprep.subr.mxu0 %v2496
        %v2498 = vand.u32 %v209, 4294901760
        %2499 = vmatpush1.msra.mxu0 %v2498
        %v2500 = vand.u32 %v218, 4294901760
        %2501 = vmatprep.subr.mxu0 %v2500
        %v2502 = vand.u32 %v217, 4294901760
        %2503 = vmatpush1.msra.mxu0 %v2502
        %v2504 = vand.u32 %v226, 4294901760
        %2505 = vmatprep.subr.mxu0 %v2504
        %v2506 = vand.u32 %v225, 4294901760
        %2507 = vmatpush1.msra.mxu0 %v2506
        %v2508 = vand.u32 %v234, 4294901760
        %2509 = vmatprep.subr.mxu0 %v2508
        %v2510 = vand.u32 %v233, 4294901760
        %2511 = vmatpush1.msra.mxu0 %v2510
        %v2512 = vand.u32 %v242, 4294901760
        %2513 = vmatprep.subr.mxu0 %v2512
        %v2514 = vand.u32 %v241, 4294901760
        %2515 = vmatpush1.msra.mxu0 %v2514
        %v2516 = vand.u32 %v250, 4294901760
        %2517 = vmatprep.subr.mxu0 %v2516
        %v2518 = vand.u32 %v249, 4294901760
        %2519 = vmatpush1.msra.mxu0 %v2518
        %v2520 = vand.u32 %v258, 4294901760
        %2521 = vmatprep.subr.mxu0 %v2520
        %v2522 = vand.u32 %v257, 4294901760
        %2523 = vmatpush1.msra.mxu0 %v2522
        %v2524 = vand.u32 %v266, 4294901760
        %2525 = vmatprep.subr.mxu0 %v2524
        %v2526 = vand.u32 %v265, 4294901760
        %2527 = vmatpush1.msra.mxu0 %v2526
        %v2528 = vand.u32 %v274, 4294901760
        %2529 = vmatprep.subr.mxu0 %v2528
        %v2530 = vand.u32 %v273, 4294901760
        %2531 = vmatpush1.msra.mxu0 %v2530
        %v2532 = vand.u32 %v282, 4294901760
        %2533 = vmatprep.subr.mxu0 %v2532
        %v2534 = vand.u32 %v281, 4294901760
        %2535 = vmatpush1.msra.mxu0 %v2534
        %2536 = vmatprep.subr.mxu0 0.0
        %2537 = vmatpush1.msra.mxu0 0.0
        %2538 = vmatprep.subr.mxu0 0.0
        %2539 = vmatpush1.msra.mxu0 0.0
        %2540 = vmatprep.subr.mxu0 0.0
        %2541 = vmatpush1.msra.mxu0 0.0
        %2542 = vmatprep.subr.mxu0 0.0
        %2543 = vmatpush1.msra.mxu0 0.0
        %2544 = vmatprep.subr.mxu0 0.0
        %2545 = vmatpush1.msra.mxu0 0.0
        %2546 = vmatprep.subr.mxu0 0.0
        %2547 = vmatpush1.msra.mxu0 0.0
        %2548 = vmatprep.subr.mxu0 0.0
        %2549 = vmatpush1.msra.mxu0 0.0
        %2550 = vmatprep.subr.mxu0 0.0
        %2551 = vmatpush1.msra.mxu0 0.0
        %2552 = vmatprep.subr.mxu0 0.0
        %2553 = vmatpush1.msra.mxu0 0.0
        %2554 = vmatprep.subr.mxu0 0.0
        %2555 = vmatpush1.msra.mxu0 0.0
        %2556 = vmatprep.subr.mxu0 0.0
        %2557 = vmatpush1.msra.mxu0 0.0
        %2558 = vmatprep.subr.mxu0 0.0
        %2559 = vmatpush1.msra.mxu0 0.0
        %2560 = vmatprep.subr.mxu0 0.0
        %2561 = vmatpush1.msra.mxu0 0.0
        %2562 = vmatprep.subr.mxu0 0.0
        %2563 = vmatpush1.msra.mxu0 0.0
        %2564 = vmatprep.subr.mxu0 0.0
        %2565 = vmatpush1.msra.mxu0 0.0
        %2566 = vmatprep.subr.mxu0 0.0
        %2567 = vmatpush1.msra.mxu0 0.0
        %2568 = vmatprep.mubr.f32.mxu0 0.0
        %v2569 = vand.u32 %v156, 4294901760
        %v2570 = vsub.f32 %v156, %v2569
        %v2571 = vand.u32 %v2570, 4294901760
        %2572 = vmatmul.mubr.f32.gmra.mrb[0].mxu0 %v2571
        %v2573 = vpop.f32.mrb[0].mxu0
        %v2574 = vadd.f32 %v2468, %v2573
        %v2575 = vpop.f32.mrb[0].mxu0
        %v2576 = vadd.f32 %v2470, %v2575
        %2577 = vdwg.mxu0
        %v2578 = vand.u32 %v162, 4294901760
        %v2579 = vsub.f32 %v162, %v2578
        %v2580 = vand.u32 %v2579, 4294901760
        %2581 = vmatprep.subr.mxu0 %v2580
        %v2582 = vand.u32 %v161, 4294901760
        %v2583 = vsub.f32 %v161, %v2582
        %v2584 = vand.u32 %v2583, 4294901760
        %2585 = vmatpush1.msra.mxu0 %v2584
        %v2586 = vand.u32 %v170, 4294901760
        %v2587 = vsub.f32 %v170, %v2586
        %v2588 = vand.u32 %v2587, 4294901760
        %2589 = vmatprep.subr.mxu0 %v2588
        %v2590 = vand.u32 %v169, 4294901760
        %v2591 = vsub.f32 %v169, %v2590
        %v2592 = vand.u32 %v2591, 4294901760
        %2593 = vmatpush1.msra.mxu0 %v2592
        %v2594 = vand.u32 %v178, 4294901760
        %v2595 = vsub.f32 %v178, %v2594
        %v2596 = vand.u32 %v2595, 4294901760
        %2597 = vmatprep.subr.mxu0 %v2596
        %v2598 = vand.u32 %v177, 4294901760
        %v2599 = vsub.f32 %v177, %v2598
        %v2600 = vand.u32 %v2599, 4294901760
        %2601 = vmatpush1.msra.mxu0 %v2600
        %v2602 = vand.u32 %v186, 4294901760
        %v2603 = vsub.f32 %v186, %v2602
        %v2604 = vand.u32 %v2603, 4294901760
        %2605 = vmatprep.subr.mxu0 %v2604
        %v2606 = vand.u32 %v185, 4294901760
        %v2607 = vsub.f32 %v185, %v2606
        %v2608 = vand.u32 %v2607, 4294901760
        %2609 = vmatpush1.msra.mxu0 %v2608
        %v2610 = vand.u32 %v194, 4294901760
        %v2611 = vsub.f32 %v194, %v2610
        %v2612 = vand.u32 %v2611, 4294901760
        %2613 = vmatprep.subr.mxu0 %v2612
        %v2614 = vand.u32 %v193, 4294901760
        %v2615 = vsub.f32 %v193, %v2614
        %v2616 = vand.u32 %v2615, 4294901760
        %2617 = vmatpush1.msra.mxu0 %v2616
        %v2618 = vand.u32 %v202, 4294901760
        %v2619 = vsub.f32 %v202, %v2618
        %v2620 = vand.u32 %v2619, 4294901760
        %2621 = vmatprep.subr.mxu0 %v2620
        %v2622 = vand.u32 %v201, 4294901760
        %v2623 = vsub.f32 %v201, %v2622
        %v2624 = vand.u32 %v2623, 4294901760
        %2625 = vmatpush1.msra.mxu0 %v2624
        %v2626 = vand.u32 %v210, 4294901760
        %v2627 = vsub.f32 %v210, %v2626
        %v2628 = vand.u32 %v2627, 4294901760
        %2629 = vmatprep.subr.mxu0 %v2628
        %v2630 = vand.u32 %v209, 4294901760
        %v2631 = vsub.f32 %v209, %v2630
        %v2632 = vand.u32 %v2631, 4294901760
        %2633 = vmatpush1.msra.mxu0 %v2632
        %v2634 = vand.u32 %v218, 4294901760
        %v2635 = vsub.f32 %v218, %v2634
        %v2636 = vand.u32 %v2635, 4294901760
        %2637 = vmatprep.subr.mxu0 %v2636
        %v2638 = vand.u32 %v217, 4294901760
        %v2639 = vsub.f32 %v217, %v2638
        %v2640 = vand.u32 %v2639, 4294901760
        %2641 = vmatpush1.msra.mxu0 %v2640
        %v2642 = vand.u32 %v226, 4294901760
        %v2643 = vsub.f32 %v226, %v2642
        %v2644 = vand.u32 %v2643, 4294901760
        %2645 = vmatprep.subr.mxu0 %v2644
        %v2646 = vand.u32 %v225, 4294901760
        %v2647 = vsub.f32 %v225, %v2646
        %v2648 = vand.u32 %v2647, 4294901760
        %2649 = vmatpush1.msra.mxu0 %v2648
        %v2650 = vand.u32 %v234, 4294901760
        %v2651 = vsub.f32 %v234, %v2650
        %v2652 = vand.u32 %v2651, 4294901760
        %2653 = vmatprep.subr.mxu0 %v2652
        %v2654 = vand.u32 %v233, 4294901760
        %v2655 = vsub.f32 %v233, %v2654
        %v2656 = vand.u32 %v2655, 4294901760
        %2657 = vmatpush1.msra.mxu0 %v2656
        %v2658 = vand.u32 %v242, 4294901760
        %v2659 = vsub.f32 %v242, %v2658
        %v2660 = vand.u32 %v2659, 4294901760
        %2661 = vmatprep.subr.mxu0 %v2660
        %v2662 = vand.u32 %v241, 4294901760
        %v2663 = vsub.f32 %v241, %v2662
        %v2664 = vand.u32 %v2663, 4294901760
        %2665 = vmatpush1.msra.mxu0 %v2664
        %v2666 = vand.u32 %v250, 4294901760
        %v2667 = vsub.f32 %v250, %v2666
        %v2668 = vand.u32 %v2667, 4294901760
        %2669 = vmatprep.subr.mxu0 %v2668
        %v2670 = vand.u32 %v249, 4294901760
        %v2671 = vsub.f32 %v249, %v2670
        %v2672 = vand.u32 %v2671, 4294901760
        %2673 = vmatpush1.msra.mxu0 %v2672
        %v2674 = vand.u32 %v258, 4294901760
        %v2675 = vsub.f32 %v258, %v2674
        %v2676 = vand.u32 %v2675, 4294901760
        %2677 = vmatprep.subr.mxu0 %v2676
        %v2678 = vand.u32 %v257, 4294901760
        %v2679 = vsub.f32 %v257, %v2678
        %v2680 = vand.u32 %v2679, 4294901760
        %2681 = vmatpush1.msra.mxu0 %v2680
        %v2682 = vand.u32 %v266, 4294901760
        %v2683 = vsub.f32 %v266, %v2682
        %v2684 = vand.u32 %v2683, 4294901760
        %2685 = vmatprep.subr.mxu0 %v2684
        %v2686 = vand.u32 %v265, 4294901760
        %v2687 = vsub.f32 %v265, %v2686
        %v2688 = vand.u32 %v2687, 4294901760
        %2689 = vmatpush1.msra.mxu0 %v2688
        %v2690 = vand.u32 %v274, 4294901760
        %v2691 = vsub.f32 %v274, %v2690
        %v2692 = vand.u32 %v2691, 4294901760
        %2693 = vmatprep.subr.mxu0 %v2692
        %v2694 = vand.u32 %v273, 4294901760
        %v2695 = vsub.f32 %v273, %v2694
        %v2696 = vand.u32 %v2695, 4294901760
        %2697 = vmatpush1.msra.mxu0 %v2696
        %v2698 = vand.u32 %v282, 4294901760
        %v2699 = vsub.f32 %v282, %v2698
        %v2700 = vand.u32 %v2699, 4294901760
        %2701 = vmatprep.subr.mxu0 %v2700
        %v2702 = vand.u32 %v281, 4294901760
        %v2703 = vsub.f32 %v281, %v2702
        %v2704 = vand.u32 %v2703, 4294901760
        %2705 = vmatpush1.msra.mxu0 %v2704
        %2706 = vmatprep.subr.mxu0 0.0
        %2707 = vmatpush1.msra.mxu0 0.0
        %2708 = vmatprep.subr.mxu0 0.0
        %2709 = vmatpush1.msra.mxu0 0.0
        %2710 = vmatprep.subr.mxu0 0.0
        %2711 = vmatpush1.msra.mxu0 0.0
        %2712 = vmatprep.subr.mxu0 0.0
        %2713 = vmatpush1.msra.mxu0 0.0
        %2714 = vmatprep.subr.mxu0 0.0
        %2715 = vmatpush1.msra.mxu0 0.0
        %2716 = vmatprep.subr.mxu0 0.0
        %2717 = vmatpush1.msra.mxu0 0.0
        %2718 = vmatprep.subr.mxu0 0.0
        %2719 = vmatpush1.msra.mxu0 0.0
        %2720 = vmatprep.subr.mxu0 0.0
        %2721 = vmatpush1.msra.mxu0 0.0
        %2722 = vmatprep.subr.mxu0 0.0
        %2723 = vmatpush1.msra.mxu0 0.0
        %2724 = vmatprep.subr.mxu0 0.0
        %2725 = vmatpush1.msra.mxu0 0.0
        %2726 = vmatprep.subr.mxu0 0.0
        %2727 = vmatpush1.msra.mxu0 0.0
        %2728 = vmatprep.subr.mxu0 0.0
        %2729 = vmatpush1.msra.mxu0 0.0
        %2730 = vmatprep.subr.mxu0 0.0
        %2731 = vmatpush1.msra.mxu0 0.0
        %2732 = vmatprep.subr.mxu0 0.0
        %2733 = vmatpush1.msra.mxu0 0.0
        %2734 = vmatprep.subr.mxu0 0.0
        %2735 = vmatpush1.msra.mxu0 0.0
        %2736 = vmatprep.subr.mxu0 0.0
        %2737 = vmatpush1.msra.mxu0 0.0
        %2738 = vmatprep.mubr.f32.mxu0 0.0
        %v2739 = vand.u32 %v156, 4294901760
        %2740 = vmatmul.mubr.f32.gmra.mrb[0].mxu0 %v2739
        %v2741 = vpop.f32.mrb[0].mxu0
        %v2742 = vadd.f32 %v2574, %v2741
        %v2743 = vpop.f32.mrb[0].mxu0
        %v2744 = vadd.f32 %v2576, %v2743
        %2745 = vdwg.mxu0
        %v2746 = vand.u32 %v162, 4294901760
        %2747 = vmatprep.subr.mxu0 %v2746
        %v2748 = vand.u32 %v161, 4294901760
        %2749 = vmatpush1.msra.mxu0 %v2748
        %v2750 = vand.u32 %v170, 4294901760
        %2751 = vmatprep.subr.mxu0 %v2750
        %v2752 = vand.u32 %v169, 4294901760
        %2753 = vmatpush1.msra.mxu0 %v2752
        %v2754 = vand.u32 %v178, 4294901760
        %2755 = vmatprep.subr.mxu0 %v2754
        %v2756 = vand.u32 %v177, 4294901760
        %2757 = vmatpush1.msra.mxu0 %v2756
        %v2758 = vand.u32 %v186, 4294901760
        %2759 = vmatprep.subr.mxu0 %v2758
        %v2760 = vand.u32 %v185, 4294901760
        %2761 = vmatpush1.msra.mxu0 %v2760
        %v2762 = vand.u32 %v194, 4294901760
        %2763 = vmatprep.subr.mxu0 %v2762
        %v2764 = vand.u32 %v193, 4294901760
        %2765 = vmatpush1.msra.mxu0 %v2764
        %v2766 = vand.u32 %v202, 4294901760
        %2767 = vmatprep.subr.mxu0 %v2766
        %v2768 = vand.u32 %v201, 4294901760
        %2769 = vmatpush1.msra.mxu0 %v2768
        %v2770 = vand.u32 %v210, 4294901760
        %2771 = vmatprep.subr.mxu0 %v2770
        %v2772 = vand.u32 %v209, 4294901760
        %2773 = vmatpush1.msra.mxu0 %v2772
        %v2774 = vand.u32 %v218, 4294901760
        %2775 = vmatprep.subr.mxu0 %v2774
        %v2776 = vand.u32 %v217, 4294901760
        %2777 = vmatpush1.msra.mxu0 %v2776
        %v2778 = vand.u32 %v226, 4294901760
        %2779 = vmatprep.subr.mxu0 %v2778
        %v2780 = vand.u32 %v225, 4294901760
        %2781 = vmatpush1.msra.mxu0 %v2780
        %v2782 = vand.u32 %v234, 4294901760
        %2783 = vmatprep.subr.mxu0 %v2782
        %v2784 = vand.u32 %v233, 4294901760
        %2785 = vmatpush1.msra.mxu0 %v2784
        %v2786 = vand.u32 %v242, 4294901760
        %2787 = vmatprep.subr.mxu0 %v2786
        %v2788 = vand.u32 %v241, 4294901760
        %2789 = vmatpush1.msra.mxu0 %v2788
        %v2790 = vand.u32 %v250, 4294901760
        %2791 = vmatprep.subr.mxu0 %v2790
        %v2792 = vand.u32 %v249, 4294901760
        %2793 = vmatpush1.msra.mxu0 %v2792
        %v2794 = vand.u32 %v258, 4294901760
        %2795 = vmatprep.subr.mxu0 %v2794
        %v2796 = vand.u32 %v257, 4294901760
        %2797 = vmatpush1.msra.mxu0 %v2796
        %v2798 = vand.u32 %v266, 4294901760
        %2799 = vmatprep.subr.mxu0 %v2798
        %v2800 = vand.u32 %v265, 4294901760
        %2801 = vmatpush1.msra.mxu0 %v2800
        %v2802 = vand.u32 %v274, 4294901760
        %2803 = vmatprep.subr.mxu0 %v2802
        %v2804 = vand.u32 %v273, 4294901760
        %2805 = vmatpush1.msra.mxu0 %v2804
        %v2806 = vand.u32 %v282, 4294901760
        %2807 = vmatprep.subr.mxu0 %v2806
        %v2808 = vand.u32 %v281, 4294901760
        %2809 = vmatpush1.msra.mxu0 %v2808
        %2810 = vmatprep.subr.mxu0 0.0
        %2811 = vmatpush1.msra.mxu0 0.0
        %2812 = vmatprep.subr.mxu0 0.0
        %2813 = vmatpush1.msra.mxu0 0.0
        %2814 = vmatprep.subr.mxu0 0.0
        %2815 = vmatpush1.msra.mxu0 0.0
        %2816 = vmatprep.subr.mxu0 0.0
        %2817 = vmatpush1.msra.mxu0 0.0
        %2818 = vmatprep.subr.mxu0 0.0
        %2819 = vmatpush1.msra.mxu0 0.0
        %2820 = vmatprep.subr.mxu0 0.0
        %2821 = vmatpush1.msra.mxu0 0.0
        %2822 = vmatprep.subr.mxu0 0.0
        %2823 = vmatpush1.msra.mxu0 0.0
        %2824 = vmatprep.subr.mxu0 0.0
        %2825 = vmatpush1.msra.mxu0 0.0
        %2826 = vmatprep.subr.mxu0 0.0
        %2827 = vmatpush1.msra.mxu0 0.0
        %2828 = vmatprep.subr.mxu0 0.0
        %2829 = vmatpush1.msra.mxu0 0.0
        %2830 = vmatprep.subr.mxu0 0.0
        %2831 = vmatpush1.msra.mxu0 0.0
        %2832 = vmatprep.subr.mxu0 0.0
        %2833 = vmatpush1.msra.mxu0 0.0
        %2834 = vmatprep.subr.mxu0 0.0
        %2835 = vmatpush1.msra.mxu0 0.0
        %2836 = vmatprep.subr.mxu0 0.0
        %2837 = vmatpush1.msra.mxu0 0.0
        %2838 = vmatprep.subr.mxu0 0.0
        %2839 = vmatpush1.msra.mxu0 0.0
        %2840 = vmatprep.subr.mxu0 0.0
        %2841 = vmatpush1.msra.mxu0 0.0
        %2842 = vmatprep.mubr.f32.mxu0 0.0
        %v2843 = vand.u32 %v156, 4294901760
        %2844 = vmatmul.mubr.f32.gmra.mrb[0].mxu0 %v2843
        %v2845 = vpop.f32.mrb[0].mxu0
        %v2846 = vadd.f32 %v2742, %v2845
        %v2847 = vpop.f32.mrb[0].mxu0
        %v2848 = vadd.f32 %v2744, %v2847
        %2849 = vdwg.mxu0
        %v2850 = vand.u32 %v164, 4294901760
        %2851 = vmatprep.subr.mxu0 %v2850
        %v2852 = vand.u32 %v163, 4294901760
        %2853 = vmatpush1.msra.mxu0 %v2852
        %v2854 = vand.u32 %v172, 4294901760
        %2855 = vmatprep.subr.mxu0 %v2854
        %v2856 = vand.u32 %v171, 4294901760
        %2857 = vmatpush1.msra.mxu0 %v2856
        %v2858 = vand.u32 %v180, 4294901760
        %2859 = vmatprep.subr.mxu0 %v2858
        %v2860 = vand.u32 %v179, 4294901760
        %2861 = vmatpush1.msra.mxu0 %v2860
        %v2862 = vand.u32 %v188, 4294901760
        %2863 = vmatprep.subr.mxu0 %v2862
        %v2864 = vand.u32 %v187, 4294901760
        %2865 = vmatpush1.msra.mxu0 %v2864
        %v2866 = vand.u32 %v196, 4294901760
        %2867 = vmatprep.subr.mxu0 %v2866
        %v2868 = vand.u32 %v195, 4294901760
        %2869 = vmatpush1.msra.mxu0 %v2868
        %v2870 = vand.u32 %v204, 4294901760
        %2871 = vmatprep.subr.mxu0 %v2870
        %v2872 = vand.u32 %v203, 4294901760
        %2873 = vmatpush1.msra.mxu0 %v2872
        %v2874 = vand.u32 %v212, 4294901760
        %2875 = vmatprep.subr.mxu0 %v2874
        %v2876 = vand.u32 %v211, 4294901760
        %2877 = vmatpush1.msra.mxu0 %v2876
        %v2878 = vand.u32 %v220, 4294901760
        %2879 = vmatprep.subr.mxu0 %v2878
        %v2880 = vand.u32 %v219, 4294901760
        %2881 = vmatpush1.msra.mxu0 %v2880
        %v2882 = vand.u32 %v228, 4294901760
        %2883 = vmatprep.subr.mxu0 %v2882
        %v2884 = vand.u32 %v227, 4294901760
        %2885 = vmatpush1.msra.mxu0 %v2884
        %v2886 = vand.u32 %v236, 4294901760
        %2887 = vmatprep.subr.mxu0 %v2886
        %v2888 = vand.u32 %v235, 4294901760
        %2889 = vmatpush1.msra.mxu0 %v2888
        %v2890 = vand.u32 %v244, 4294901760
        %2891 = vmatprep.subr.mxu0 %v2890
        %v2892 = vand.u32 %v243, 4294901760
        %2893 = vmatpush1.msra.mxu0 %v2892
        %v2894 = vand.u32 %v252, 4294901760
        %2895 = vmatprep.subr.mxu0 %v2894
        %v2896 = vand.u32 %v251, 4294901760
        %2897 = vmatpush1.msra.mxu0 %v2896
        %v2898 = vand.u32 %v260, 4294901760
        %2899 = vmatprep.subr.mxu0 %v2898
        %v2900 = vand.u32 %v259, 4294901760
        %2901 = vmatpush1.msra.mxu0 %v2900
        %v2902 = vand.u32 %v268, 4294901760
        %2903 = vmatprep.subr.mxu0 %v2902
        %v2904 = vand.u32 %v267, 4294901760
        %2905 = vmatpush1.msra.mxu0 %v2904
        %v2906 = vand.u32 %v276, 4294901760
        %2907 = vmatprep.subr.mxu0 %v2906
        %v2908 = vand.u32 %v275, 4294901760
        %2909 = vmatpush1.msra.mxu0 %v2908
        %v2910 = vand.u32 %v284, 4294901760
        %2911 = vmatprep.subr.mxu0 %v2910
        %v2912 = vand.u32 %v283, 4294901760
        %2913 = vmatpush1.msra.mxu0 %v2912
        %2914 = vmatprep.subr.mxu0 0.0
        %2915 = vmatpush1.msra.mxu0 0.0
        %2916 = vmatprep.subr.mxu0 0.0
        %2917 = vmatpush1.msra.mxu0 0.0
        %2918 = vmatprep.subr.mxu0 0.0
        %2919 = vmatpush1.msra.mxu0 0.0
        %2920 = vmatprep.subr.mxu0 0.0
        %2921 = vmatpush1.msra.mxu0 0.0
        %2922 = vmatprep.subr.mxu0 0.0
        %2923 = vmatpush1.msra.mxu0 0.0
        %2924 = vmatprep.subr.mxu0 0.0
        %2925 = vmatpush1.msra.mxu0 0.0
        %2926 = vmatprep.subr.mxu0 0.0
        %2927 = vmatpush1.msra.mxu0 0.0
        %2928 = vmatprep.subr.mxu0 0.0
        %2929 = vmatpush1.msra.mxu0 0.0
        %2930 = vmatprep.subr.mxu0 0.0
        %2931 = vmatpush1.msra.mxu0 0.0
        %2932 = vmatprep.subr.mxu0 0.0
        %2933 = vmatpush1.msra.mxu0 0.0
        %2934 = vmatprep.subr.mxu0 0.0
        %2935 = vmatpush1.msra.mxu0 0.0
        %2936 = vmatprep.subr.mxu0 0.0
        %2937 = vmatpush1.msra.mxu0 0.0
        %2938 = vmatprep.subr.mxu0 0.0
        %2939 = vmatpush1.msra.mxu0 0.0
        %2940 = vmatprep.subr.mxu0 0.0
        %2941 = vmatpush1.msra.mxu0 0.0
        %2942 = vmatprep.subr.mxu0 0.0
        %2943 = vmatpush1.msra.mxu0 0.0
        %2944 = vmatprep.subr.mxu0 0.0
        %2945 = vmatpush1.msra.mxu0 0.0
        %2946 = vmatprep.mubr.f32.mxu0 0.0
        %v2947 = vand.u32 %v156, 4294901760
        %v2948 = vsub.f32 %v156, %v2947
        %v2949 = vand.u32 %v2948, 4294901760
        %v2950 = vsub.f32 %v2948, %v2949
        %v2951 = vand.u32 %v2950, 4294901760
        %2952 = vmatmul.mubr.f32.gmra.mrb[0].mxu0 %v2951
        %v2953 = vpop.f32.mrb[0].mxu0
        %v2954 = vadd.f32 0.0, %v2953
        %v2955 = vpop.f32.mrb[0].mxu0
        %v2956 = vadd.f32 0.0, %v2955
        %2957 = vdwg.mxu0
        %v2958 = vand.u32 %v164, 4294901760
        %v2959 = vsub.f32 %v164, %v2958
        %v2960 = vand.u32 %v2959, 4294901760
        %v2961 = vsub.f32 %v2959, %v2960
        %v2962 = vand.u32 %v2961, 4294901760
        %2963 = vmatprep.subr.mxu0 %v2962
        %v2964 = vand.u32 %v163, 4294901760
        %v2965 = vsub.f32 %v163, %v2964
        %v2966 = vand.u32 %v2965, 4294901760
        %v2967 = vsub.f32 %v2965, %v2966
        %v2968 = vand.u32 %v2967, 4294901760
        %2969 = vmatpush1.msra.mxu0 %v2968
        %v2970 = vand.u32 %v172, 4294901760
        %v2971 = vsub.f32 %v172, %v2970
        %v2972 = vand.u32 %v2971, 4294901760
        %v2973 = vsub.f32 %v2971, %v2972
        %v2974 = vand.u32 %v2973, 4294901760
        %2975 = vmatprep.subr.mxu0 %v2974
        %v2976 = vand.u32 %v171, 4294901760
        %v2977 = vsub.f32 %v171, %v2976
        %v2978 = vand.u32 %v2977, 4294901760
        %v2979 = vsub.f32 %v2977, %v2978
        %v2980 = vand.u32 %v2979, 4294901760
        %2981 = vmatpush1.msra.mxu0 %v2980
        %v2982 = vand.u32 %v180, 4294901760
        %v2983 = vsub.f32 %v180, %v2982
        %v2984 = vand.u32 %v2983, 4294901760
        %v2985 = vsub.f32 %v2983, %v2984
        %v2986 = vand.u32 %v2985, 4294901760
        %2987 = vmatprep.subr.mxu0 %v2986
        %v2988 = vand.u32 %v179, 4294901760
        %v2989 = vsub.f32 %v179, %v2988
        %v2990 = vand.u32 %v2989, 4294901760
        %v2991 = vsub.f32 %v2989, %v2990
        %v2992 = vand.u32 %v2991, 4294901760
        %2993 = vmatpush1.msra.mxu0 %v2992
        %v2994 = vand.u32 %v188, 4294901760
        %v2995 = vsub.f32 %v188, %v2994
        %v2996 = vand.u32 %v2995, 4294901760
        %v2997 = vsub.f32 %v2995, %v2996
        %v2998 = vand.u32 %v2997, 4294901760
        %2999 = vmatprep.subr.mxu0 %v2998
        %v3000 = vand.u32 %v187, 4294901760
        %v3001 = vsub.f32 %v187, %v3000
        %v3002 = vand.u32 %v3001, 4294901760
        %v3003 = vsub.f32 %v3001, %v3002
        %v3004 = vand.u32 %v3003, 4294901760
        %3005 = vmatpush1.msra.mxu0 %v3004
        %v3006 = vand.u32 %v196, 4294901760
        %v3007 = vsub.f32 %v196, %v3006
        %v3008 = vand.u32 %v3007, 4294901760
        %v3009 = vsub.f32 %v3007, %v3008
        %v3010 = vand.u32 %v3009, 4294901760
        %3011 = vmatprep.subr.mxu0 %v3010
        %v3012 = vand.u32 %v195, 4294901760
        %v3013 = vsub.f32 %v195, %v3012
        %v3014 = vand.u32 %v3013, 4294901760
        %v3015 = vsub.f32 %v3013, %v3014
        %v3016 = vand.u32 %v3015, 4294901760
        %3017 = vmatpush1.msra.mxu0 %v3016
        %v3018 = vand.u32 %v204, 4294901760
        %v3019 = vsub.f32 %v204, %v3018
        %v3020 = vand.u32 %v3019, 4294901760
        %v3021 = vsub.f32 %v3019, %v3020
        %v3022 = vand.u32 %v3021, 4294901760
        %3023 = vmatprep.subr.mxu0 %v3022
        %v3024 = vand.u32 %v203, 4294901760
        %v3025 = vsub.f32 %v203, %v3024
        %v3026 = vand.u32 %v3025, 4294901760
        %v3027 = vsub.f32 %v3025, %v3026
        %v3028 = vand.u32 %v3027, 4294901760
        %3029 = vmatpush1.msra.mxu0 %v3028
        %v3030 = vand.u32 %v212, 4294901760
        %v3031 = vsub.f32 %v212, %v3030
        %v3032 = vand.u32 %v3031, 4294901760
        %v3033 = vsub.f32 %v3031, %v3032
        %v3034 = vand.u32 %v3033, 4294901760
        %3035 = vmatprep.subr.mxu0 %v3034
        %v3036 = vand.u32 %v211, 4294901760
        %v3037 = vsub.f32 %v211, %v3036
        %v3038 = vand.u32 %v3037, 4294901760
        %v3039 = vsub.f32 %v3037, %v3038
        %v3040 = vand.u32 %v3039, 4294901760
        %3041 = vmatpush1.msra.mxu0 %v3040
        %v3042 = vand.u32 %v220, 4294901760
        %v3043 = vsub.f32 %v220, %v3042
        %v3044 = vand.u32 %v3043, 4294901760
        %v3045 = vsub.f32 %v3043, %v3044
        %v3046 = vand.u32 %v3045, 4294901760
        %3047 = vmatprep.subr.mxu0 %v3046
        %v3048 = vand.u32 %v219, 4294901760
        %v3049 = vsub.f32 %v219, %v3048
        %v3050 = vand.u32 %v3049, 4294901760
        %v3051 = vsub.f32 %v3049, %v3050
        %v3052 = vand.u32 %v3051, 4294901760
        %3053 = vmatpush1.msra.mxu0 %v3052
        %v3054 = vand.u32 %v228, 4294901760
        %v3055 = vsub.f32 %v228, %v3054
        %v3056 = vand.u32 %v3055, 4294901760
        %v3057 = vsub.f32 %v3055, %v3056
        %v3058 = vand.u32 %v3057, 4294901760
        %3059 = vmatprep.subr.mxu0 %v3058
        %v3060 = vand.u32 %v227, 4294901760
        %v3061 = vsub.f32 %v227, %v3060
        %v3062 = vand.u32 %v3061, 4294901760
        %v3063 = vsub.f32 %v3061, %v3062
        %v3064 = vand.u32 %v3063, 4294901760
        %3065 = vmatpush1.msra.mxu0 %v3064
        %v3066 = vand.u32 %v236, 4294901760
        %v3067 = vsub.f32 %v236, %v3066
        %v3068 = vand.u32 %v3067, 4294901760
        %v3069 = vsub.f32 %v3067, %v3068
        %v3070 = vand.u32 %v3069, 4294901760
        %3071 = vmatprep.subr.mxu0 %v3070
        %v3072 = vand.u32 %v235, 4294901760
        %v3073 = vsub.f32 %v235, %v3072
        %v3074 = vand.u32 %v3073, 4294901760
        %v3075 = vsub.f32 %v3073, %v3074
        %v3076 = vand.u32 %v3075, 4294901760
        %3077 = vmatpush1.msra.mxu0 %v3076
        %v3078 = vand.u32 %v244, 4294901760
        %v3079 = vsub.f32 %v244, %v3078
        %v3080 = vand.u32 %v3079, 4294901760
        %v3081 = vsub.f32 %v3079, %v3080
        %v3082 = vand.u32 %v3081, 4294901760
        %3083 = vmatprep.subr.mxu0 %v3082
        %v3084 = vand.u32 %v243, 4294901760
        %v3085 = vsub.f32 %v243, %v3084
        %v3086 = vand.u32 %v3085, 4294901760
        %v3087 = vsub.f32 %v3085, %v3086
        %v3088 = vand.u32 %v3087, 4294901760
        %3089 = vmatpush1.msra.mxu0 %v3088
        %v3090 = vand.u32 %v252, 4294901760
        %v3091 = vsub.f32 %v252, %v3090
        %v3092 = vand.u32 %v3091, 4294901760
        %v3093 = vsub.f32 %v3091, %v3092
        %v3094 = vand.u32 %v3093, 4294901760
        %3095 = vmatprep.subr.mxu0 %v3094
        %v3096 = vand.u32 %v251, 4294901760
        %v3097 = vsub.f32 %v251, %v3096
        %v3098 = vand.u32 %v3097, 4294901760
        %v3099 = vsub.f32 %v3097, %v3098
        %v3100 = vand.u32 %v3099, 4294901760
        %3101 = vmatpush1.msra.mxu0 %v3100
        %v3102 = vand.u32 %v260, 4294901760
        %v3103 = vsub.f32 %v260, %v3102
        %v3104 = vand.u32 %v3103, 4294901760
        %v3105 = vsub.f32 %v3103, %v3104
        %v3106 = vand.u32 %v3105, 4294901760
        %3107 = vmatprep.subr.mxu0 %v3106
        %v3108 = vand.u32 %v259, 4294901760
        %v3109 = vsub.f32 %v259, %v3108
        %v3110 = vand.u32 %v3109, 4294901760
        %v3111 = vsub.f32 %v3109, %v3110
        %v3112 = vand.u32 %v3111, 4294901760
        %3113 = vmatpush1.msra.mxu0 %v3112
        %v3114 = vand.u32 %v268, 4294901760
        %v3115 = vsub.f32 %v268, %v3114
        %v3116 = vand.u32 %v3115, 4294901760
        %v3117 = vsub.f32 %v3115, %v3116
        %v3118 = vand.u32 %v3117, 4294901760
        %3119 = vmatprep.subr.mxu0 %v3118
        %v3120 = vand.u32 %v267, 4294901760
        %v3121 = vsub.f32 %v267, %v3120
        %v3122 = vand.u32 %v3121, 4294901760
        %v3123 = vsub.f32 %v3121, %v3122
        %v3124 = vand.u32 %v3123, 4294901760
        %3125 = vmatpush1.msra.mxu0 %v3124
        %v3126 = vand.u32 %v276, 4294901760
        %v3127 = vsub.f32 %v276, %v3126
        %v3128 = vand.u32 %v3127, 4294901760
        %v3129 = vsub.f32 %v3127, %v3128
        %v3130 = vand.u32 %v3129, 4294901760
        %3131 = vmatprep.subr.mxu0 %v3130
        %v3132 = vand.u32 %v275, 4294901760
        %v3133 = vsub.f32 %v275, %v3132
        %v3134 = vand.u32 %v3133, 4294901760
        %v3135 = vsub.f32 %v3133, %v3134
        %v3136 = vand.u32 %v3135, 4294901760
        %3137 = vmatpush1.msra.mxu0 %v3136
        %v3138 = vand.u32 %v284, 4294901760
        %v3139 = vsub.f32 %v284, %v3138
        %v3140 = vand.u32 %v3139, 4294901760
        %v3141 = vsub.f32 %v3139, %v3140
        %v3142 = vand.u32 %v3141, 4294901760
        %3143 = vmatprep.subr.mxu0 %v3142
        %v3144 = vand.u32 %v283, 4294901760
        %v3145 = vsub.f32 %v283, %v3144
        %v3146 = vand.u32 %v3145, 4294901760
        %v3147 = vsub.f32 %v3145, %v3146
        %v3148 = vand.u32 %v3147, 4294901760
        %3149 = vmatpush1.msra.mxu0 %v3148
        %3150 = vmatprep.subr.mxu0 0.0
        %3151 = vmatpush1.msra.mxu0 0.0
        %3152 = vmatprep.subr.mxu0 0.0
        %3153 = vmatpush1.msra.mxu0 0.0
        %3154 = vmatprep.subr.mxu0 0.0
        %3155 = vmatpush1.msra.mxu0 0.0
        %3156 = vmatprep.subr.mxu0 0.0
        %3157 = vmatpush1.msra.mxu0 0.0
        %3158 = vmatprep.subr.mxu0 0.0
        %3159 = vmatpush1.msra.mxu0 0.0
        %3160 = vmatprep.subr.mxu0 0.0
        %3161 = vmatpush1.msra.mxu0 0.0
        %3162 = vmatprep.subr.mxu0 0.0
        %3163 = vmatpush1.msra.mxu0 0.0
        %3164 = vmatprep.subr.mxu0 0.0
        %3165 = vmatpush1.msra.mxu0 0.0
        %3166 = vmatprep.subr.mxu0 0.0
        %3167 = vmatpush1.msra.mxu0 0.0
        %3168 = vmatprep.subr.mxu0 0.0
        %3169 = vmatpush1.msra.mxu0 0.0
        %3170 = vmatprep.subr.mxu0 0.0
        %3171 = vmatpush1.msra.mxu0 0.0
        %3172 = vmatprep.subr.mxu0 0.0
        %3173 = vmatpush1.msra.mxu0 0.0
        %3174 = vmatprep.subr.mxu0 0.0
        %3175 = vmatpush1.msra.mxu0 0.0
        %3176 = vmatprep.subr.mxu0 0.0
        %3177 = vmatpush1.msra.mxu0 0.0
        %3178 = vmatprep.subr.mxu0 0.0
        %3179 = vmatpush1.msra.mxu0 0.0
        %3180 = vmatprep.subr.mxu0 0.0
        %3181 = vmatpush1.msra.mxu0 0.0
        %3182 = vmatprep.mubr.f32.mxu0 0.0
        %v3183 = vand.u32 %v156, 4294901760
        %3184 = vmatmul.mubr.f32.gmra.mrb[0].mxu0 %v3183
        %v3185 = vpop.f32.mrb[0].mxu0
        %v3186 = vadd.f32 %v2954, %v3185
        %v3187 = vpop.f32.mrb[0].mxu0
        %v3188 = vadd.f32 %v2956, %v3187
        %3189 = vdwg.mxu0
        %v3190 = vand.u32 %v164, 4294901760
        %v3191 = vsub.f32 %v164, %v3190
        %3192 = vmatprep.subr.mxu0 %v3191
        %v3193 = vand.u32 %v163, 4294901760
        %v3194 = vsub.f32 %v163, %v3193
        %3195 = vmatpush1.msra.mxu0 %v3194
        %v3196 = vand.u32 %v172, 4294901760
        %v3197 = vsub.f32 %v172, %v3196
        %3198 = vmatprep.subr.mxu0 %v3197
        %v3199 = vand.u32 %v171, 4294901760
        %v3200 = vsub.f32 %v171, %v3199
        %3201 = vmatpush1.msra.mxu0 %v3200
        %v3202 = vand.u32 %v180, 4294901760
        %v3203 = vsub.f32 %v180, %v3202
        %3204 = vmatprep.subr.mxu0 %v3203
        %v3205 = vand.u32 %v179, 4294901760
        %v3206 = vsub.f32 %v179, %v3205
        %3207 = vmatpush1.msra.mxu0 %v3206
        %v3208 = vand.u32 %v188, 4294901760
        %v3209 = vsub.f32 %v188, %v3208
        %3210 = vmatprep.subr.mxu0 %v3209
        %v3211 = vand.u32 %v187, 4294901760
        %v3212 = vsub.f32 %v187, %v3211
        %3213 = vmatpush1.msra.mxu0 %v3212
        %v3214 = vand.u32 %v196, 4294901760
        %v3215 = vsub.f32 %v196, %v3214
        %3216 = vmatprep.subr.mxu0 %v3215
        %v3217 = vand.u32 %v195, 4294901760
        %v3218 = vsub.f32 %v195, %v3217
        %3219 = vmatpush1.msra.mxu0 %v3218
        %v3220 = vand.u32 %v204, 4294901760
        %v3221 = vsub.f32 %v204, %v3220
        %3222 = vmatprep.subr.mxu0 %v3221
        %v3223 = vand.u32 %v203, 4294901760
        %v3224 = vsub.f32 %v203, %v3223
        %3225 = vmatpush1.msra.mxu0 %v3224
        %v3226 = vand.u32 %v212, 4294901760
        %v3227 = vsub.f32 %v212, %v3226
        %3228 = vmatprep.subr.mxu0 %v3227
        %v3229 = vand.u32 %v211, 4294901760
        %v3230 = vsub.f32 %v211, %v3229
        %3231 = vmatpush1.msra.mxu0 %v3230
        %v3232 = vand.u32 %v220, 4294901760
        %v3233 = vsub.f32 %v220, %v3232
        %3234 = vmatprep.subr.mxu0 %v3233
        %v3235 = vand.u32 %v219, 4294901760
        %v3236 = vsub.f32 %v219, %v3235
        %3237 = vmatpush1.msra.mxu0 %v3236
        %v3238 = vand.u32 %v228, 4294901760
        %v3239 = vsub.f32 %v228, %v3238
        %3240 = vmatprep.subr.mxu0 %v3239
        %v3241 = vand.u32 %v227, 4294901760
        %v3242 = vsub.f32 %v227, %v3241
        %3243 = vmatpush1.msra.mxu0 %v3242
        %v3244 = vand.u32 %v236, 4294901760
        %v3245 = vsub.f32 %v236, %v3244
        %3246 = vmatprep.subr.mxu0 %v3245
        %v3247 = vand.u32 %v235, 4294901760
        %v3248 = vsub.f32 %v235, %v3247
        %3249 = vmatpush1.msra.mxu0 %v3248
        %v3250 = vand.u32 %v244, 4294901760
        %v3251 = vsub.f32 %v244, %v3250
        %3252 = vmatprep.subr.mxu0 %v3251
        %v3253 = vand.u32 %v243, 4294901760
        %v3254 = vsub.f32 %v243, %v3253
        %3255 = vmatpush1.msra.mxu0 %v3254
        %v3256 = vand.u32 %v252, 4294901760
        %v3257 = vsub.f32 %v252, %v3256
        %3258 = vmatprep.subr.mxu0 %v3257
        %v3259 = vand.u32 %v251, 4294901760
        %v3260 = vsub.f32 %v251, %v3259
        %3261 = vmatpush1.msra.mxu0 %v3260
        %v3262 = vand.u32 %v260, 4294901760
        %v3263 = vsub.f32 %v260, %v3262
        %3264 = vmatprep.subr.mxu0 %v3263
        %v3265 = vand.u32 %v259, 4294901760
        %v3266 = vsub.f32 %v259, %v3265
        %3267 = vmatpush1.msra.mxu0 %v3266
        %v3268 = vand.u32 %v268, 4294901760
        %v3269 = vsub.f32 %v268, %v3268
        %3270 = vmatprep.subr.mxu0 %v3269
        %v3271 = vand.u32 %v267, 4294901760
        %v3272 = vsub.f32 %v267, %v3271
        %3273 = vmatpush1.msra.mxu0 %v3272
        %v3274 = vand.u32 %v276, 4294901760
        %v3275 = vsub.f32 %v276, %v3274
        %3276 = vmatprep.subr.mxu0 %v3275
        %v3277 = vand.u32 %v275, 4294901760
        %v3278 = vsub.f32 %v275, %v3277
        %3279 = vmatpush1.msra.mxu0 %v3278
        %v3280 = vand.u32 %v284, 4294901760
        %v3281 = vsub.f32 %v284, %v3280
        %3282 = vmatprep.subr.mxu0 %v3281
        %v3283 = vand.u32 %v283, 4294901760
        %v3284 = vsub.f32 %v283, %v3283
        %3285 = vmatpush1.msra.mxu0 %v3284
        %3286 = vmatprep.subr.mxu0 0.0
        %3287 = vmatpush1.msra.mxu0 0.0
        %3288 = vmatprep.subr.mxu0 0.0
        %3289 = vmatpush1.msra.mxu0 0.0
        %3290 = vmatprep.subr.mxu0 0.0
        %3291 = vmatpush1.msra.mxu0 0.0
        %3292 = vmatprep.subr.mxu0 0.0
        %3293 = vmatpush1.msra.mxu0 0.0
        %3294 = vmatprep.subr.mxu0 0.0
        %3295 = vmatpush1.msra.mxu0 0.0
        %3296 = vmatprep.subr.mxu0 0.0
        %3297 = vmatpush1.msra.mxu0 0.0
        %3298 = vmatprep.subr.mxu0 0.0
        %3299 = vmatpush1.msra.mxu0 0.0
        %3300 = vmatprep.subr.mxu0 0.0
        %3301 = vmatpush1.msra.mxu0 0.0
        %3302 = vmatprep.subr.mxu0 0.0
        %3303 = vmatpush1.msra.mxu0 0.0
        %3304 = vmatprep.subr.mxu0 0.0
        %3305 = vmatpush1.msra.mxu0 0.0
        %3306 = vmatprep.subr.mxu0 0.0
        %3307 = vmatpush1.msra.mxu0 0.0
        %3308 = vmatprep.subr.mxu0 0.0
        %3309 = vmatpush1.msra.mxu0 0.0
        %3310 = vmatprep.subr.mxu0 0.0
        %3311 = vmatpush1.msra.mxu0 0.0
        %3312 = vmatprep.subr.mxu0 0.0
        %3313 = vmatpush1.msra.mxu0 0.0
        %3314 = vmatprep.subr.mxu0 0.0
        %3315 = vmatpush1.msra.mxu0 0.0
        %3316 = vmatprep.subr.mxu0 0.0
        %3317 = vmatpush1.msra.mxu0 0.0
        %3318 = vmatprep.mubr.f32.mxu0 0.0
        %v3319 = vand.u32 %v156, 4294901760
        %v3320 = vsub.f32 %v156, %v3319
        %3321 = vmatmul.mubr.f32.gmra.mrb[0].mxu0 %v3320
        %v3322 = vpop.f32.mrb[0].mxu0
        %v3323 = vadd.f32 %v3186, %v3322
        %v3324 = vpop.f32.mrb[0].mxu0
        %v3325 = vadd.f32 %v3188, %v3324
        %3326 = vdwg.mxu0
        %v3327 = vand.u32 %v164, 4294901760
        %3328 = vmatprep.subr.mxu0 %v3327
        %v3329 = vand.u32 %v163, 4294901760
        %3330 = vmatpush1.msra.mxu0 %v3329
        %v3331 = vand.u32 %v172, 4294901760
        %3332 = vmatprep.subr.mxu0 %v3331
        %v3333 = vand.u32 %v171, 4294901760
        %3334 = vmatpush1.msra.mxu0 %v3333
        %v3335 = vand.u32 %v180, 4294901760
        %3336 = vmatprep.subr.mxu0 %v3335
        %v3337 = vand.u32 %v179, 4294901760
        %3338 = vmatpush1.msra.mxu0 %v3337
        %v3339 = vand.u32 %v188, 4294901760
        %3340 = vmatprep.subr.mxu0 %v3339
        %v3341 = vand.u32 %v187, 4294901760
        %3342 = vmatpush1.msra.mxu0 %v3341
        %v3343 = vand.u32 %v196, 4294901760
        %3344 = vmatprep.subr.mxu0 %v3343
        %v3345 = vand.u32 %v195, 4294901760
        %3346 = vmatpush1.msra.mxu0 %v3345
        %v3347 = vand.u32 %v204, 4294901760
        %3348 = vmatprep.subr.mxu0 %v3347
        %v3349 = vand.u32 %v203, 4294901760
        %3350 = vmatpush1.msra.mxu0 %v3349
        %v3351 = vand.u32 %v212, 4294901760
        %3352 = vmatprep.subr.mxu0 %v3351
        %v3353 = vand.u32 %v211, 4294901760
        %3354 = vmatpush1.msra.mxu0 %v3353
        %v3355 = vand.u32 %v220, 4294901760
        %3356 = vmatprep.subr.mxu0 %v3355
        %v3357 = vand.u32 %v219, 4294901760
        %3358 = vmatpush1.msra.mxu0 %v3357
        %v3359 = vand.u32 %v228, 4294901760
        %3360 = vmatprep.subr.mxu0 %v3359
        %v3361 = vand.u32 %v227, 4294901760
        %3362 = vmatpush1.msra.mxu0 %v3361
        %v3363 = vand.u32 %v236, 4294901760
        %3364 = vmatprep.subr.mxu0 %v3363
        %v3365 = vand.u32 %v235, 4294901760
        %3366 = vmatpush1.msra.mxu0 %v3365
        %v3367 = vand.u32 %v244, 4294901760
        %3368 = vmatprep.subr.mxu0 %v3367
        %v3369 = vand.u32 %v243, 4294901760
        %3370 = vmatpush1.msra.mxu0 %v3369
        %v3371 = vand.u32 %v252, 4294901760
        %3372 = vmatprep.subr.mxu0 %v3371
        %v3373 = vand.u32 %v251, 4294901760
        %3374 = vmatpush1.msra.mxu0 %v3373
        %v3375 = vand.u32 %v260, 4294901760
        %3376 = vmatprep.subr.mxu0 %v3375
        %v3377 = vand.u32 %v259, 4294901760
        %3378 = vmatpush1.msra.mxu0 %v3377
        %v3379 = vand.u32 %v268, 4294901760
        %3380 = vmatprep.subr.mxu0 %v3379
        %v3381 = vand.u32 %v267, 4294901760
        %3382 = vmatpush1.msra.mxu0 %v3381
        %v3383 = vand.u32 %v276, 4294901760
        %3384 = vmatprep.subr.mxu0 %v3383
        %v3385 = vand.u32 %v275, 4294901760
        %3386 = vmatpush1.msra.mxu0 %v3385
        %v3387 = vand.u32 %v284, 4294901760
        %3388 = vmatprep.subr.mxu0 %v3387
        %v3389 = vand.u32 %v283, 4294901760
        %3390 = vmatpush1.msra.mxu0 %v3389
        %3391 = vmatprep.subr.mxu0 0.0
        %3392 = vmatpush1.msra.mxu0 0.0
        %3393 = vmatprep.subr.mxu0 0.0
        %3394 = vmatpush1.msra.mxu0 0.0
        %3395 = vmatprep.subr.mxu0 0.0
        %3396 = vmatpush1.msra.mxu0 0.0
        %3397 = vmatprep.subr.mxu0 0.0
        %3398 = vmatpush1.msra.mxu0 0.0
        %3399 = vmatprep.subr.mxu0 0.0
        %3400 = vmatpush1.msra.mxu0 0.0
        %3401 = vmatprep.subr.mxu0 0.0
        %3402 = vmatpush1.msra.mxu0 0.0
        %3403 = vmatprep.subr.mxu0 0.0
        %3404 = vmatpush1.msra.mxu0 0.0
        %3405 = vmatprep.subr.mxu0 0.0
        %3406 = vmatpush1.msra.mxu0 0.0
        %3407 = vmatprep.subr.mxu0 0.0
        %3408 = vmatpush1.msra.mxu0 0.0
        %3409 = vmatprep.subr.mxu0 0.0
        %3410 = vmatpush1.msra.mxu0 0.0
        %3411 = vmatprep.subr.mxu0 0.0
        %3412 = vmatpush1.msra.mxu0 0.0
        %3413 = vmatprep.subr.mxu0 0.0
        %3414 = vmatpush1.msra.mxu0 0.0
        %3415 = vmatprep.subr.mxu0 0.0
        %3416 = vmatpush1.msra.mxu0 0.0
        %3417 = vmatprep.subr.mxu0 0.0
        %3418 = vmatpush1.msra.mxu0 0.0
        %3419 = vmatprep.subr.mxu0 0.0
        %3420 = vmatpush1.msra.mxu0 0.0
        %3421 = vmatprep.subr.mxu0 0.0
        %3422 = vmatpush1.msra.mxu0 0.0
        %3423 = vmatprep.mubr.f32.mxu0 0.0
        %v3424 = vand.u32 %v156, 4294901760
        %v3425 = vsub.f32 %v156, %v3424
        %v3426 = vand.u32 %v3425, 4294901760
        %3427 = vmatmul.mubr.f32.gmra.mrb[0].mxu0 %v3426
        %v3428 = vpop.f32.mrb[0].mxu0
        %v3429 = vadd.f32 %v3323, %v3428
        %v3430 = vpop.f32.mrb[0].mxu0
        %v3431 = vadd.f32 %v3325, %v3430
        %3432 = vdwg.mxu0
        %v3433 = vand.u32 %v164, 4294901760
        %v3434 = vsub.f32 %v164, %v3433
        %v3435 = vand.u32 %v3434, 4294901760
        %3436 = vmatprep.subr.mxu0 %v3435
        %v3437 = vand.u32 %v163, 4294901760
        %v3438 = vsub.f32 %v163, %v3437
        %v3439 = vand.u32 %v3438, 4294901760
        %3440 = vmatpush1.msra.mxu0 %v3439
        %v3441 = vand.u32 %v172, 4294901760
        %v3442 = vsub.f32 %v172, %v3441
        %v3443 = vand.u32 %v3442, 4294901760
        %3444 = vmatprep.subr.mxu0 %v3443
        %v3445 = vand.u32 %v171, 4294901760
        %v3446 = vsub.f32 %v171, %v3445
        %v3447 = vand.u32 %v3446, 4294901760
        %3448 = vmatpush1.msra.mxu0 %v3447
        %v3449 = vand.u32 %v180, 4294901760
        %v3450 = vsub.f32 %v180, %v3449
        %v3451 = vand.u32 %v3450, 4294901760
        %3452 = vmatprep.subr.mxu0 %v3451
        %v3453 = vand.u32 %v179, 4294901760
        %v3454 = vsub.f32 %v179, %v3453
        %v3455 = vand.u32 %v3454, 4294901760
        %3456 = vmatpush1.msra.mxu0 %v3455
        %v3457 = vand.u32 %v188, 4294901760
        %v3458 = vsub.f32 %v188, %v3457
        %v3459 = vand.u32 %v3458, 4294901760
        %3460 = vmatprep.subr.mxu0 %v3459
        %v3461 = vand.u32 %v187, 4294901760
        %v3462 = vsub.f32 %v187, %v3461
        %v3463 = vand.u32 %v3462, 4294901760
        %3464 = vmatpush1.msra.mxu0 %v3463
        %v3465 = vand.u32 %v196, 4294901760
        %v3466 = vsub.f32 %v196, %v3465
        %v3467 = vand.u32 %v3466, 4294901760
        %3468 = vmatprep.subr.mxu0 %v3467
        %v3469 = vand.u32 %v195, 4294901760
        %v3470 = vsub.f32 %v195, %v3469
        %v3471 = vand.u32 %v3470, 4294901760
        %3472 = vmatpush1.msra.mxu0 %v3471
        %v3473 = vand.u32 %v204, 4294901760
        %v3474 = vsub.f32 %v204, %v3473
        %v3475 = vand.u32 %v3474, 4294901760
        %3476 = vmatprep.subr.mxu0 %v3475
        %v3477 = vand.u32 %v203, 4294901760
        %v3478 = vsub.f32 %v203, %v3477
        %v3479 = vand.u32 %v3478, 4294901760
        %3480 = vmatpush1.msra.mxu0 %v3479
        %v3481 = vand.u32 %v212, 4294901760
        %v3482 = vsub.f32 %v212, %v3481
        %v3483 = vand.u32 %v3482, 4294901760
        %3484 = vmatprep.subr.mxu0 %v3483
        %v3485 = vand.u32 %v211, 4294901760
        %v3486 = vsub.f32 %v211, %v3485
        %v3487 = vand.u32 %v3486, 4294901760
        %3488 = vmatpush1.msra.mxu0 %v3487
        %v3489 = vand.u32 %v220, 4294901760
        %v3490 = vsub.f32 %v220, %v3489
        %v3491 = vand.u32 %v3490, 4294901760
        %3492 = vmatprep.subr.mxu0 %v3491
        %v3493 = vand.u32 %v219, 4294901760
        %v3494 = vsub.f32 %v219, %v3493
        %v3495 = vand.u32 %v3494, 4294901760
        %3496 = vmatpush1.msra.mxu0 %v3495
        %v3497 = vand.u32 %v228, 4294901760
        %v3498 = vsub.f32 %v228, %v3497
        %v3499 = vand.u32 %v3498, 4294901760
        %3500 = vmatprep.subr.mxu0 %v3499
        %v3501 = vand.u32 %v227, 4294901760
        %v3502 = vsub.f32 %v227, %v3501
        %v3503 = vand.u32 %v3502, 4294901760
        %3504 = vmatpush1.msra.mxu0 %v3503
        %v3505 = vand.u32 %v236, 4294901760
        %v3506 = vsub.f32 %v236, %v3505
        %v3507 = vand.u32 %v3506, 4294901760
        %3508 = vmatprep.subr.mxu0 %v3507
        %v3509 = vand.u32 %v235, 4294901760
        %v3510 = vsub.f32 %v235, %v3509
        %v3511 = vand.u32 %v3510, 4294901760
        %3512 = vmatpush1.msra.mxu0 %v3511
        %v3513 = vand.u32 %v244, 4294901760
        %v3514 = vsub.f32 %v244, %v3513
        %v3515 = vand.u32 %v3514, 4294901760
        %3516 = vmatprep.subr.mxu0 %v3515
        %v3517 = vand.u32 %v243, 4294901760
        %v3518 = vsub.f32 %v243, %v3517
        %v3519 = vand.u32 %v3518, 4294901760
        %3520 = vmatpush1.msra.mxu0 %v3519
        %v3521 = vand.u32 %v252, 4294901760
        %v3522 = vsub.f32 %v252, %v3521
        %v3523 = vand.u32 %v3522, 4294901760
        %3524 = vmatprep.subr.mxu0 %v3523
        %v3525 = vand.u32 %v251, 4294901760
        %v3526 = vsub.f32 %v251, %v3525
        %v3527 = vand.u32 %v3526, 4294901760
        %3528 = vmatpush1.msra.mxu0 %v3527
        %v3529 = vand.u32 %v260, 4294901760
        %v3530 = vsub.f32 %v260, %v3529
        %v3531 = vand.u32 %v3530, 4294901760
        %3532 = vmatprep.subr.mxu0 %v3531
        %v3533 = vand.u32 %v259, 4294901760
        %v3534 = vsub.f32 %v259, %v3533
        %v3535 = vand.u32 %v3534, 4294901760
        %3536 = vmatpush1.msra.mxu0 %v3535
        %v3537 = vand.u32 %v268, 4294901760
        %v3538 = vsub.f32 %v268, %v3537
        %v3539 = vand.u32 %v3538, 4294901760
        %3540 = vmatprep.subr.mxu0 %v3539
        %v3541 = vand.u32 %v267, 4294901760
        %v3542 = vsub.f32 %v267, %v3541
        %v3543 = vand.u32 %v3542, 4294901760
        %3544 = vmatpush1.msra.mxu0 %v3543
        %v3545 = vand.u32 %v276, 4294901760
        %v3546 = vsub.f32 %v276, %v3545
        %v3547 = vand.u32 %v3546, 4294901760
        %3548 = vmatprep.subr.mxu0 %v3547
        %v3549 = vand.u32 %v275, 4294901760
        %v3550 = vsub.f32 %v275, %v3549
        %v3551 = vand.u32 %v3550, 4294901760
        %3552 = vmatpush1.msra.mxu0 %v3551
        %v3553 = vand.u32 %v284, 4294901760
        %v3554 = vsub.f32 %v284, %v3553
        %v3555 = vand.u32 %v3554, 4294901760
        %3556 = vmatprep.subr.mxu0 %v3555
        %v3557 = vand.u32 %v283, 4294901760
        %v3558 = vsub.f32 %v283, %v3557
        %v3559 = vand.u32 %v3558, 4294901760
        %3560 = vmatpush1.msra.mxu0 %v3559
        %3561 = vmatprep.subr.mxu0 0.0
        %3562 = vmatpush1.msra.mxu0 0.0
        %3563 = vmatprep.subr.mxu0 0.0
        %3564 = vmatpush1.msra.mxu0 0.0
        %3565 = vmatprep.subr.mxu0 0.0
        %3566 = vmatpush1.msra.mxu0 0.0
        %3567 = vmatprep.subr.mxu0 0.0
        %3568 = vmatpush1.msra.mxu0 0.0
        %3569 = vmatprep.subr.mxu0 0.0
        %3570 = vmatpush1.msra.mxu0 0.0
        %3571 = vmatprep.subr.mxu0 0.0
        %3572 = vmatpush1.msra.mxu0 0.0
        %3573 = vmatprep.subr.mxu0 0.0
        %3574 = vmatpush1.msra.mxu0 0.0
        %3575 = vmatprep.subr.mxu0 0.0
        %3576 = vmatpush1.msra.mxu0 0.0
        %3577 = vmatprep.subr.mxu0 0.0
        %3578 = vmatpush1.msra.mxu0 0.0
        %3579 = vmatprep.subr.mxu0 0.0
        %3580 = vmatpush1.msra.mxu0 0.0
        %3581 = vmatprep.subr.mxu0 0.0
        %3582 = vmatpush1.msra.mxu0 0.0
        %3583 = vmatprep.subr.mxu0 0.0
        %3584 = vmatpush1.msra.mxu0 0.0
        %3585 = vmatprep.subr.mxu0 0.0
        %3586 = vmatpush1.msra.mxu0 0.0
        %3587 = vmatprep.subr.mxu0 0.0
        %3588 = vmatpush1.msra.mxu0 0.0
        %3589 = vmatprep.subr.mxu0 0.0
        %3590 = vmatpush1.msra.mxu0 0.0
        %3591 = vmatprep.subr.mxu0 0.0
        %3592 = vmatpush1.msra.mxu0 0.0
        %3593 = vmatprep.mubr.f32.mxu0 0.0
        %v3594 = vand.u32 %v156, 4294901760
        %3595 = vmatmul.mubr.f32.gmra.mrb[0].mxu0 %v3594
        %v3596 = vpop.f32.mrb[0].mxu0
        %v3597 = vadd.f32 %v3429, %v3596
        %v3598 = vpop.f32.mrb[0].mxu0
        %v3599 = vadd.f32 %v3431, %v3598
        %3600 = vdwg.mxu0
        %v3601 = vand.u32 %v164, 4294901760
        %3602 = vmatprep.subr.mxu0 %v3601
        %v3603 = vand.u32 %v163, 4294901760
        %3604 = vmatpush1.msra.mxu0 %v3603
        %v3605 = vand.u32 %v172, 4294901760
        %3606 = vmatprep.subr.mxu0 %v3605
        %v3607 = vand.u32 %v171, 4294901760
        %3608 = vmatpush1.msra.mxu0 %v3607
        %v3609 = vand.u32 %v180, 4294901760
        %3610 = vmatprep.subr.mxu0 %v3609
        %v3611 = vand.u32 %v179, 4294901760
        %3612 = vmatpush1.msra.mxu0 %v3611
        %v3613 = vand.u32 %v188, 4294901760
        %3614 = vmatprep.subr.mxu0 %v3613
        %v3615 = vand.u32 %v187, 4294901760
        %3616 = vmatpush1.msra.mxu0 %v3615
        %v3617 = vand.u32 %v196, 4294901760
        %3618 = vmatprep.subr.mxu0 %v3617
        %v3619 = vand.u32 %v195, 4294901760
        %3620 = vmatpush1.msra.mxu0 %v3619
        %v3621 = vand.u32 %v204, 4294901760
        %3622 = vmatprep.subr.mxu0 %v3621
        %v3623 = vand.u32 %v203, 4294901760
        %3624 = vmatpush1.msra.mxu0 %v3623
        %v3625 = vand.u32 %v212, 4294901760
        %3626 = vmatprep.subr.mxu0 %v3625
        %v3627 = vand.u32 %v211, 4294901760
        %3628 = vmatpush1.msra.mxu0 %v3627
        %v3629 = vand.u32 %v220, 4294901760
        %3630 = vmatprep.subr.mxu0 %v3629
        %v3631 = vand.u32 %v219, 4294901760
        %3632 = vmatpush1.msra.mxu0 %v3631
        %v3633 = vand.u32 %v228, 4294901760
        %3634 = vmatprep.subr.mxu0 %v3633
        %v3635 = vand.u32 %v227, 4294901760
        %3636 = vmatpush1.msra.mxu0 %v3635
        %v3637 = vand.u32 %v236, 4294901760
        %3638 = vmatprep.subr.mxu0 %v3637
        %v3639 = vand.u32 %v235, 4294901760
        %3640 = vmatpush1.msra.mxu0 %v3639
        %v3641 = vand.u32 %v244, 4294901760
        %3642 = vmatprep.subr.mxu0 %v3641
        %v3643 = vand.u32 %v243, 4294901760
        %3644 = vmatpush1.msra.mxu0 %v3643
        %v3645 = vand.u32 %v252, 4294901760
        %3646 = vmatprep.subr.mxu0 %v3645
        %v3647 = vand.u32 %v251, 4294901760
        %3648 = vmatpush1.msra.mxu0 %v3647
        %v3649 = vand.u32 %v260, 4294901760
        %3650 = vmatprep.subr.mxu0 %v3649
        %v3651 = vand.u32 %v259, 4294901760
        %3652 = vmatpush1.msra.mxu0 %v3651
        %v3653 = vand.u32 %v268, 4294901760
        %3654 = vmatprep.subr.mxu0 %v3653
        %v3655 = vand.u32 %v267, 4294901760
        %3656 = vmatpush1.msra.mxu0 %v3655
        %v3657 = vand.u32 %v276, 4294901760
        %3658 = vmatprep.subr.mxu0 %v3657
        %v3659 = vand.u32 %v275, 4294901760
        %3660 = vmatpush1.msra.mxu0 %v3659
        %v3661 = vand.u32 %v284, 4294901760
        %3662 = vmatprep.subr.mxu0 %v3661
        %v3663 = vand.u32 %v283, 4294901760
        %3664 = vmatpush1.msra.mxu0 %v3663
        %3665 = vmatprep.subr.mxu0 0.0
        %3666 = vmatpush1.msra.mxu0 0.0
        %3667 = vmatprep.subr.mxu0 0.0
        %3668 = vmatpush1.msra.mxu0 0.0
        %3669 = vmatprep.subr.mxu0 0.0
        %3670 = vmatpush1.msra.mxu0 0.0
        %3671 = vmatprep.subr.mxu0 0.0
        %3672 = vmatpush1.msra.mxu0 0.0
        %3673 = vmatprep.subr.mxu0 0.0
        %3674 = vmatpush1.msra.mxu0 0.0
        %3675 = vmatprep.subr.mxu0 0.0
        %3676 = vmatpush1.msra.mxu0 0.0
        %3677 = vmatprep.subr.mxu0 0.0
        %3678 = vmatpush1.msra.mxu0 0.0
        %3679 = vmatprep.subr.mxu0 0.0
        %3680 = vmatpush1.msra.mxu0 0.0
        %3681 = vmatprep.subr.mxu0 0.0
        %3682 = vmatpush1.msra.mxu0 0.0
        %3683 = vmatprep.subr.mxu0 0.0
        %3684 = vmatpush1.msra.mxu0 0.0
        %3685 = vmatprep.subr.mxu0 0.0
        %3686 = vmatpush1.msra.mxu0 0.0
        %3687 = vmatprep.subr.mxu0 0.0
        %3688 = vmatpush1.msra.mxu0 0.0
        %3689 = vmatprep.subr.mxu0 0.0
        %3690 = vmatpush1.msra.mxu0 0.0
        %3691 = vmatprep.subr.mxu0 0.0
        %3692 = vmatpush1.msra.mxu0 0.0
        %3693 = vmatprep.subr.mxu0 0.0
        %3694 = vmatpush1.msra.mxu0 0.0
        %3695 = vmatprep.subr.mxu0 0.0
        %3696 = vmatpush1.msra.mxu0 0.0
        %3697 = vmatprep.mubr.f32.mxu0 0.0
        %v3698 = vand.u32 %v156, 4294901760
        %3699 = vmatmul.mubr.f32.gmra.mrb[0].mxu0 %v3698
        %v3700 = vpop.f32.mrb[0].mxu0
        %v3701 = vadd.f32 %v3597, %v3700
        %v3702 = vpop.f32.mrb[0].mxu0
        %v3703 = vadd.f32 %v3599, %v3702
        %3704 = vdwg.mxu0
        %v3705 = vand.u32 2147483647, %v1136
        %vm3706 = vcmp.le.f32.partialorder %v3705, 0.7853982
        %vm3707 = vcmp.lt.s32.totalorder %v1136, 0
        %v3708 = vand.u32 %v1136, 2139095040
        %v3709 = vshrl.u32 %v3708, 23
        %v3710 = vsub.s32 %v3709, 127
        %v3711 = vand.u32 2147483647, %v1136
        %v3712 = vand.u32 %v3711, 8388607
        %v3713 = vor.u32 %v3712, 8388608
        %v3714 = vsub.s32 0, %v3713
        %v3715 = vadd.s32 %v3710, 1
        %vm3716 = vcmp.gt.s32.totalorder %v3715, 0
        %v3717 = vsel %vm3716, %v3715, 0
        %v3718 = vshrl.u32 %v3717, 5
        %v3719 = vand.u32 %v3717, 31
        %v3720 = vsub.s32 32, %v3719
        %v3721 = vshrl.u32 683565275, %v3720
        %v3722 = vshll.u32 683565275, %v3719
        %v3723 = vshrl.u32 2475754826, %v3720
        %v3724 = vor.u32 %v3722, %v3723
        %v3725 = vshll.u32 2475754826, %v3719
        %v3726 = vshrl.u32 2131351028, %v3720
        %v3727 = vor.u32 %v3725, %v3726
        %v3728 = vshll.u32 2131351028, %v3719
        %v3729 = vshrl.u32 2102212464, %v3720
        %v3730 = vor.u32 %v3728, %v3729
        %v3731 = vshll.u32 2102212464, %v3719
        %v3732 = vshrl.u32 920167782, %v3720
        %v3733 = vor.u32 %v3731, %v3732
        %v3734 = vshll.u32 920167782, %v3719
        %v3735 = vshrl.u32 1326507024, %v3720
        %v3736 = vor.u32 %v3734, %v3735
        %vm3737 = vcmp.lt.s32.totalorder %v3718, 1
        %vm3738 = vcmp.lt.s32.totalorder %v3718, 2
        %vm3739 = vcmp.lt.s32.totalorder %v3718, 3
        %vm3740 = vcmp.lt.s32.totalorder %v3718, 4
        %v3741 = vsel %vm3737, %v3721, %v3724
        %v3742 = vsel %vm3740, %v3730, 2102212464
        %v3743 = vsel %vm3739, %v3727, %v3742
        %v3744 = vsel %vm3738, %v3741, %v3743
        %v3745 = vsel %vm3737, %v3724, %v3727
        %v3746 = vsel %vm3740, %v3733, 920167782
        %v3747 = vsel %vm3739, %v3730, %v3746
        %v3748 = vsel %vm3738, %v3745, %v3747
        %v3749 = vsel %vm3737, %v3727, %v3730
        %v3750 = vsel %vm3740, %v3736, 1326507024
        %v3751 = vsel %vm3739, %v3733, %v3750
        %v3752 = vsel %vm3738, %v3749, %v3751
        %v3753 = vshll.u32 %v3713, 8
        %v3754 = vmul.u32.u64.compose %v3753, %v3752
        %v3755 = vextract.low.u32 %v3754
        %v3756 = vextract.high.u32 %v3754
        %v3757 = vmul.u32.u64.compose %v3753, %v3748
        %v3758 = vextract.low.u32 %v3757
        %v3759 = vextract.high.u32 %v3757
        %v3760 = vmul.u32 %v3753, %v3744
        %v3761 = vadd.s32 %v3756, %v3758
        %vm3762 = vc.u32 %v3756, %v3758
        %v3763 = vadd.s32 %v3759, 1
        %v3764 = vsel %vm3762, %v3763, %v3759
        %v3765 = vadd.s32 %v3760, %v3764
        %v3766 = vadd.s32 %v3765, 536870912
        %v3767 = vshrl.u32 %v3766, 30
        %v3768 = vshll.u32 %v3767, 30
        %v3769 = vsub.s32 %v3765, %v3768
        %vm3770 = vcmp.lt.s32.totalorder %v3769, 0
        %v3771 = vsub.s32 0, %v3769
        %v3772 = vsel %vm3770, %v3771, %v3769
        %v3773 = vclz %v3772
        %v3774 = vsub.s32 %v3773, 2
        %vm3775 = vcmp.gt.s32.totalorder 0, %v3774
        %v3776 = vsel %vm3775, 0, %v3774
        %v3777 = vsub.s32 32, %v3776
        %v3778 = vshll.u32 %v3769, %v3776
        %v3779 = vshrl.u32 %v3761, %v3777
        %v3780 = vor.u32 %v3778, %v3779
        %v3781 = vsub.s32 4294967266, %v3776
        %v3782 = vadd.s32 %v3781, 127
        %v3783 = vshll.u32 %v3782, 23
        %v3784 = vor.u32 4788187, %v3783
        %v3785 = vand.u32 2147483647, %v3784
        %v3787 = vcvt.s32.f32 %v3780
        %v3788 = vmul.f32 %v3787, %v3785
        %v3789 = vxor.u32 %v3788, 2147483648
        %v3790 = vsel %vm3707, %v3789, %v3788
        %v3791 = vsub.s32 4, %v3767
        %v3792 = vsel %vm3707, %v3791, %v3767
        %v3793 = vsel %vm3706, %v1136, %v3790
        %v3794 = vsel %vm3706, 0, %v3792
        %v3795 = vcosq.f32.pop %v3793
        %v3796 = vsinq.f32.pop %v3793
        %vm3797 = vweird.f32 %v1136
        %v3798 = vadd.s32 %v3794, 3
        %v3799 = vand.u32 %v3798, 3
        %vm3800 = vcmp.lt.s32.totalorder %v3799, 2
        %vm3801 = vcmp.eq.s32.totalorder %v3799, 0
        %v3802 = vxor.u32 %v3796, 2147483648
        %v3803 = vsel %vm3801, %v3795, %v3802
        %vm3804 = vcmp.eq.s32.totalorder %v3799, 2
        %v3805 = vxor.u32 %v3795, 2147483648
        %v3806 = vsel %vm3804, %v3805, %v3796
        %v3807 = vsel %vm3800, %v3803, %v3806
        %v3808 = vsel %vm3797, nan, %v3807
        %v3809 = vand.u32 2147483647, %v1138
        %vm3810 = vcmp.le.f32.partialorder %v3809, 0.7853982
        %vm3811 = vcmp.lt.s32.totalorder %v1138, 0
        %v3812 = vand.u32 %v1138, 2139095040
        %v3813 = vshrl.u32 %v3812, 23
        %v3814 = vsub.s32 %v3813, 127
        %v3815 = vand.u32 2147483647, %v1138
        %v3816 = vand.u32 %v3815, 8388607
        %v3817 = vor.u32 %v3816, 8388608
        %v3818 = vsub.s32 0, %v3817
        %v3819 = vadd.s32 %v3814, 1
        %vm3820 = vcmp.gt.s32.totalorder %v3819, 0
        %v3821 = vsel %vm3820, %v3819, 0
        %v3822 = vshrl.u32 %v3821, 5
        %v3823 = vand.u32 %v3821, 31
        %v3824 = vsub.s32 32, %v3823
        %v3825 = vshrl.u32 683565275, %v3824
        %v3826 = vshll.u32 683565275, %v3823
        %v3827 = vshrl.u32 2475754826, %v3824
        %v3828 = vor.u32 %v3826, %v3827
        %v3829 = vshll.u32 2475754826, %v3823
        %v3830 = vshrl.u32 2131351028, %v3824
        %v3831 = vor.u32 %v3829, %v3830
        %v3832 = vshll.u32 2131351028, %v3823
        %v3833 = vshrl.u32 2102212464, %v3824
        %v3834 = vor.u32 %v3832, %v3833
        %v3835 = vshll.u32 2102212464, %v3823
        %v3836 = vshrl.u32 920167782, %v3824
        %v3837 = vor.u32 %v3835, %v3836
        %v3838 = vshll.u32 920167782, %v3823
        %v3839 = vshrl.u32 1326507024, %v3824
        %v3840 = vor.u32 %v3838, %v3839
        %vm3841 = vcmp.lt.s32.totalorder %v3822, 1
        %vm3842 = vcmp.lt.s32.totalorder %v3822, 2
        %vm3843 = vcmp.lt.s32.totalorder %v3822, 3
        %vm3844 = vcmp.lt.s32.totalorder %v3822, 4
        %v3845 = vsel %vm3841, %v3825, %v3828
        %v3846 = vsel %vm3844, %v3834, 2102212464
        %v3847 = vsel %vm3843, %v3831, %v3846
        %v3848 = vsel %vm3842, %v3845, %v3847
        %v3849 = vsel %vm3841, %v3828, %v3831
        %v3850 = vsel %vm3844, %v3837, 920167782
        %v3851 = vsel %vm3843, %v3834, %v3850
        %v3852 = vsel %vm3842, %v3849, %v3851
        %v3853 = vsel %vm3841, %v3831, %v3834
        %v3854 = vsel %vm3844, %v3840, 1326507024
        %v3855 = vsel %vm3843, %v3837, %v3854
        %v3856 = vsel %vm3842, %v3853, %v3855
        %v3857 = vshll.u32 %v3817, 8
        %v3858 = vmul.u32.u64.compose %v3857, %v3856
        %v3859 = vextract.low.u32 %v3858
        %v3860 = vextract.high.u32 %v3858
        %v3861 = vmul.u32.u64.compose %v3857, %v3852
        %v3862 = vextract.low.u32 %v3861
        %v3863 = vextract.high.u32 %v3861
        %v3864 = vmul.u32 %v3857, %v3848
        %v3865 = vadd.s32 %v3860, %v3862
        %vm3866 = vc.u32 %v3860, %v3862
        %v3867 = vadd.s32 %v3863, 1
        %v3868 = vsel %vm3866, %v3867, %v3863
        %v3869 = vadd.s32 %v3864, %v3868
        %v3870 = vadd.s32 %v3869, 536870912
        %v3871 = vshrl.u32 %v3870, 30
        %v3872 = vshll.u32 %v3871, 30
        %v3873 = vsub.s32 %v3869, %v3872
        %vm3874 = vcmp.lt.s32.totalorder %v3873, 0
        %v3875 = vsub.s32 0, %v3873
        %v3876 = vsel %vm3874, %v3875, %v3873
        %v3877 = vclz %v3876
        %v3878 = vsub.s32 %v3877, 2
        %vm3879 = vcmp.gt.s32.totalorder 0, %v3878
        %v3880 = vsel %vm3879, 0, %v3878
        %v3881 = vsub.s32 32, %v3880
        %v3882 = vshll.u32 %v3873, %v3880
        %v3883 = vshrl.u32 %v3865, %v3881
        %v3884 = vor.u32 %v3882, %v3883
        %v3885 = vsub.s32 4294967266, %v3880
        %v3886 = vadd.s32 %v3885, 127
        %v3887 = vshll.u32 %v3886, 23
        %v3888 = vor.u32 4788187, %v3887
        %v3889 = vand.u32 2147483647, %v3888
        %v3891 = vcvt.s32.f32 %v3884
        %v3892 = vmul.f32 %v3891, %v3889
        %v3893 = vxor.u32 %v3892, 2147483648
        %v3894 = vsel %vm3811, %v3893, %v3892
        %v3895 = vsub.s32 4, %v3871
        %v3896 = vsel %vm3811, %v3895, %v3871
        %v3897 = vsel %vm3810, %v1138, %v3894
        %v3898 = vsel %vm3810, 0, %v3896
        %v3899 = vcosq.f32.pop %v3897
        %v3900 = vsinq.f32.pop %v3897
        %vm3901 = vweird.f32 %v1138
        %v3902 = vadd.s32 %v3898, 3
        %v3903 = vand.u32 %v3902, 3
        %vm3904 = vcmp.lt.s32.totalorder %v3903, 2
        %vm3905 = vcmp.eq.s32.totalorder %v3903, 0
        %v3906 = vxor.u32 %v3900, 2147483648
        %v3907 = vsel %vm3905, %v3899, %v3906
        %vm3908 = vcmp.eq.s32.totalorder %v3903, 2
        %v3909 = vxor.u32 %v3899, 2147483648
        %v3910 = vsel %vm3908, %v3909, %v3900
        %v3911 = vsel %vm3904, %v3907, %v3910
        %v3912 = vsel %vm3901, nan, %v3911
        %v3913 = vand.u32 2147483647, %v1991
        %vm3914 = vcmp.le.f32.partialorder %v3913, 0.7853982
        %vm3915 = vcmp.lt.s32.totalorder %v1991, 0
        %v3916 = vand.u32 %v1991, 2139095040
        %v3917 = vshrl.u32 %v3916, 23
        %v3918 = vsub.s32 %v3917, 127
        %v3919 = vand.u32 2147483647, %v1991
        %v3920 = vand.u32 %v3919, 8388607
        %v3921 = vor.u32 %v3920, 8388608
        %v3922 = vsub.s32 0, %v3921
        %v3923 = vadd.s32 %v3918, 1
        %vm3924 = vcmp.gt.s32.totalorder %v3923, 0
        %v3925 = vsel %vm3924, %v3923, 0
        %v3926 = vshrl.u32 %v3925, 5
        %v3927 = vand.u32 %v3925, 31
        %v3928 = vsub.s32 32, %v3927
        %v3929 = vshrl.u32 683565275, %v3928
        %v3930 = vshll.u32 683565275, %v3927
        %v3931 = vshrl.u32 2475754826, %v3928
        %v3932 = vor.u32 %v3930, %v3931
        %v3933 = vshll.u32 2475754826, %v3927
        %v3934 = vshrl.u32 2131351028, %v3928
        %v3935 = vor.u32 %v3933, %v3934
        %v3936 = vshll.u32 2131351028, %v3927
        %v3937 = vshrl.u32 2102212464, %v3928
        %v3938 = vor.u32 %v3936, %v3937
        %v3939 = vshll.u32 2102212464, %v3927
        %v3940 = vshrl.u32 920167782, %v3928
        %v3941 = vor.u32 %v3939, %v3940
        %v3942 = vshll.u32 920167782, %v3927
        %v3943 = vshrl.u32 1326507024, %v3928
        %v3944 = vor.u32 %v3942, %v3943
        %vm3945 = vcmp.lt.s32.totalorder %v3926, 1
        %vm3946 = vcmp.lt.s32.totalorder %v3926, 2
        %vm3947 = vcmp.lt.s32.totalorder %v3926, 3
        %vm3948 = vcmp.lt.s32.totalorder %v3926, 4
        %v3949 = vsel %vm3945, %v3929, %v3932
        %v3950 = vsel %vm3948, %v3938, 2102212464
        %v3951 = vsel %vm3947, %v3935, %v3950
        %v3952 = vsel %vm3946, %v3949, %v3951
        %v3953 = vsel %vm3945, %v3932, %v3935
        %v3954 = vsel %vm3948, %v3941, 920167782
        %v3955 = vsel %vm3947, %v3938, %v3954
        %v3956 = vsel %vm3946, %v3953, %v3955
        %v3957 = vsel %vm3945, %v3935, %v3938
        %v3958 = vsel %vm3948, %v3944, 1326507024
        %v3959 = vsel %vm3947, %v3941, %v3958
        %v3960 = vsel %vm3946, %v3957, %v3959
        %v3961 = vshll.u32 %v3921, 8
        %v3962 = vmul.u32.u64.compose %v3961, %v3960
        %v3963 = vextract.low.u32 %v3962
        %v3964 = vextract.high.u32 %v3962
        %v3965 = vmul.u32.u64.compose %v3961, %v3956
        %v3966 = vextract.low.u32 %v3965
        %v3967 = vextract.high.u32 %v3965
        %v3968 = vmul.u32 %v3961, %v3952
        %v3969 = vadd.s32 %v3964, %v3966
        %vm3970 = vc.u32 %v3964, %v3966
        %v3971 = vadd.s32 %v3967, 1
        %v3972 = vsel %vm3970, %v3971, %v3967
        %v3973 = vadd.s32 %v3968, %v3972
        %v3974 = vadd.s32 %v3973, 536870912
        %v3975 = vshrl.u32 %v3974, 30
        %v3976 = vshll.u32 %v3975, 30
        %v3977 = vsub.s32 %v3973, %v3976
        %vm3978 = vcmp.lt.s32.totalorder %v3977, 0
        %v3979 = vsub.s32 0, %v3977
        %v3980 = vsel %vm3978, %v3979, %v3977
        %v3981 = vclz %v3980
        %v3982 = vsub.s32 %v3981, 2
        %vm3983 = vcmp.gt.s32.totalorder 0, %v3982
        %v3984 = vsel %vm3983, 0, %v3982
        %v3985 = vsub.s32 32, %v3984
        %v3986 = vshll.u32 %v3977, %v3984
        %v3987 = vshrl.u32 %v3969, %v3985
        %v3988 = vor.u32 %v3986, %v3987
        %v3989 = vsub.s32 4294967266, %v3984
        %v3990 = vadd.s32 %v3989, 127
        %v3991 = vshll.u32 %v3990, 23
        %v3992 = vor.u32 4788187, %v3991
        %v3993 = vand.u32 2147483647, %v3992
        %v3995 = vcvt.s32.f32 %v3988
        %v3996 = vmul.f32 %v3995, %v3993
        %v3997 = vxor.u32 %v3996, 2147483648
        %v3998 = vsel %vm3915, %v3997, %v3996
        %v3999 = vsub.s32 4, %v3975
        %v4000 = vsel %vm3915, %v3999, %v3975
        %v4001 = vsel %vm3914, %v1991, %v3998
        %v4002 = vsel %vm3914, 0, %v4000
        %v4003 = vcosq.f32.pop %v4001
        %v4004 = vsinq.f32.pop %v4001
        %vm4005 = vweird.f32 %v1991
        %v4006 = vadd.s32 %v4002, 3
        %v4007 = vand.u32 %v4006, 3
        %vm4008 = vcmp.lt.s32.totalorder %v4007, 2
        %vm4009 = vcmp.eq.s32.totalorder %v4007, 0
        %v4010 = vxor.u32 %v4004, 2147483648
        %v4011 = vsel %vm4009, %v4003, %v4010
        %vm4012 = vcmp.eq.s32.totalorder %v4007, 2
        %v4013 = vxor.u32 %v4003, 2147483648
        %v4014 = vsel %vm4012, %v4013, %v4004
        %v4015 = vsel %vm4008, %v4011, %v4014
        %v4016 = vsel %vm4005, nan, %v4015
        %v4017 = vand.u32 2147483647, %v1993
        %vm4018 = vcmp.le.f32.partialorder %v4017, 0.7853982
        %vm4019 = vcmp.lt.s32.totalorder %v1993, 0
        %v4020 = vand.u32 %v1993, 2139095040
        %v4021 = vshrl.u32 %v4020, 23
        %v4022 = vsub.s32 %v4021, 127
        %v4023 = vand.u32 2147483647, %v1993
        %v4024 = vand.u32 %v4023, 8388607
        %v4025 = vor.u32 %v4024, 8388608
        %v4026 = vsub.s32 0, %v4025
        %v4027 = vadd.s32 %v4022, 1
        %vm4028 = vcmp.gt.s32.totalorder %v4027, 0
        %v4029 = vsel %vm4028, %v4027, 0
        %v4030 = vshrl.u32 %v4029, 5
        %v4031 = vand.u32 %v4029, 31
        %v4032 = vsub.s32 32, %v4031
        %v4033 = vshrl.u32 683565275, %v4032
        %v4034 = vshll.u32 683565275, %v4031
        %v4035 = vshrl.u32 2475754826, %v4032
        %v4036 = vor.u32 %v4034, %v4035
        %v4037 = vshll.u32 2475754826, %v4031
        %v4038 = vshrl.u32 2131351028, %v4032
        %v4039 = vor.u32 %v4037, %v4038
        %v4040 = vshll.u32 2131351028, %v4031
        %v4041 = vshrl.u32 2102212464, %v4032
        %v4042 = vor.u32 %v4040, %v4041
        %v4043 = vshll.u32 2102212464, %v4031
        %v4044 = vshrl.u32 920167782, %v4032
        %v4045 = vor.u32 %v4043, %v4044
        %v4046 = vshll.u32 920167782, %v4031
        %v4047 = vshrl.u32 1326507024, %v4032
        %v4048 = vor.u32 %v4046, %v4047
        %vm4049 = vcmp.lt.s32.totalorder %v4030, 1
        %vm4050 = vcmp.lt.s32.totalorder %v4030, 2
        %vm4051 = vcmp.lt.s32.totalorder %v4030, 3
        %vm4052 = vcmp.lt.s32.totalorder %v4030, 4
        %v4053 = vsel %vm4049, %v4033, %v4036
        %v4054 = vsel %vm4052, %v4042, 2102212464
        %v4055 = vsel %vm4051, %v4039, %v4054
        %v4056 = vsel %vm4050, %v4053, %v4055
        %v4057 = vsel %vm4049, %v4036, %v4039
        %v4058 = vsel %vm4052, %v4045, 920167782
        %v4059 = vsel %vm4051, %v4042, %v4058
        %v4060 = vsel %vm4050, %v4057, %v4059
        %v4061 = vsel %vm4049, %v4039, %v4042
        %v4062 = vsel %vm4052, %v4048, 1326507024
        %v4063 = vsel %vm4051, %v4045, %v4062
        %v4064 = vsel %vm4050, %v4061, %v4063
        %v4065 = vshll.u32 %v4025, 8
        %v4066 = vmul.u32.u64.compose %v4065, %v4064
        %v4067 = vextract.low.u32 %v4066
        %v4068 = vextract.high.u32 %v4066
        %v4069 = vmul.u32.u64.compose %v4065, %v4060
        %v4070 = vextract.low.u32 %v4069
        %v4071 = vextract.high.u32 %v4069
        %v4072 = vmul.u32 %v4065, %v4056
        %v4073 = vadd.s32 %v4068, %v4070
        %vm4074 = vc.u32 %v4068, %v4070
        %v4075 = vadd.s32 %v4071, 1
        %v4076 = vsel %vm4074, %v4075, %v4071
        %v4077 = vadd.s32 %v4072, %v4076
        %v4078 = vadd.s32 %v4077, 536870912
        %v4079 = vshrl.u32 %v4078, 30
        %v4080 = vshll.u32 %v4079, 30
        %v4081 = vsub.s32 %v4077, %v4080
        %vm4082 = vcmp.lt.s32.totalorder %v4081, 0
        %v4083 = vsub.s32 0, %v4081
        %v4084 = vsel %vm4082, %v4083, %v4081
        %v4085 = vclz %v4084
        %v4086 = vsub.s32 %v4085, 2
        %vm4087 = vcmp.gt.s32.totalorder 0, %v4086
        %v4088 = vsel %vm4087, 0, %v4086
        %v4089 = vsub.s32 32, %v4088
        %v4090 = vshll.u32 %v4081, %v4088
        %v4091 = vshrl.u32 %v4073, %v4089
        %v4092 = vor.u32 %v4090, %v4091
        %v4093 = vsub.s32 4294967266, %v4088
        %v4094 = vadd.s32 %v4093, 127
        %v4095 = vshll.u32 %v4094, 23
        %v4096 = vor.u32 4788187, %v4095
        %v4097 = vand.u32 2147483647, %v4096
        %v4099 = vcvt.s32.f32 %v4092
        %v4100 = vmul.f32 %v4099, %v4097
        %v4101 = vxor.u32 %v4100, 2147483648
        %v4102 = vsel %vm4019, %v4101, %v4100
        %v4103 = vsub.s32 4, %v4079
        %v4104 = vsel %vm4019, %v4103, %v4079
        %v4105 = vsel %vm4018, %v1993, %v4102
        %v4106 = vsel %vm4018, 0, %v4104
        %v4107 = vcosq.f32.pop %v4105
        %v4108 = vsinq.f32.pop %v4105
        %vm4109 = vweird.f32 %v1993
        %v4110 = vadd.s32 %v4106, 3
        %v4111 = vand.u32 %v4110, 3
        %vm4112 = vcmp.lt.s32.totalorder %v4111, 2
        %vm4113 = vcmp.eq.s32.totalorder %v4111, 0
        %v4114 = vxor.u32 %v4108, 2147483648
        %v4115 = vsel %vm4113, %v4107, %v4114
        %vm4116 = vcmp.eq.s32.totalorder %v4111, 2
        %v4117 = vxor.u32 %v4107, 2147483648
        %v4118 = vsel %vm4116, %v4117, %v4108
        %v4119 = vsel %vm4112, %v4115, %v4118
        %v4120 = vsel %vm4109, nan, %v4119
        %v4121 = vand.u32 2147483647, %v2846
        %vm4122 = vcmp.le.f32.partialorder %v4121, 0.7853982
        %vm4123 = vcmp.lt.s32.totalorder %v2846, 0
        %v4124 = vand.u32 %v2846, 2139095040
        %v4125 = vshrl.u32 %v4124, 23
        %v4126 = vsub.s32 %v4125, 127
        %v4127 = vand.u32 2147483647, %v2846
        %v4128 = vand.u32 %v4127, 8388607
        %v4129 = vor.u32 %v4128, 8388608
        %v4130 = vsub.s32 0, %v4129
        %v4131 = vadd.s32 %v4126, 1
        %vm4132 = vcmp.gt.s32.totalorder %v4131, 0
        %v4133 = vsel %vm4132, %v4131, 0
        %v4134 = vshrl.u32 %v4133, 5
        %v4135 = vand.u32 %v4133, 31
        %v4136 = vsub.s32 32, %v4135
        %v4137 = vshrl.u32 683565275, %v4136
        %v4138 = vshll.u32 683565275, %v4135
        %v4139 = vshrl.u32 2475754826, %v4136
        %v4140 = vor.u32 %v4138, %v4139
        %v4141 = vshll.u32 2475754826, %v4135
        %v4142 = vshrl.u32 2131351028, %v4136
        %v4143 = vor.u32 %v4141, %v4142
        %v4144 = vshll.u32 2131351028, %v4135
        %v4145 = vshrl.u32 2102212464, %v4136
        %v4146 = vor.u32 %v4144, %v4145
        %v4147 = vshll.u32 2102212464, %v4135
        %v4148 = vshrl.u32 920167782, %v4136
        %v4149 = vor.u32 %v4147, %v4148
        %v4150 = vshll.u32 920167782, %v4135
        %v4151 = vshrl.u32 1326507024, %v4136
        %v4152 = vor.u32 %v4150, %v4151
        %vm4153 = vcmp.lt.s32.totalorder %v4134, 1
        %vm4154 = vcmp.lt.s32.totalorder %v4134, 2
        %vm4155 = vcmp.lt.s32.totalorder %v4134, 3
        %vm4156 = vcmp.lt.s32.totalorder %v4134, 4
        %v4157 = vsel %vm4153, %v4137, %v4140
        %v4158 = vsel %vm4156, %v4146, 2102212464
        %v4159 = vsel %vm4155, %v4143, %v4158
        %v4160 = vsel %vm4154, %v4157, %v4159
        %v4161 = vsel %vm4153, %v4140, %v4143
        %v4162 = vsel %vm4156, %v4149, 920167782
        %v4163 = vsel %vm4155, %v4146, %v4162
        %v4164 = vsel %vm4154, %v4161, %v4163
        %v4165 = vsel %vm4153, %v4143, %v4146
        %v4166 = vsel %vm4156, %v4152, 1326507024
        %v4167 = vsel %vm4155, %v4149, %v4166
        %v4168 = vsel %vm4154, %v4165, %v4167
        %v4169 = vshll.u32 %v4129, 8
        %v4170 = vmul.u32.u64.compose %v4169, %v4168
        %v4171 = vextract.low.u32 %v4170
        %v4172 = vextract.high.u32 %v4170
        %v4173 = vmul.u32.u64.compose %v4169, %v4164
        %v4174 = vextract.low.u32 %v4173
        %v4175 = vextract.high.u32 %v4173
        %v4176 = vmul.u32 %v4169, %v4160
        %v4177 = vadd.s32 %v4172, %v4174
        %vm4178 = vc.u32 %v4172, %v4174
        %v4179 = vadd.s32 %v4175, 1
        %v4180 = vsel %vm4178, %v4179, %v4175
        %v4181 = vadd.s32 %v4176, %v4180
        %v4182 = vadd.s32 %v4181, 536870912
        %v4183 = vshrl.u32 %v4182, 30
        %v4184 = vshll.u32 %v4183, 30
        %v4185 = vsub.s32 %v4181, %v4184
        %vm4186 = vcmp.lt.s32.totalorder %v4185, 0
        %v4187 = vsub.s32 0, %v4185
        %v4188 = vsel %vm4186, %v4187, %v4185
        %v4189 = vclz %v4188
        %v4190 = vsub.s32 %v4189, 2
        %vm4191 = vcmp.gt.s32.totalorder 0, %v4190
        %v4192 = vsel %vm4191, 0, %v4190
        %v4193 = vsub.s32 32, %v4192
        %v4194 = vshll.u32 %v4185, %v4192
        %v4195 = vshrl.u32 %v4177, %v4193
        %v4196 = vor.u32 %v4194, %v4195
        %v4197 = vsub.s32 4294967266, %v4192
        %v4198 = vadd.s32 %v4197, 127
        %v4199 = vshll.u32 %v4198, 23
        %v4200 = vor.u32 4788187, %v4199
        %v4201 = vand.u32 2147483647, %v4200
        %v4203 = vcvt.s32.f32 %v4196
        %v4204 = vmul.f32 %v4203, %v4201
        %v4205 = vxor.u32 %v4204, 2147483648
        %v4206 = vsel %vm4123, %v4205, %v4204
        %v4207 = vsub.s32 4, %v4183
        %v4208 = vsel %vm4123, %v4207, %v4183
        %v4209 = vsel %vm4122, %v2846, %v4206
        %v4210 = vsel %vm4122, 0, %v4208
        %v4211 = vcosq.f32.pop %v4209
        %v4212 = vsinq.f32.pop %v4209
        %vm4213 = vweird.f32 %v2846
        %v4214 = vadd.s32 %v4210, 3
        %v4215 = vand.u32 %v4214, 3
        %vm4216 = vcmp.lt.s32.totalorder %v4215, 2
        %vm4217 = vcmp.eq.s32.totalorder %v4215, 0
        %v4218 = vxor.u32 %v4212, 2147483648
        %v4219 = vsel %vm4217, %v4211, %v4218
        %vm4220 = vcmp.eq.s32.totalorder %v4215, 2
        %v4221 = vxor.u32 %v4211, 2147483648
        %v4222 = vsel %vm4220, %v4221, %v4212
        %v4223 = vsel %vm4216, %v4219, %v4222
        %v4224 = vsel %vm4213, nan, %v4223
        %v4225 = vand.u32 2147483647, %v2848
        %vm4226 = vcmp.le.f32.partialorder %v4225, 0.7853982
        %vm4227 = vcmp.lt.s32.totalorder %v2848, 0
        %v4228 = vand.u32 %v2848, 2139095040
        %v4229 = vshrl.u32 %v4228, 23
        %v4230 = vsub.s32 %v4229, 127
        %v4231 = vand.u32 2147483647, %v2848
        %v4232 = vand.u32 %v4231, 8388607
        %v4233 = vor.u32 %v4232, 8388608
        %v4234 = vsub.s32 0, %v4233
        %v4235 = vadd.s32 %v4230, 1
        %vm4236 = vcmp.gt.s32.totalorder %v4235, 0
        %v4237 = vsel %vm4236, %v4235, 0
        %v4238 = vshrl.u32 %v4237, 5
        %v4239 = vand.u32 %v4237, 31
        %v4240 = vsub.s32 32, %v4239
        %v4241 = vshrl.u32 683565275, %v4240
        %v4242 = vshll.u32 683565275, %v4239
        %v4243 = vshrl.u32 2475754826, %v4240
        %v4244 = vor.u32 %v4242, %v4243
        %v4245 = vshll.u32 2475754826, %v4239
        %v4246 = vshrl.u32 2131351028, %v4240
        %v4247 = vor.u32 %v4245, %v4246
        %v4248 = vshll.u32 2131351028, %v4239
        %v4249 = vshrl.u32 2102212464, %v4240
        %v4250 = vor.u32 %v4248, %v4249
        %v4251 = vshll.u32 2102212464, %v4239
        %v4252 = vshrl.u32 920167782, %v4240
        %v4253 = vor.u32 %v4251, %v4252
        %v4254 = vshll.u32 920167782, %v4239
        %v4255 = vshrl.u32 1326507024, %v4240
        %v4256 = vor.u32 %v4254, %v4255
        %vm4257 = vcmp.lt.s32.totalorder %v4238, 1
        %vm4258 = vcmp.lt.s32.totalorder %v4238, 2
        %vm4259 = vcmp.lt.s32.totalorder %v4238, 3
        %vm4260 = vcmp.lt.s32.totalorder %v4238, 4
        %v4261 = vsel %vm4257, %v4241, %v4244
        %v4262 = vsel %vm4260, %v4250, 2102212464
        %v4263 = vsel %vm4259, %v4247, %v4262
        %v4264 = vsel %vm4258, %v4261, %v4263
        %v4265 = vsel %vm4257, %v4244, %v4247
        %v4266 = vsel %vm4260, %v4253, 920167782
        %v4267 = vsel %vm4259, %v4250, %v4266
        %v4268 = vsel %vm4258, %v4265, %v4267
        %v4269 = vsel %vm4257, %v4247, %v4250
        %v4270 = vsel %vm4260, %v4256, 1326507024
        %v4271 = vsel %vm4259, %v4253, %v4270
        %v4272 = vsel %vm4258, %v4269, %v4271
        %v4273 = vshll.u32 %v4233, 8
        %v4274 = vmul.u32.u64.compose %v4273, %v4272
        %v4275 = vextract.low.u32 %v4274
        %v4276 = vextract.high.u32 %v4274
        %v4277 = vmul.u32.u64.compose %v4273, %v4268
        %v4278 = vextract.low.u32 %v4277
        %v4279 = vextract.high.u32 %v4277
        %v4280 = vmul.u32 %v4273, %v4264
        %v4281 = vadd.s32 %v4276, %v4278
        %vm4282 = vc.u32 %v4276, %v4278
        %v4283 = vadd.s32 %v4279, 1
        %v4284 = vsel %vm4282, %v4283, %v4279
        %v4285 = vadd.s32 %v4280, %v4284
        %v4286 = vadd.s32 %v4285, 536870912
        %v4287 = vshrl.u32 %v4286, 30
        %v4288 = vshll.u32 %v4287, 30
        %v4289 = vsub.s32 %v4285, %v4288
        %vm4290 = vcmp.lt.s32.totalorder %v4289, 0
        %v4291 = vsub.s32 0, %v4289
        %v4292 = vsel %vm4290, %v4291, %v4289
        %v4293 = vclz %v4292
        %v4294 = vsub.s32 %v4293, 2
        %vm4295 = vcmp.gt.s32.totalorder 0, %v4294
        %v4296 = vsel %vm4295, 0, %v4294
        %v4297 = vsub.s32 32, %v4296
        %v4298 = vshll.u32 %v4289, %v4296
        %v4299 = vshrl.u32 %v4281, %v4297
        %v4300 = vor.u32 %v4298, %v4299
        %v4301 = vsub.s32 4294967266, %v4296
        %v4302 = vadd.s32 %v4301, 127
        %v4303 = vshll.u32 %v4302, 23
        %v4304 = vor.u32 4788187, %v4303
        %v4305 = vand.u32 2147483647, %v4304
        %v4307 = vcvt.s32.f32 %v4300
        %v4308 = vmul.f32 %v4307, %v4305
        %v4309 = vxor.u32 %v4308, 2147483648
        %v4310 = vsel %vm4227, %v4309, %v4308
        %v4311 = vsub.s32 4, %v4287
        %v4312 = vsel %vm4227, %v4311, %v4287
        %v4313 = vsel %vm4226, %v2848, %v4310
        %v4314 = vsel %vm4226, 0, %v4312
        %v4315 = vcosq.f32.pop %v4313
        %v4316 = vsinq.f32.pop %v4313
        %vm4317 = vweird.f32 %v2848
        %v4318 = vadd.s32 %v4314, 3
        %v4319 = vand.u32 %v4318, 3
        %vm4320 = vcmp.lt.s32.totalorder %v4319, 2
        %vm4321 = vcmp.eq.s32.totalorder %v4319, 0
        %v4322 = vxor.u32 %v4316, 2147483648
        %v4323 = vsel %vm4321, %v4315, %v4322
        %vm4324 = vcmp.eq.s32.totalorder %v4319, 2
        %v4325 = vxor.u32 %v4315, 2147483648
        %v4326 = vsel %vm4324, %v4325, %v4316
        %v4327 = vsel %vm4320, %v4323, %v4326
        %v4328 = vsel %vm4317, nan, %v4327
        %v4329 = vand.u32 2147483647, %v3701
        %vm4330 = vcmp.le.f32.partialorder %v4329, 0.7853982
        %vm4331 = vcmp.lt.s32.totalorder %v3701, 0
        %v4332 = vand.u32 %v3701, 2139095040
        %v4333 = vshrl.u32 %v4332, 23
        %v4334 = vsub.s32 %v4333, 127
        %v4335 = vand.u32 2147483647, %v3701
        %v4336 = vand.u32 %v4335, 8388607
        %v4337 = vor.u32 %v4336, 8388608
        %v4338 = vsub.s32 0, %v4337
        %v4339 = vadd.s32 %v4334, 1
        %vm4340 = vcmp.gt.s32.totalorder %v4339, 0
        %v4341 = vsel %vm4340, %v4339, 0
        %v4342 = vshrl.u32 %v4341, 5
        %v4343 = vand.u32 %v4341, 31
        %v4344 = vsub.s32 32, %v4343
        %v4345 = vshrl.u32 683565275, %v4344
        %v4346 = vshll.u32 683565275, %v4343
        %v4347 = vshrl.u32 2475754826, %v4344
        %v4348 = vor.u32 %v4346, %v4347
        %v4349 = vshll.u32 2475754826, %v4343
        %v4350 = vshrl.u32 2131351028, %v4344
        %v4351 = vor.u32 %v4349, %v4350
        %v4352 = vshll.u32 2131351028, %v4343
        %v4353 = vshrl.u32 2102212464, %v4344
        %v4354 = vor.u32 %v4352, %v4353
        %v4355 = vshll.u32 2102212464, %v4343
        %v4356 = vshrl.u32 920167782, %v4344
        %v4357 = vor.u32 %v4355, %v4356
        %v4358 = vshll.u32 920167782, %v4343
        %v4359 = vshrl.u32 1326507024, %v4344
        %v4360 = vor.u32 %v4358, %v4359
        %vm4361 = vcmp.lt.s32.totalorder %v4342, 1
        %vm4362 = vcmp.lt.s32.totalorder %v4342, 2
        %vm4363 = vcmp.lt.s32.totalorder %v4342, 3
        %vm4364 = vcmp.lt.s32.totalorder %v4342, 4
        %v4365 = vsel %vm4361, %v4345, %v4348
        %v4366 = vsel %vm4364, %v4354, 2102212464
        %v4367 = vsel %vm4363, %v4351, %v4366
        %v4368 = vsel %vm4362, %v4365, %v4367
        %v4369 = vsel %vm4361, %v4348, %v4351
        %v4370 = vsel %vm4364, %v4357, 920167782
        %v4371 = vsel %vm4363, %v4354, %v4370
        %v4372 = vsel %vm4362, %v4369, %v4371
        %v4373 = vsel %vm4361, %v4351, %v4354
        %v4374 = vsel %vm4364, %v4360, 1326507024
        %v4375 = vsel %vm4363, %v4357, %v4374
        %v4376 = vsel %vm4362, %v4373, %v4375
        %v4377 = vshll.u32 %v4337, 8
        %v4378 = vmul.u32.u64.compose %v4377, %v4376
        %v4379 = vextract.low.u32 %v4378
        %v4380 = vextract.high.u32 %v4378
        %v4381 = vmul.u32.u64.compose %v4377, %v4372
        %v4382 = vextract.low.u32 %v4381
        %v4383 = vextract.high.u32 %v4381
        %v4384 = vmul.u32 %v4377, %v4368
        %v4385 = vadd.s32 %v4380, %v4382
        %vm4386 = vc.u32 %v4380, %v4382
        %v4387 = vadd.s32 %v4383, 1
        %v4388 = vsel %vm4386, %v4387, %v4383
        %v4389 = vadd.s32 %v4384, %v4388
        %v4390 = vadd.s32 %v4389, 536870912
        %v4391 = vshrl.u32 %v4390, 30
        %v4392 = vshll.u32 %v4391, 30
        %v4393 = vsub.s32 %v4389, %v4392
        %vm4394 = vcmp.lt.s32.totalorder %v4393, 0
        %v4395 = vsub.s32 0, %v4393
        %v4396 = vsel %vm4394, %v4395, %v4393
        %v4397 = vclz %v4396
        %v4398 = vsub.s32 %v4397, 2
        %vm4399 = vcmp.gt.s32.totalorder 0, %v4398
        %v4400 = vsel %vm4399, 0, %v4398
        %v4401 = vsub.s32 32, %v4400
        %v4402 = vshll.u32 %v4393, %v4400
        %v4403 = vshrl.u32 %v4385, %v4401
        %v4404 = vor.u32 %v4402, %v4403
        %v4405 = vsub.s32 4294967266, %v4400
        %v4406 = vadd.s32 %v4405, 127
        %v4407 = vshll.u32 %v4406, 23
        %v4408 = vor.u32 4788187, %v4407
        %v4409 = vand.u32 2147483647, %v4408
        %v4411 = vcvt.s32.f32 %v4404
        %v4412 = vmul.f32 %v4411, %v4409
        %v4413 = vxor.u32 %v4412, 2147483648
        %v4414 = vsel %vm4331, %v4413, %v4412
        %v4415 = vsub.s32 4, %v4391
        %v4416 = vsel %vm4331, %v4415, %v4391
        %v4417 = vsel %vm4330, %v3701, %v4414
        %v4418 = vsel %vm4330, 0, %v4416
        %v4419 = vcosq.f32.pop %v4417
        %v4420 = vsinq.f32.pop %v4417
        %vm4421 = vweird.f32 %v3701
        %v4422 = vadd.s32 %v4418, 3
        %v4423 = vand.u32 %v4422, 3
        %vm4424 = vcmp.lt.s32.totalorder %v4423, 2
        %vm4425 = vcmp.eq.s32.totalorder %v4423, 0
        %v4426 = vxor.u32 %v4420, 2147483648
        %v4427 = vsel %vm4425, %v4419, %v4426
        %vm4428 = vcmp.eq.s32.totalorder %v4423, 2
        %v4429 = vxor.u32 %v4419, 2147483648
        %v4430 = vsel %vm4428, %v4429, %v4420
        %v4431 = vsel %vm4424, %v4427, %v4430
        %v4432 = vsel %vm4421, nan, %v4431
        %v4433 = vand.u32 2147483647, %v3703
        %vm4434 = vcmp.le.f32.partialorder %v4433, 0.7853982
        %vm4435 = vcmp.lt.s32.totalorder %v3703, 0
        %v4436 = vand.u32 %v3703, 2139095040
        %v4437 = vshrl.u32 %v4436, 23
        %v4438 = vsub.s32 %v4437, 127
        %v4439 = vand.u32 2147483647, %v3703
        %v4440 = vand.u32 %v4439, 8388607
        %v4441 = vor.u32 %v4440, 8388608
        %v4442 = vsub.s32 0, %v4441
        %v4443 = vadd.s32 %v4438, 1
        %vm4444 = vcmp.gt.s32.totalorder %v4443, 0
        %v4445 = vsel %vm4444, %v4443, 0
        %v4446 = vshrl.u32 %v4445, 5
        %v4447 = vand.u32 %v4445, 31
        %v4448 = vsub.s32 32, %v4447
        %v4449 = vshrl.u32 683565275, %v4448
        %v4450 = vshll.u32 683565275, %v4447
        %v4451 = vshrl.u32 2475754826, %v4448
        %v4452 = vor.u32 %v4450, %v4451
        %v4453 = vshll.u32 2475754826, %v4447
        %v4454 = vshrl.u32 2131351028, %v4448
        %v4455 = vor.u32 %v4453, %v4454
        %v4456 = vshll.u32 2131351028, %v4447
        %v4457 = vshrl.u32 2102212464, %v4448
        %v4458 = vor.u32 %v4456, %v4457
        %v4459 = vshll.u32 2102212464, %v4447
        %v4460 = vshrl.u32 920167782, %v4448
        %v4461 = vor.u32 %v4459, %v4460
        %v4462 = vshll.u32 920167782, %v4447
        %v4463 = vshrl.u32 1326507024, %v4448
        %v4464 = vor.u32 %v4462, %v4463
        %vm4465 = vcmp.lt.s32.totalorder %v4446, 1
        %vm4466 = vcmp.lt.s32.totalorder %v4446, 2
        %vm4467 = vcmp.lt.s32.totalorder %v4446, 3
        %vm4468 = vcmp.lt.s32.totalorder %v4446, 4
        %v4469 = vsel %vm4465, %v4449, %v4452
        %v4470 = vsel %vm4468, %v4458, 2102212464
        %v4471 = vsel %vm4467, %v4455, %v4470
        %v4472 = vsel %vm4466, %v4469, %v4471
        %v4473 = vsel %vm4465, %v4452, %v4455
        %v4474 = vsel %vm4468, %v4461, 920167782
        %v4475 = vsel %vm4467, %v4458, %v4474
        %v4476 = vsel %vm4466, %v4473, %v4475
        %v4477 = vsel %vm4465, %v4455, %v4458
        %v4478 = vsel %vm4468, %v4464, 1326507024
        %v4479 = vsel %vm4467, %v4461, %v4478
        %v4480 = vsel %vm4466, %v4477, %v4479
        %v4481 = vshll.u32 %v4441, 8
        %v4482 = vmul.u32.u64.compose %v4481, %v4480
        %v4483 = vextract.low.u32 %v4482
        %v4484 = vextract.high.u32 %v4482
        %v4485 = vmul.u32.u64.compose %v4481, %v4476
        %v4486 = vextract.low.u32 %v4485
        %v4487 = vextract.high.u32 %v4485
        %v4488 = vmul.u32 %v4481, %v4472
        %v4489 = vadd.s32 %v4484, %v4486
        %vm4490 = vc.u32 %v4484, %v4486
        %v4491 = vadd.s32 %v4487, 1
        %v4492 = vsel %vm4490, %v4491, %v4487
        %v4493 = vadd.s32 %v4488, %v4492
        %v4494 = vadd.s32 %v4493, 536870912
        %v4495 = vshrl.u32 %v4494, 30
        %v4496 = vshll.u32 %v4495, 30
        %v4497 = vsub.s32 %v4493, %v4496
        %vm4498 = vcmp.lt.s32.totalorder %v4497, 0
        %v4499 = vsub.s32 0, %v4497
        %v4500 = vsel %vm4498, %v4499, %v4497
        %v4501 = vclz %v4500
        %v4502 = vsub.s32 %v4501, 2
        %vm4503 = vcmp.gt.s32.totalorder 0, %v4502
        %v4504 = vsel %vm4503, 0, %v4502
        %v4505 = vsub.s32 32, %v4504
        %v4506 = vshll.u32 %v4497, %v4504
        %v4507 = vshrl.u32 %v4489, %v4505
        %v4508 = vor.u32 %v4506, %v4507
        %v4509 = vsub.s32 4294967266, %v4504
        %v4510 = vadd.s32 %v4509, 127
        %v4511 = vshll.u32 %v4510, 23
        %v4512 = vor.u32 4788187, %v4511
        %v4513 = vand.u32 2147483647, %v4512
        %v4515 = vcvt.s32.f32 %v4508
        %v4516 = vmul.f32 %v4515, %v4513
        %v4517 = vxor.u32 %v4516, 2147483648
        %v4518 = vsel %vm4435, %v4517, %v4516
        %v4519 = vsub.s32 4, %v4495
        %v4520 = vsel %vm4435, %v4519, %v4495
        %v4521 = vsel %vm4434, %v3703, %v4518
        %v4522 = vsel %vm4434, 0, %v4520
        %v4523 = vcosq.f32.pop %v4521
        %v4524 = vsinq.f32.pop %v4521
        %vm4525 = vweird.f32 %v3703
        %v4526 = vadd.s32 %v4522, 3
        %v4527 = vand.u32 %v4526, 3
        %vm4528 = vcmp.lt.s32.totalorder %v4527, 2
        %vm4529 = vcmp.eq.s32.totalorder %v4527, 0
        %v4530 = vxor.u32 %v4524, 2147483648
        %v4531 = vsel %vm4529, %v4523, %v4530
        %vm4532 = vcmp.eq.s32.totalorder %v4527, 2
        %v4533 = vxor.u32 %v4523, 2147483648
        %v4534 = vsel %vm4532, %v4533, %v4524
        %v4535 = vsel %vm4528, %v4531, %v4534
        %v4536 = vsel %vm4525, nan, %v4535
        %4537 = vst [vmem:[%s155] sm:$0xff] %v3808
        %4538 = vst [vmem:[%s155 + $0x8] sm:$0xff] %v3912
        %4539 = vst [vmem:[%s155 + $0x10] sm:$0xff] %v4016
        %4540 = vst [vmem:[%s155 + $0x18] sm:$0xff] %v4120
        %4541 = vst [vmem:[%s155 + $0x20] sm:$0xff] %v4224
        %4542 = vst [vmem:[%s155 + $0x28] sm:$0xff] %v4328
        %4543 = vst [vmem:[%s155 + $0x30] sm:$0xff] %v4432
        %4544 = vst [vmem:[%s155 + $0x38] sm:$0xff] %v4536
        %p4545 = scmp.lt.s32.totalorder %s14, 1
        %s4546 = scalar_select %p4545, %s14, 1
        %s4547 = smul.addr %s4546, 8
        %s4548 = smul.addr %s4547, 8
        %s4549 = scalar_lea.vmem %s2, %s4548
        // Predicated region
        $region33: #{positional_encoder.1} parent=27 // pred_check
          %p4550 = pneg %p79
        $region34: #{positional_encoder.1} parent=27 // pred_check_branch
          %4552 = sbr.rel (%p4550) target = $region36
        $region35: #{positional_encoder.1} parent=27 // pred_region
          _
        $region36: #{positional_encoder.1} parent=27 // pred_fallthru
          _
      $region28: #{positional_encoder.1} parent=5 // pred_fallthru
        _
      %p4553 = scmp.le.s32.totalorder 2, %s9
      // Predicated region
      $region37: #{positional_encoder.1} parent=5 // pred_check
        %p4554 = pneg %p4553
      $region38: #{positional_encoder.1} parent=5 // pred_check_branch
        %4556 = sbr.rel (%p4554) target = $region40
      $region39: #{positional_encoder.1} parent=5 // pred_region
        %s4557 = ssub.s32 %s9, 2
        // Predicated region
        $region41: #{positional_encoder.1} parent=39 // pred_check
          %p4558 = pneg %p85
        $region42: #{positional_encoder.1} parent=39 // pred_check_branch
          %4560 = sbr.rel (%p4558) target = $region44
        $region43: #{positional_encoder.1} parent=39 // pred_region
          %p4561 = scmp.lt.s32.totalorder %s15, 1
          %s4562 = scalar_select %p4561, %s15, 1
          %s4563 = smul.addr %s4562, 8
          %s4564 = smul.addr %s4563, 8
          %s4565 = scalar_lea.vmem %s2, %s4564
        $region44: #{positional_encoder.1} parent=39 // pred_fallthru
          _
      $region40: #{positional_encoder.1} parent=5 // pred_fallthru
        _
    $region6: #{positional_encoder.1} parent=1 // loop_footer
      %s13 = sadd.s32 1, %s9
    $region7: #{positional_encoder.1} parent=1 // loop_footer_branch
      %8 = sbr.rel target = $region3
    $region8: #{positional_encoder.1} parent=1 // loop_exit
      _
    %4566 = vsyncpa [#allocation3], 1
    %s4567 = scalar_lea.sflag [#allocation3], 1
    %4568 = vsyncpa %s4567, 1

</llo_original>
